<compile_context>
chip_gen: v7x
topology: tpu7x:2x2x1
jax: 0.10.0
libtpu: 0.0.40
codegen_flags: <defaults>
</compile_context>

<pallas_src>
import jax
import jax.numpy as jnp
from jax import lax
from jax.experimental import pallas as pl
from jax.experimental.pallas import tpu as pltpu


# ------------------------------ small helpers --------------------------------
def _round_up(x, m):
    return (x + m - 1) // m * m


def _largest_divisor(n, cap):
    cap = max(1, min(n, cap))
    for d in range(cap, 0, -1):
        if n % d == 0:
            return d
    return 1


def _vmem_limit_bytes():
    # v7x: 64 MiB physical per TensorCore -> stay well under it.
    # v5e/v6e: 128 MiB physical -> raise the scoped limit for bigger tiles.
    try:
        cap = int(pltpu.get_tpu_info().vmem_capacity_bytes)
        return 100 * 1024 * 1024 if cap > 64 * 1024 * 1024 else 40 * 1024 * 1024
    except Exception:
        return 40 * 1024 * 1024


def _sigmoid(x):
    return 1.0 / (1.0 + jnp.exp(-x))


def _erf_approx(x):
    # Abramowitz & Stegun 7.1.26, |err| <= 1.5e-7; only exp/mul/add/select so it
    # lowers cleanly to VPU + EUP inside the kernel.
    p = 0.3275911
    a1, a2, a3, a4, a5 = (0.254829592, -0.284496736, 1.421413741,
                          -1.453152027, 1.061405429)
    ax = jnp.abs(x)
    t = 1.0 / (1.0 + p * ax)
    poly = ((((a5 * t + a4) * t + a3) * t + a2) * t + a1) * t
    y = 1.0 - poly * jnp.exp(-ax * ax)
    return jnp.where(x >= 0.0, y, -y)


def _gelu(x):
    # PyTorch nn.GELU() default is the exact erf form.
    return 0.5 * x * (1.0 + _erf_approx(x * 0.7071067811865476))


def _gelu_exact(x):
    return 0.5 * x * (1.0 + lax.erf(x * (1.0 / jnp.sqrt(2.0).astype(x.dtype))))


def _layer_norm(x, gamma, beta, eps=1e-5):
    # LayerNorm over last dim, PyTorch semantics (biased variance).
    mean = jnp.mean(x, axis=-1, keepdims=True)
    var = jnp.mean((x - mean) ** 2, axis=-1, keepdims=True)
    return (x - mean) * lax.rsqrt(var + eps) * gamma + beta


# ------------------------------- GRU kernel -----------------------------------
def _gru_kernel(x_ref, h0_ref, w_ih_ref, w_hh_ref, b_i_ref, b_hn_ref,
                gru_out_ref, h_out_ref, gi_ref):
    """One T-chunk of the sequential GRU (PyTorch gate order r|z|n, fused).

    x_ref:       (tT*Bp, D)   f32 time-major rows for this chunk
    h0_ref:      (Bp, Hp)     f32 initial hidden state
    w_ih_ref:    (D, 3*Hp)    compute dtype (fused gates, zero-padded to Hp)
    w_hh_ref:    (Hp, 3*Hp)   compute dtype
    b_i_ref:     (1, 3*Hp)    f32 (b_ih with b_hh_r/b_hh_z folded in)
    b_hn_ref:    (1, Hp)      f32 (b_hh_n, stays inside tanh)
    gru_out_ref: (tT*Bp, Hp)  compute dtype output block
    h_out_ref:   (Bp, Hp)     f32 resident hidden-state carry (constant index)
    gi_ref:      (tT*Bp, 3*Hp) f32 VMEM scratch (hoisted input projection)
    """
    Bp, Hp = h0_ref.shape
    tT = x_ref.shape[0] // Bp
    cdt = w_ih_ref.dtype

    @pl.when(pl.program_id(0) == 0)
    def _init():
        h_out_ref[...] = h0_ref[...]

    # Hoisted, gate-fused input projection for the whole chunk: one MXU pass.
    gi_ref[...] = jnp.dot(x_ref[...].astype(cdt), w_ih_ref[...],
                          preferred_element_type=jnp.float32) + b_i_ref[...]

    w_hh = w_hh_ref[...]
    b_hn = b_hn_ref[...]

    def step(t, h):
        # The only truly sequential matmul: h @ W_hh, fused over r|z|n.
        gh = jnp.dot(h.astype(cdt), w_hh, preferred_element_type=jnp.float32)
        start = pl.multiple_of(t * Bp, 16)          # Bp is a multiple of 16
        row = pl.ds(start, Bp)
        gi = gi_ref[row, :]
        # Gate math stays f32 (no bf16 VPU/EUP on v5e).  Hp % 128 == 0 so the
        # per-gate lane slices are aligned.
        r = _sigmoid(gi[:, :Hp] + gh[:, :Hp])
        z = _sigmoid(gi[:, Hp:2 * Hp] + gh[:, Hp:2 * Hp])
        n = jnp.tanh(gi[:, 2 * Hp:] + r * (gh[:, 2 * Hp:] + b_hn))
        h_new = n + z * (h - n)                     # == (1-z)*n + z*h
        gru_out_ref[row, :] = h_new.astype(gru_out_ref.dtype)
        return h_new

    h = lax.fori_loop(0, tT, step, h_out_ref[...], unroll=min(tT, 8))
    h_out_ref[...] = h


# ------------------------------- FFN kernel -----------------------------------
def _ffn_kernel(gru_ref, x_ref, w_lin_ref, b_lin_ref, ln1_g_ref, ln1_b_ref,
                w_c1_ref, b_c1_ref, w_c2_ref, b_c2_ref, ln2_g_ref, ln2_b_ref,
                out_ref):
    """Row-parallel post-GRU stack on a 2-D (row_tile, features) slab."""
    cdt = w_lin_ref.dtype
    y = jnp.dot(gru_ref[...].astype(cdt), w_lin_ref[...],
                preferred_element_type=jnp.float32) + b_lin_ref[...]
    # TODO(synk): dropout1/2/3 are identity (inference semantics).
    y = y + x_ref[...].astype(jnp.float32)
    y = _layer_norm(y, ln1_g_ref[...], ln1_b_ref[...])
    z = jnp.dot(y.astype(cdt), w_c1_ref[...],
                preferred_element_type=jnp.float32) + b_c1_ref[...]
    z = _gelu(z)
    z = jnp.dot(z.astype(cdt), w_c2_ref[...],
                preferred_element_type=jnp.float32) + b_c2_ref[...]
    z = z + y
    out_ref[...] = _layer_norm(z, ln2_g_ref[...], ln2_b_ref[...]).astype(out_ref.dtype)


# ------------------------------ param plumbing --------------------------------
def prepare_params(params, compute_dtype=jnp.bfloat16):
    """One-time conversion of PyTorch-layout parameters into kernel layout.

    GRU weights are fused per (D|H, 3*H_pad) with per-gate zero padding of H to
    a multiple of 128 lanes; b_hh_r/b_hh_z are folded into the input bias.
    Matmul operands are cast to `compute_dtype`; biases / LN params stay f32.
    """
    cd = compute_dtype
    f32 = jnp.float32
    H = params["w_hh"].shape[1]
    Hp = _round_up(H, 128)

    def fuse_w(w, pad_rows_to=None):
        # PyTorch (3H, in) -> (in, 3*Hp), columns ordered r|z|n, each padded.
        in_dim = w.shape[1]
        w3 = jnp.pad(w.reshape(3, H, in_dim), ((0, 0), (0, Hp - H), (0, 0)))
        wf = jnp.transpose(w3, (2, 0, 1)).reshape(in_dim, 3 * Hp)
        if pad_rows_to is not None and pad_rows_to != in_dim:
            wf = jnp.pad(wf, ((0, pad_rows_to - in_dim), (0, 0)))
        return wf.astype(cd)

    b_ih3 = params["b_ih"].reshape(3, H).astype(f32)
    b_hh3 = params["b_hh"].reshape(3, H).astype(f32)
    # Fold the hidden-side r/z biases into the input projection (summed before
    # the sigmoid anyway); b_hh_n MUST stay inside r * (gh_n + b_hn).
    fold = jnp.concatenate([b_hh3[:2], jnp.zeros((1, H), f32)], axis=0)
    b_i = jnp.pad(b_ih3 + fold, ((0, 0), (0, Hp - H))).reshape(1, 3 * Hp)
    b_hn = jnp.pad(b_hh3[2:3], ((0, 0), (0, Hp - H)))

    return dict(
        w_ih=fuse_w(params["w_ih"]),                   # (D, 3*Hp)
        w_hh=fuse_w(params["w_hh"], pad_rows_to=Hp),   # (Hp, 3*Hp)
        b_i=b_i, b_hn=b_hn,
        w_lin=jnp.pad(params["w_lin"].T, ((0, Hp - H), (0, 0))).astype(cd),  # (Hp, D)
        b_lin=params["b_lin"].reshape(1, -1).astype(f32),
        ln1_g=params["ln1_g"].reshape(1, -1).astype(f32),
        ln1_b=params["ln1_b"].reshape(1, -1).astype(f32),
        w_c1=params["w_c1"][:, :, 0].T.astype(cd),     # (D, C)   1x1 conv == linear
        b_c1=params["b_c1"].reshape(1, -1).astype(f32),
        w_c2=params["w_c2"][:, :, 0].T.astype(cd),     # (C, D)
        b_c2=params["b_c2"].reshape(1, -1).astype(f32),
        ln2_g=params["ln2_g"].reshape(1, -1).astype(f32),
        ln2_b=params["ln2_b"].reshape(1, -1).astype(f32),
    )


# --------------------------------- wrapper ------------------------------------
def new_rnn_cell_forward(x, hx, prep, *, hidden, gru_t_chunk=32, ffn_row_tile=1024):
    """x: (B, T, D) f32; hx: (1, B, H) f32 or None; prep: prepare_params() output.
    `hidden` is the (static) un-padded hidden size H.
    Returns (out (B, T, D) f32, hx (1, B, H) f32) with PyTorch eval semantics."""
    B, T, D = x.shape
    H = hidden
    Hp = prep["w_hh"].shape[0]
    C = prep["w_c1"].shape[1]
    cdt = prep["w_ih"].dtype
    csz = jnp.dtype(cdt).itemsize
    Bp = _round_up(B, 16)
    vmem_limit = _vmem_limit_bytes()

    # Time-major rows, batch padded to a sublane multiple.  This single f32 slab
    # feeds both the GRU input projection and the FFN residual (no duplicate).
    x_tm = jnp.transpose(x, (1, 0, 2))                       # (T, B, D)
    if Bp != B:
        x_tm = jnp.pad(x_tm, ((0, 0), (0, Bp - B), (0, 0)))
    x_tm2d = x_tm.reshape(T * Bp, D)                         # (T*Bp, D) f32

    if hx is None:
        h0 = jnp.zeros((Bp, Hp), jnp.float32)
    else:
        h0 = jnp.zeros((Bp, Hp), jnp.float32).at[:B, :H].set(hx[0].astype(jnp.float32))

    # ---------------- sequential GRU pass (chunked over T) ----------------
    tT = _largest_divisor(T, gru_t_chunk)
    gru_cost = pl.CostEstimate(
        flops=int(2 * T * Bp * 3 * Hp * (D + Hp) + 12 * T * Bp * Hp),
        transcendentals=int(3 * T * Bp * Hp),
        bytes_accessed=int(T * Bp * D * 4 + T * Bp * Hp * csz
                           + (D + Hp) * 3 * Hp * csz + 3 * Bp * Hp * 4),
    )
    gru_out, h_final = pl.pallas_call(
        _gru_kernel,
        out_shape=(jax.ShapeDtypeStruct((T * Bp, Hp), cdt),      # bf16 writeback
                   jax.ShapeDtypeStruct((Bp, Hp), jnp.float32)),
        grid=(T // tT,),
        in_specs=[
            pl.BlockSpec((tT * Bp, D), lambda i: (i, 0)),        # x chunk
            pl.BlockSpec((Bp, Hp), lambda i: (0, 0)),            # h0
            pl.BlockSpec((D, 3 * Hp), lambda i: (0, 0)),         # W_ih (fused)
            pl.BlockSpec((Hp, 3 * Hp), lambda i: (0, 0)),        # W_hh (fused)
            pl.BlockSpec((1, 3 * Hp), lambda i: (0, 0)),         # fused bias
            pl.BlockSpec((1, Hp), lambda i: (0, 0)),             # b_hh_n
        ],
        out_specs=(
            pl.BlockSpec((tT * Bp, Hp), lambda i: (i, 0)),       # gru_out chunk
            pl.BlockSpec((Bp, Hp), lambda i: (0, 0)),            # resident h carry
        ),
        scratch_shapes=[pltpu.VMEM((tT * Bp, 3 * Hp), jnp.float32)],
        compiler_params=pltpu.CompilerParams(
            dimension_semantics=("arbitrary",),
            vmem_limit_bytes=vmem_limit),
        cost_estimate=gru_cost,
    )(x_tm2d, h0, prep["w_ih"], prep["w_hh"], prep["b_i"], prep["b_hn"])

    # ---------------- row-parallel FFN / LayerNorm pass ----------------
    weights = (prep["w_lin"], prep["b_lin"], prep["ln1_g"], prep["ln1_b"],
               prep["w_c1"], prep["b_c1"], prep["w_c2"], prep["b_c2"],
               prep["ln2_g"], prep["ln2_b"])
    tTf = _largest_divisor(T, max(1, ffn_row_tile // Bp))
    rt = tTf * Bp
    rows = T * Bp

    ffn_cost = pl.CostEstimate(
        flops=int(2 * rows * (Hp * D + 2 * D * C) + 40 * rows * D),
        transcendentals=int(rows * C),
        bytes_accessed=int(rows * (Hp * csz + 2 * D * 4)
                           + sum(int(w.size) * w.dtype.itemsize for w in weights)),
    )
    row_spec = lambda f: pl.BlockSpec((rt, f), lambda i: (i, 0))
    full_spec = lambda a: pl.BlockSpec(a.shape, lambda i: (0,) * a.ndim)

    out2d = pl.pallas_call(
        _ffn_kernel,
        out_shape=jax.ShapeDtypeStruct((rows, D), jnp.float32),
        grid=(rows // rt,),
        in_specs=[row_spec(Hp), row_spec(D)] + [full_spec(w) for w in weights],
        out_specs=row_spec(D),
        compiler_params=pltpu.CompilerParams(
            dimension_semantics=("parallel",),       # shard row tiles across TCs
            vmem_limit_bytes=vmem_limit),
        cost_estimate=ffn_cost,
    )(gru_out, x_tm2d, *weights)

    # Back to (B, T, D); drop batch padding.  (One XLA transpose pass remains —
    # kept rather than squeezing a second-minor batch dim in the FFN BlockSpecs.)
    out = jnp.transpose(out2d.reshape(T, Bp, D)[:, :B, :], (1, 0, 2))
    return out, h_final[:B, :H][None]                # hx -> (1, B, H)


# ---------------- pure-JAX reference (for correctness checks) ----------------
def _reference_forward(x, hx, p, compute_dtype=jnp.float32):
    B, T, D = x.shape
    H = p["w_hh"].shape[1]

    def mm(a, b):
        return jnp.dot(a.astype(compute_dtype), b.astype(compute_dtype),
                       preferred_element_type=jnp.float32,
                       precision=lax.Precision.HIGHEST)

    h = (jnp.zeros((B, H), jnp.float32) if hx is None else hx[0]).astype(jnp.float32)
    gi_all = mm(x, p["w_ih"].T) + p["b_ih"]                  # (B, T, 3H)
    outs = []
    for t in range(T):
        gi = gi_all[:, t]
        gh = mm(h, p["w_hh"].T) + p["b_hh"]
        r = jax.nn.sigmoid(gi[:, :H] + gh[:, :H])
        z = jax.nn.sigmoid(gi[:, H:2 * H] + gh[:, H:2 * H])
        n = jnp.tanh(gi[:, 2 * H:] + r * gh[:, 2 * H:])
        h = (1.0 - z) * n + z * h
        outs.append(h)
    gru_out = jnp.stack(outs, axis=1)                        # (B, T, H)
    y = mm(gru_out, p["w_lin"].T) + p["b_lin"]
    y = y + x
    y = _layer_norm(y, p["ln1_g"], p["ln1_b"])
    z2 = mm(y, p["w_c1"][:, :, 0].T) + p["b_c1"]
    z2 = _gelu_exact(z2)
    z2 = mm(z2, p["w_c2"][:, :, 0].T) + p["b_c2"]
    z2 = z2 + y
    out = _layer_norm(z2, p["ln2_g"], p["ln2_b"])
    return out, h[None]


def _init_params(key, D, H, C):
    ks = jax.random.split(key, 10)
    s_h = 1.0 / jnp.sqrt(H)
    s_d = 1.0 / jnp.sqrt(D)
    s_c = 1.0 / jnp.sqrt(C)
    u = lambda k, shape, s: jax.random.uniform(k, shape, jnp.float32, -s, s)
    return dict(
        # GRU (PyTorch layout: (3H, in)), gate order r, z, n
        w_ih=u(ks[0], (3 * H, D), s_h), w_hh=u(ks[1], (3 * H, H), s_h),
        b_ih=u(ks[2], (3 * H,), s_h), b_hh=u(ks[3], (3 * H,), s_h),
        # linear1: (D, H)
        w_lin=u(ks[4], (D, H), s_h), b_lin=u(ks[5], (D,), s_h),
        # layer norms
        ln1_g=jnp.ones((D,), jnp.float32), ln1_b=jnp.zeros((D,), jnp.float32),
        ln2_g=jnp.ones((D,), jnp.float32), ln2_b=jnp.zeros((D,), jnp.float32),
        # covd1: (C, D, 1), covd2: (D, C, 1)
        w_c1=u(ks[6], (C, D, 1), s_d), b_c1=u(ks[7], (C,), s_d),
        w_c2=u(ks[8], (D, C, 1), s_c), b_c2=u(ks[9], (D,), s_c),
    )


if __name__ == "__main__":
    B, T, D, H, C = 2, 8, 4, 32, 16   # batch, seq, input, hidden, convd
    key = jax.random.PRNGKey(0)
    k_x, k_h, k_p = jax.random.split(key, 3)
    x = jax.random.normal(k_x, (B, T, D), jnp.float32)
    hx = jax.random.normal(k_h, (1, B, H), jnp.float32)
    params = _init_params(k_p, D, H, C)

    fwd = jax.jit(new_rnn_cell_forward, static_argnames=("hidden",))

    # f32 compute path: tight check against the high-precision reference.
    prep_f32 = prepare_params(params, compute_dtype=jnp.float32)
    out32, h32 = fwd(x, hx, prep_f32, hidden=H)
    out32, h32 = jax.block_until_ready(out32), jax.block_until_ready(h32)
    ref_out, ref_h = _reference_forward(x, hx, params, compute_dtype=jnp.float32)
    assert out32.shape == (B, T, D) and h32.shape == (1, B, H)
    assert jnp.allclose(out32, ref_out, atol=2e-3, rtol=2e-3)
    assert jnp.allclose(h32, ref_h, atol=2e-3, rtol=2e-3)

    # bf16 matmul path (MXU-friendly default): check against a matched bf16 ref.
    prep_bf16 = prepare_params(params, compute_dtype=jnp.bfloat16)
    out16, h16 = fwd(x, hx, prep_bf16, hidden=H)
    out16, h16 = jax.block_until_ready(out16), jax.block_until_ready(h16)
    ref16_out, ref16_h = _reference_forward(x, hx, params, compute_dtype=jnp.bfloat16)
    assert jnp.allclose(out16, ref16_out, atol=1e-2, rtol=1e-2)
    assert jnp.allclose(h16, ref16_h, atol=1e-2, rtol=1e-2)

    print("KERNEL_OK")
</pallas_src>

<mosaic_0001>
module attributes {stable_mosaic.version = 11 : i64} {
  func.func @_ffn_kernel(%arg0: i32, %arg1: memref<128x128xf32, #tpu.memory_space<vmem>>, %arg2: memref<128x4xf32, #tpu.memory_space<vmem>>, %arg3: memref<128x4xf32, #tpu.memory_space<vmem>>, %arg4: memref<1x4xf32, #tpu.memory_space<vmem>>, %arg5: memref<1x4xf32, #tpu.memory_space<vmem>>, %arg6: memref<1x4xf32, #tpu.memory_space<vmem>>, %arg7: memref<4x16xf32, #tpu.memory_space<vmem>>, %arg8: memref<1x16xf32, #tpu.memory_space<vmem>>, %arg9: memref<16x4xf32, #tpu.memory_space<vmem>>, %arg10: memref<1x4xf32, #tpu.memory_space<vmem>>, %arg11: memref<1x4xf32, #tpu.memory_space<vmem>>, %arg12: memref<1x4xf32, #tpu.memory_space<vmem>>, %arg13: memref<128x4xf32, #tpu.memory_space<vmem>>) attributes {dimension_semantics = [#tpu.dimension_semantics<parallel>], iteration_bounds = array<i64: 1>, scalar_prefetch = 0 : i64, scratch_operands = 0 : i64, tpu.core_type = #tpu.core_type<tc>, window_params = [{transform_indices = @transform_0, window_bounds = array<i64: 128, 128>}, {transform_indices = @transform_1, window_bounds = array<i64: 128, 4>}, {pipeline_mode = #tpu.pipeline_mode<synchronous>, transform_indices = @transform_2, window_bounds = array<i64: 128, 4>}, {pipeline_mode = #tpu.pipeline_mode<synchronous>, transform_indices = @transform_3, window_bounds = array<i64: 1, 4>}, {pipeline_mode = #tpu.pipeline_mode<synchronous>, transform_indices = @transform_4, window_bounds = array<i64: 1, 4>}, {pipeline_mode = #tpu.pipeline_mode<synchronous>, transform_indices = @transform_5, window_bounds = array<i64: 1, 4>}, {pipeline_mode = #tpu.pipeline_mode<synchronous>, transform_indices = @transform_6, window_bounds = array<i64: 4, 16>}, {pipeline_mode = #tpu.pipeline_mode<synchronous>, transform_indices = @transform_7, window_bounds = array<i64: 1, 16>}, {pipeline_mode = #tpu.pipeline_mode<synchronous>, transform_indices = @transform_8, window_bounds = array<i64: 16, 4>}, {pipeline_mode = #tpu.pipeline_mode<synchronous>, transform_indices = @transform_9, window_bounds = array<i64: 1, 4>}, {pipeline_mode = #tpu.pipeline_mode<synchronous>, transform_indices = @transform_10, window_bounds = array<i64: 1, 4>}, {pipeline_mode = #tpu.pipeline_mode<synchronous>, transform_indices = @transform_11, window_bounds = array<i64: 1, 4>}, {transform_indices = @transform_12, window_bounds = array<i64: 128, 4>}]} {
    %c0 = arith.constant 0 : index
    %c0_0 = arith.constant 0 : index
    %0 = vector.load %arg1[%c0, %c0_0] : memref<128x128xf32, #tpu.memory_space<vmem>>, vector<128x128xf32>
    %c0_1 = arith.constant 0 : index
    %c0_2 = arith.constant 0 : index
    %1 = vector.load %arg3[%c0_1, %c0_2] : memref<128x4xf32, #tpu.memory_space<vmem>>, vector<128x4xf32>
    %cst = arith.constant dense<0.000000e+00> : vector<128x4xf32>
    %2 = tpu.matmul %0, %1, %cst {dimension_numbers = #tpu.dot_dimension_numbers<[1], [0], [0], [1], [0, 0, 1, 1], [], []>} : vector<128x128xf32>, vector<128x4xf32>, vector<128x4xf32> -> vector<128x4xf32>
    %c0_3 = arith.constant 0 : index
    %c0_4 = arith.constant 0 : index
    %3 = vector.load %arg4[%c0_3, %c0_4] : memref<1x4xf32, #tpu.memory_space<vmem>>, vector<1x4xf32>
    %4 = vector.broadcast %3 : vector<1x4xf32> to vector<128x4xf32>
    %5 = arith.addf %2, %4 : vector<128x4xf32>
    %c0_5 = arith.constant 0 : index
    %c0_6 = arith.constant 0 : index
    %6 = vector.load %arg2[%c0_5, %c0_6] : memref<128x4xf32, #tpu.memory_space<vmem>>, vector<128x4xf32>
    %7 = arith.addf %5, %6 : vector<128x4xf32>
    %c0_7 = arith.constant 0 : index
    %c0_8 = arith.constant 0 : index
    %8 = vector.load %arg5[%c0_7, %c0_8] : memref<1x4xf32, #tpu.memory_space<vmem>>, vector<1x4xf32>
    %c0_9 = arith.constant 0 : index
    %c0_10 = arith.constant 0 : index
    %9 = vector.load %arg6[%c0_9, %c0_10] : memref<1x4xf32, #tpu.memory_space<vmem>>, vector<1x4xf32>
    %cst_11 = arith.constant dense<0.000000e+00> : vector<128xf32>
    %10 = vector.multi_reduction <add>, %7, %cst_11 [1] : vector<128x4xf32> to vector<128xf32>
    %11 = vector.shape_cast %10 : vector<128xf32> to vector<128x1xf32>
    %cst_12 = arith.constant 4.000000e+00 : f32
    %12 = vector.broadcast %cst_12 : f32 to vector<128x1xf32>
    %13 = arith.divf %11, %12 : vector<128x1xf32>
    %14 = vector.broadcast %13 : vector<128x1xf32> to vector<128x4xf32>
    %15 = arith.subf %7, %14 : vector<128x4xf32>
    %16 = arith.mulf %15, %15 : vector<128x4xf32>
    %cst_13 = arith.constant dense<0.000000e+00> : vector<128xf32>
    %17 = vector.multi_reduction <add>, %16, %cst_13 [1] : vector<128x4xf32> to vector<128xf32>
    %18 = vector.shape_cast %17 : vector<128xf32> to vector<128x1xf32>
    %cst_14 = arith.constant 4.000000e+00 : f32
    %19 = vector.broadcast %cst_14 : f32 to vector<128x1xf32>
    %20 = arith.divf %18, %19 : vector<128x1xf32>
    %21 = vector.broadcast %13 : vector<128x1xf32> to vector<128x4xf32>
    %22 = arith.subf %7, %21 : vector<128x4xf32>
    %cst_15 = arith.constant 9.99999974E-6 : f32
    %23 = vector.broadcast %cst_15 : f32 to vector<128x1xf32>
    %24 = arith.addf %20, %23 : vector<128x1xf32>
    %25 = math.rsqrt %24 : vector<128x1xf32>
    %26 = vector.broadcast %25 : vector<128x1xf32> to vector<128x4xf32>
    %27 = arith.mulf %22, %26 : vector<128x4xf32>
    %28 = vector.broadcast %8 : vector<1x4xf32> to vector<128x4xf32>
    %29 = arith.mulf %27, %28 : vector<128x4xf32>
    %30 = vector.broadcast %9 : vector<1x4xf32> to vector<128x4xf32>
    %31 = arith.addf %29, %30 : vector<128x4xf32>
    %c0_16 = arith.constant 0 : index
    %c0_17 = arith.constant 0 : index
    %32 = vector.load %arg7[%c0_16, %c0_17] : memref<4x16xf32, #tpu.memory_space<vmem>>, vector<4x16xf32>
    %cst_18 = arith.constant dense<0.000000e+00> : vector<128x16xf32>
    %33 = tpu.matmul %31, %32, %cst_18 {dimension_numbers = #tpu.dot_dimension_numbers<[1], [0], [0], [1], [0, 0, 1, 1], [], []>} : vector<128x4xf32>, vector<4x16xf32>, vector<128x16xf32> -> vector<128x16xf32>
    %c0_19 = arith.constant 0 : index
    %c0_20 = arith.constant 0 : index
    %34 = vector.load %arg8[%c0_19, %c0_20] : memref<1x16xf32, #tpu.memory_space<vmem>>, vector<1x16xf32>
    %35 = vector.broadcast %34 : vector<1x16xf32> to vector<128x16xf32>
    %36 = arith.addf %33, %35 : vector<128x16xf32>
    %cst_21 = arith.constant 5.000000e-01 : f32
    %37 = vector.broadcast %cst_21 : f32 to vector<128x16xf32>
    %38 = arith.mulf %37, %36 : vector<128x16xf32>
    %cst_22 = arith.constant 0.707106769 : f32
    %39 = vector.broadcast %cst_22 : f32 to vector<128x16xf32>
    %40 = arith.mulf %36, %39 : vector<128x16xf32>
    %41 = math.absf %40 : vector<128x16xf32>
    %cst_23 = arith.constant 0.327591091 : f32
    %42 = vector.broadcast %cst_23 : f32 to vector<128x16xf32>
    %43 = arith.mulf %42, %41 : vector<128x16xf32>
    %cst_24 = arith.constant 1.000000e+00 : f32
    %44 = vector.broadcast %cst_24 : f32 to vector<128x16xf32>
    %45 = arith.addf %44, %43 : vector<128x16xf32>
    %cst_25 = arith.constant 1.000000e+00 : f32
    %46 = vector.broadcast %cst_25 : f32 to vector<128x16xf32>
    %47 = arith.divf %46, %45 : vector<128x16xf32>
    %cst_26 = arith.constant 1.06140542 : f32
    %48 = vector.broadcast %cst_26 : f32 to vector<128x16xf32>
    %49 = arith.mulf %48, %47 : vector<128x16xf32>
    %cst_27 = arith.constant -1.45315206 : f32
    %50 = vector.broadcast %cst_27 : f32 to vector<128x16xf32>
    %51 = arith.addf %49, %50 : vector<128x16xf32>
    %52 = arith.mulf %51, %47 : vector<128x16xf32>
    %cst_28 = arith.constant 1.42141378 : f32
    %53 = vector.broadcast %cst_28 : f32 to vector<128x16xf32>
    %54 = arith.addf %52, %53 : vector<128x16xf32>
    %55 = arith.mulf %54, %47 : vector<128x16xf32>
    %cst_29 = arith.constant -0.284496725 : f32
    %56 = vector.broadcast %cst_29 : f32 to vector<128x16xf32>
    %57 = arith.addf %55, %56 : vector<128x16xf32>
    %58 = arith.mulf %57, %47 : vector<128x16xf32>
    %cst_30 = arith.constant 0.254829586 : f32
    %59 = vector.broadcast %cst_30 : f32 to vector<128x16xf32>
    %60 = arith.addf %58, %59 : vector<128x16xf32>
    %61 = arith.mulf %60, %47 : vector<128x16xf32>
    %cst_31 = arith.constant 0.000000e+00 : f32
    %62 = vector.broadcast %cst_31 : f32 to vector<128x16xf32>
    %63 = arith.subf %62, %41 : vector<128x16xf32>
    %64 = arith.mulf %63, %41 : vector<128x16xf32>
    %65 = math.exp %64 : vector<128x16xf32>
    %66 = arith.mulf %61, %65 : vector<128x16xf32>
    %cst_32 = arith.constant 1.000000e+00 : f32
    %67 = vector.broadcast %cst_32 : f32 to vector<128x16xf32>
    %68 = arith.subf %67, %66 : vector<128x16xf32>
    %cst_33 = arith.constant 0.000000e+00 : f32
    %69 = vector.broadcast %cst_33 : f32 to vector<128x16xf32>
    %70 = arith.cmpf oge, %40, %69 : vector<128x16xf32>
    %cst_34 = arith.constant 0.000000e+00 : f32
    %71 = vector.broadcast %cst_34 : f32 to vector<128x16xf32>
    %72 = arith.subf %71, %68 : vector<128x16xf32>
    %73 = arith.select %70, %68, %72 : vector<128x16xi1>, vector<128x16xf32>
    %cst_35 = arith.constant 1.000000e+00 : f32
    %74 = vector.broadcast %cst_35 : f32 to vector<128x16xf32>
    %75 = arith.addf %74, %73 : vector<128x16xf32>
    %76 = arith.mulf %38, %75 : vector<128x16xf32>
    %c0_36 = arith.constant 0 : index
    %c0_37 = arith.constant 0 : index
    %77 = vector.load %arg9[%c0_36, %c0_37] : memref<16x4xf32, #tpu.memory_space<vmem>>, vector<16x4xf32>
    %cst_38 = arith.constant dense<0.000000e+00> : vector<128x4xf32>
    %78 = tpu.matmul %76, %77, %cst_38 {dimension_numbers = #tpu.dot_dimension_numbers<[1], [0], [0], [1], [0, 0, 1, 1], [], []>} : vector<128x16xf32>, vector<16x4xf32>, vector<128x4xf32> -> vector<128x4xf32>
    %c0_39 = arith.constant 0 : index
    %c0_40 = arith.constant 0 : index
    %79 = vector.load %arg10[%c0_39, %c0_40] : memref<1x4xf32, #tpu.memory_space<vmem>>, vector<1x4xf32>
    %80 = vector.broadcast %79 : vector<1x4xf32> to vector<128x4xf32>
    %81 = arith.addf %78, %80 : vector<128x4xf32>
    %82 = arith.addf %81, %31 : vector<128x4xf32>
    %c0_41 = arith.constant 0 : index
    %c0_42 = arith.constant 0 : index
    %83 = vector.load %arg11[%c0_41, %c0_42] : memref<1x4xf32, #tpu.memory_space<vmem>>, vector<1x4xf32>
    %c0_43 = arith.constant 0 : index
    %c0_44 = arith.constant 0 : index
    %84 = vector.load %arg12[%c0_43, %c0_44] : memref<1x4xf32, #tpu.memory_space<vmem>>, vector<1x4xf32>
    %cst_45 = arith.constant dense<0.000000e+00> : vector<128xf32>
    %85 = vector.multi_reduction <add>, %82, %cst_45 [1] : vector<128x4xf32> to vector<128xf32>
    %86 = vector.shape_cast %85 : vector<128xf32> to vector<128x1xf32>
    %cst_46 = arith.constant 4.000000e+00 : f32
    %87 = vector.broadcast %cst_46 : f32 to vector<128x1xf32>
    %88 = arith.divf %86, %87 : vector<128x1xf32>
    %89 = vector.broadcast %88 : vector<128x1xf32> to vector<128x4xf32>
    %90 = arith.subf %82, %89 : vector<128x4xf32>
    %91 = arith.mulf %90, %90 : vector<128x4xf32>
    %cst_47 = arith.constant dense<0.000000e+00> : vector<128xf32>
    %92 = vector.multi_reduction <add>, %91, %cst_47 [1] : vector<128x4xf32> to vector<128xf32>
    %93 = vector.shape_cast %92 : vector<128xf32> to vector<128x1xf32>
    %cst_48 = arith.constant 4.000000e+00 : f32
    %94 = vector.broadcast %cst_48 : f32 to vector<128x1xf32>
    %95 = arith.divf %93, %94 : vector<128x1xf32>
    %96 = vector.broadcast %88 : vector<128x1xf32> to vector<128x4xf32>
    %97 = arith.subf %82, %96 : vector<128x4xf32>
    %cst_49 = arith.constant 9.99999974E-6 : f32
    %98 = vector.broadcast %cst_49 : f32 to vector<128x1xf32>
    %99 = arith.addf %95, %98 : vector<128x1xf32>
    %100 = math.rsqrt %99 : vector<128x1xf32>
    %101 = vector.broadcast %100 : vector<128x1xf32> to vector<128x4xf32>
    %102 = arith.mulf %97, %101 : vector<128x4xf32>
    %103 = vector.broadcast %83 : vector<1x4xf32> to vector<128x4xf32>
    %104 = arith.mulf %102, %103 : vector<128x4xf32>
    %105 = vector.broadcast %84 : vector<1x4xf32> to vector<128x4xf32>
    %106 = arith.addf %104, %105 : vector<128x4xf32>
    %c0_50 = arith.constant 0 : index
    %c0_51 = arith.constant 0 : index
    %107 = vector.load %arg13[%c0_50, %c0_51] : memref<128x4xf32, #tpu.memory_space<vmem>>, vector<128x4xf32>
    tpu.vector_store %arg13[%c0_50, %c0_51], %106 {strides = array<i32>} : memref<128x4xf32, #tpu.memory_space<vmem>>, vector<128x4xf32>,
    return
  }
  func.func @transform_0(%arg0: i32) -> (i32, i32) {
    %c0_i32 = arith.constant 0 : i32
    %c0_i32_0 = arith.constant 0 : i32
    return %arg0, %c0_i32 : i32, i32
  }
  func.func @transform_1(%arg0: i32) -> (i32, i32) {
    %c0_i32 = arith.constant 0 : i32
    %c0_i32_0 = arith.constant 0 : i32
    return %arg0, %c0_i32 : i32, i32
  }
  func.func @transform_2(%arg0: i32) -> (i32, i32) {
    %c0_i32 = arith.constant 0 : i32
    %c0_i32_0 = arith.constant 0 : i32
    %c0_i32_1 = arith.constant 0 : i32
    return %c0_i32, %c0_i32_0 : i32, i32
  }
  func.func @transform_3(%arg0: i32) -> (i32, i32) {
    %c0_i32 = arith.constant 0 : i32
    %c0_i32_0 = arith.constant 0 : i32
    %c0_i32_1 = arith.constant 0 : i32
    return %c0_i32, %c0_i32_0 : i32, i32
  }
  func.func @transform_4(%arg0: i32) -> (i32, i32) {
    %c0_i32 = arith.constant 0 : i32
    %c0_i32_0 = arith.constant 0 : i32
    %c0_i32_1 = arith.constant 0 : i32
    return %c0_i32, %c0_i32_0 : i32, i32
  }
  func.func @transform_5(%arg0: i32) -> (i32, i32) {
    %c0_i32 = arith.constant 0 : i32
    %c0_i32_0 = arith.constant 0 : i32
    %c0_i32_1 = arith.constant 0 : i32
    return %c0_i32, %c0_i32_0 : i32, i32
  }
  func.func @transform_6(%arg0: i32) -> (i32, i32) {
    %c0_i32 = arith.constant 0 : i32
    %c0_i32_0 = arith.constant 0 : i32
    %c0_i32_1 = arith.constant 0 : i32
    return %c0_i32, %c0_i32_0 : i32, i32
  }
  func.func @transform_7(%arg0: i32) -> (i32, i32) {
    %c0_i32 = arith.constant 0 : i32
    %c0_i32_0 = arith.constant 0 : i32
    %c0_i32_1 = arith.constant 0 : i32
    return %c0_i32, %c0_i32_0 : i32, i32
  }
  func.func @transform_8(%arg0: i32) -> (i32, i32) {
    %c0_i32 = arith.constant 0 : i32
    %c0_i32_0 = arith.constant 0 : i32
    %c0_i32_1 = arith.constant 0 : i32
    return %c0_i32, %c0_i32_0 : i32, i32
  }
  func.func @transform_9(%arg0: i32) -> (i32, i32) {
    %c0_i32 = arith.constant 0 : i32
    %c0_i32_0 = arith.constant 0 : i32
    %c0_i32_1 = arith.constant 0 : i32
    return %c0_i32, %c0_i32_0 : i32, i32
  }
  func.func @transform_10(%arg0: i32) -> (i32, i32) {
    %c0_i32 = arith.constant 0 : i32
    %c0_i32_0 = arith.constant 0 : i32
    %c0_i32_1 = arith.constant 0 : i32
    return %c0_i32, %c0_i32_0 : i32, i32
  }
  func.func @transform_11(%arg0: i32) -> (i32, i32) {
    %c0_i32 = arith.constant 0 : i32
    %c0_i32_0 = arith.constant 0 : i32
    %c0_i32_1 = arith.constant 0 : i32
    return %c0_i32, %c0_i32_0 : i32, i32
  }
  func.func @transform_12(%arg0: i32) -> (i32, i32) {
    %c0_i32 = arith.constant 0 : i32
    %c0_i32_0 = arith.constant 0 : i32
    return %arg0, %c0_i32 : i32, i32
  }
}

module attributes {stable_mosaic.version = 11 : i64} {
  func.func @_gru_kernel(%arg0: i32, %arg1: memref<128x4xf32, #tpu.memory_space<vmem>>, %arg2: memref<16x128xf32, #tpu.memory_space<vmem>>, %arg3: memref<4x384xf32, #tpu.memory_space<vmem>>, %arg4: memref<128x384xf32, #tpu.memory_space<vmem>>, %arg5: memref<1x384xf32, #tpu.memory_space<vmem>>, %arg6: memref<1x128xf32, #tpu.memory_space<vmem>>, %arg7: memref<128x128xf32, #tpu.memory_space<vmem>>, %arg8: memref<16x128xf32, #tpu.memory_space<vmem>>, %arg9: memref<128x384xf32, #tpu.memory_space<vmem>>) attributes {dimension_semantics = [#tpu.dimension_semantics<arbitrary>], iteration_bounds = array<i64: 1>, scalar_prefetch = 0 : i64, scratch_operands = 1 : i64, tpu.core_type = #tpu.core_type<tc>, window_params = [{transform_indices = @transform_0, window_bounds = array<i64: 128, 4>}, {pipeline_mode = #tpu.pipeline_mode<synchronous>, transform_indices = @transform_1, window_bounds = array<i64: 16, 128>}, {pipeline_mode = #tpu.pipeline_mode<synchronous>, transform_indices = @transform_2, window_bounds = array<i64: 4, 384>}, {pipeline_mode = #tpu.pipeline_mode<synchronous>, transform_indices = @transform_3, window_bounds = array<i64: 128, 384>}, {pipeline_mode = #tpu.pipeline_mode<synchronous>, transform_indices = @transform_4, window_bounds = array<i64: 1, 384>}, {pipeline_mode = #tpu.pipeline_mode<synchronous>, transform_indices = @transform_5, window_bounds = array<i64: 1, 128>}, {transform_indices = @transform_6, window_bounds = array<i64: 128, 128>}, {pipeline_mode = #tpu.pipeline_mode<synchronous>, transform_indices = @transform_7, window_bounds = array<i64: 16, 128>}]} {
    %c0_i32 = arith.constant 0 : i32
    %0 = arith.cmpi eq, %arg0, %c0_i32 : i32
    %1 = arith.extui %0 : i1 to i32
    %c0_i32_0 = arith.constant 0 : i32
    %2 = arith.cmpi ne, %1, %c0_i32_0 : i32
    scf.if %2 {
      %c0_96 = arith.constant 0 : index
      %c0_97 = arith.constant 0 : index
      %310 = vector.load %arg2[%c0_96, %c0_97] : memref<16x128xf32, #tpu.memory_space<vmem>>, vector<16x128xf32>
      %c0_98 = arith.constant 0 : index
      %c0_99 = arith.constant 0 : index
      %311 = vector.load %arg8[%c0_98, %c0_99] : memref<16x128xf32, #tpu.memory_space<vmem>>, vector<16x128xf32>
      tpu.vector_store %arg8[%c0_98, %c0_99], %310 {strides = array<i32>} : memref<16x128xf32, #tpu.memory_space<vmem>>, vector<16x128xf32>,
    } else {
    }
    %c0 = arith.constant 0 : index
    %c0_1 = arith.constant 0 : index
    %3 = vector.load %arg1[%c0, %c0_1] : memref<128x4xf32, #tpu.memory_space<vmem>>, vector<128x4xf32>
    %c0_2 = arith.constant 0 : index
    %c0_3 = arith.constant 0 : index
    %4 = vector.load %arg3[%c0_2, %c0_3] : memref<4x384xf32, #tpu.memory_space<vmem>>, vector<4x384xf32>
    %cst = arith.constant dense<0.000000e+00> : vector<128x384xf32>
    %5 = tpu.matmul %3, %4, %cst {dimension_numbers = #tpu.dot_dimension_numbers<[1], [0], [0], [1], [0, 0, 1, 1], [], []>} : vector<128x4xf32>, vector<4x384xf32>, vector<128x384xf32> -> vector<128x384xf32>
    %c0_4 = arith.constant 0 : index
    %c0_5 = arith.constant 0 : index
    %6 = vector.load %arg5[%c0_4, %c0_5] : memref<1x384xf32, #tpu.memory_space<vmem>>, vector<1x384xf32>
    %7 = vector.broadcast %6 : vector<1x384xf32> to vector<128x384xf32>
    %8 = arith.addf %5, %7 : vector<128x384xf32>
    %c0_6 = arith.constant 0 : index
    %c0_7 = arith.constant 0 : index
    %9 = vector.load %arg9[%c0_6, %c0_7] : memref<128x384xf32, #tpu.memory_space<vmem>>, vector<128x384xf32>
    tpu.vector_store %arg9[%c0_6, %c0_7], %8 {strides = array<i32>} : memref<128x384xf32, #tpu.memory_space<vmem>>, vector<128x384xf32>,
    %c0_8 = arith.constant 0 : index
    %c0_9 = arith.constant 0 : index
    %10 = vector.load %arg4[%c0_8, %c0_9] : memref<128x384xf32, #tpu.memory_space<vmem>>, vector<128x384xf32>
    %c0_10 = arith.constant 0 : index
    %c0_11 = arith.constant 0 : index
    %11 = vector.load %arg6[%c0_10, %c0_11] : memref<1x128xf32, #tpu.memory_space<vmem>>, vector<1x128xf32>
    %c0_12 = arith.constant 0 : index
    %c0_13 = arith.constant 0 : index
    %12 = vector.load %arg8[%c0_12, %c0_13] : memref<16x128xf32, #tpu.memory_space<vmem>>, vector<16x128xf32>
    %c0_i32_14 = arith.constant 0 : i32
    %cst_15 = arith.constant dense<0.000000e+00> : vector<16x384xf32>
    %13 = tpu.matmul %12, %10, %cst_15 {dimension_numbers = #tpu.dot_dimension_numbers<[1], [0], [0], [1], [0, 0, 1, 1], [], []>} : vector<16x128xf32>, vector<128x384xf32>, vector<16x384xf32> -> vector<16x384xf32>
    %c16_i32 = arith.constant 16 : i32
    %14 = arith.muli %c0_i32_14, %c16_i32 : i32
    %15 = tpu.assume_multiple %14, 16 : i32
    %16 = arith.index_cast %15 : i32 to index
    %c0_16 = arith.constant 0 : index
    %17 = vector.load %arg9[%16, %c0_16] : memref<128x384xf32, #tpu.memory_space<vmem>>, vector<16x384xf32>
    %18 = vector.extract_strided_slice %17 {offsets = [0, 0], sizes = [16, 128], strides = [1, 1]} : vector<16x384xf32> to vector<16x128xf32>
    %19 = vector.extract_strided_slice %13 {offsets = [0, 0], sizes = [16, 128], strides = [1, 1]} : vector<16x384xf32> to vector<16x128xf32>
    %20 = arith.addf %18, %19 : vector<16x128xf32>
    %cst_17 = arith.constant 0.000000e+00 : f32
    %21 = vector.broadcast %cst_17 : f32 to vector<16x128xf32>
    %22 = arith.subf %21, %20 : vector<16x128xf32>
    %23 = math.exp %22 : vector<16x128xf32>
    %cst_18 = arith.constant 1.000000e+00 : f32
    %24 = vector.broadcast %cst_18 : f32 to vector<16x128xf32>
    %25 = arith.addf %24, %23 : vector<16x128xf32>
    %cst_19 = arith.constant 1.000000e+00 : f32
    %26 = vector.broadcast %cst_19 : f32 to vector<16x128xf32>
    %27 = arith.divf %26, %25 : vector<16x128xf32>
    %28 = vector.extract_strided_slice %17 {offsets = [0, 128], sizes = [16, 128], strides = [1, 1]} : vector<16x384xf32> to vector<16x128xf32>
    %29 = vector.extract_strided_slice %13 {offsets = [0, 128], sizes = [16, 128], strides = [1, 1]} : vector<16x384xf32> to vector<16x128xf32>
    %30 = arith.addf %28, %29 : vector<16x128xf32>
    %cst_20 = arith.constant 0.000000e+00 : f32
    %31 = vector.broadcast %cst_20 : f32 to vector<16x128xf32>
    %32 = arith.subf %31, %30 : vector<16x128xf32>
    %33 = math.exp %32 : vector<16x128xf32>
    %cst_21 = arith.constant 1.000000e+00 : f32
    %34 = vector.broadcast %cst_21 : f32 to vector<16x128xf32>
    %35 = arith.addf %34, %33 : vector<16x128xf32>
    %cst_22 = arith.constant 1.000000e+00 : f32
    %36 = vector.broadcast %cst_22 : f32 to vector<16x128xf32>
    %37 = arith.divf %36, %35 : vector<16x128xf32>
    %38 = vector.extract_strided_slice %17 {offsets = [0, 256], sizes = [16, 128], strides = [1, 1]} : vector<16x384xf32> to vector<16x128xf32>
    %39 = vector.extract_strided_slice %13 {offsets = [0, 256], sizes = [16, 128], strides = [1, 1]} : vector<16x384xf32> to vector<16x128xf32>
    %40 = vector.broadcast %11 : vector<1x128xf32> to vector<16x128xf32>
    %41 = arith.addf %39, %40 : vector<16x128xf32>
    %42 = arith.mulf %27, %41 : vector<16x128xf32>
    %43 = arith.addf %38, %42 : vector<16x128xf32>
    %44 = math.tanh %43 : vector<16x128xf32>
    %45 = arith.subf %12, %44 : vector<16x128xf32>
    %46 = arith.mulf %37, %45 : vector<16x128xf32>
    %47 = arith.addf %44, %46 : vector<16x128xf32>
    %48 = arith.index_cast %15 : i32 to index
    %c0_23 = arith.constant 0 : index
    %49 = vector.load %arg7[%48, %c0_23] : memref<128x128xf32, #tpu.memory_space<vmem>>, vector<16x128xf32>
    tpu.vector_store %arg7[%48, %c0_23], %47 {strides = array<i32>} : memref<128x128xf32, #tpu.memory_space<vmem>>, vector<16x128xf32>,
    %c1_i32 = arith.constant 1 : i32
    %cst_24 = arith.constant dense<0.000000e+00> : vector<16x384xf32>
    %50 = tpu.matmul %47, %10, %cst_24 {dimension_numbers = #tpu.dot_dimension_numbers<[1], [0], [0], [1], [0, 0, 1, 1], [], []>} : vector<16x128xf32>, vector<128x384xf32>, vector<16x384xf32> -> vector<16x384xf32>
    %c16_i32_25 = arith.constant 16 : i32
    %51 = arith.muli %c1_i32, %c16_i32_25 : i32
    %52 = tpu.assume_multiple %51, 16 : i32
    %53 = arith.index_cast %52 : i32 to index
    %c0_26 = arith.constant 0 : index
    %54 = vector.load %arg9[%53, %c0_26] : memref<128x384xf32, #tpu.memory_space<vmem>>, vector<16x384xf32>
    %55 = vector.extract_strided_slice %54 {offsets = [0, 0], sizes = [16, 128], strides = [1, 1]} : vector<16x384xf32> to vector<16x128xf32>
    %56 = vector.extract_strided_slice %50 {offsets = [0, 0], sizes = [16, 128], strides = [1, 1]} : vector<16x384xf32> to vector<16x128xf32>
    %57 = arith.addf %55, %56 : vector<16x128xf32>
    %cst_27 = arith.constant 0.000000e+00 : f32
    %58 = vector.broadcast %cst_27 : f32 to vector<16x128xf32>
    %59 = arith.subf %58, %57 : vector<16x128xf32>
    %60 = math.exp %59 : vector<16x128xf32>
    %cst_28 = arith.constant 1.000000e+00 : f32
    %61 = vector.broadcast %cst_28 : f32 to vector<16x128xf32>
    %62 = arith.addf %61, %60 : vector<16x128xf32>
    %cst_29 = arith.constant 1.000000e+00 : f32
    %63 = vector.broadcast %cst_29 : f32 to vector<16x128xf32>
    %64 = arith.divf %63, %62 : vector<16x128xf32>
    %65 = vector.extract_strided_slice %54 {offsets = [0, 128], sizes = [16, 128], strides = [1, 1]} : vector<16x384xf32> to vector<16x128xf32>
    %66 = vector.extract_strided_slice %50 {offsets = [0, 128], sizes = [16, 128], strides = [1, 1]} : vector<16x384xf32> to vector<16x128xf32>
    %67 = arith.addf %65, %66 : vector<16x128xf32>
    %cst_30 = arith.constant 0.000000e+00 : f32
    %68 = vector.broadcast %cst_30 : f32 to vector<16x128xf32>
    %69 = arith.subf %68, %67 : vector<16x128xf32>
    %70 = math.exp %69 : vector<16x128xf32>
    %cst_31 = arith.constant 1.000000e+00 : f32
    %71 = vector.broadcast %cst_31 : f32 to vector<16x128xf32>
    %72 = arith.addf %71, %70 : vector<16x128xf32>
    %cst_32 = arith.constant 1.000000e+00 : f32
    %73 = vector.broadcast %cst_32 : f32 to vector<16x128xf32>
    %74 = arith.divf %73, %72 : vector<16x128xf32>
    %75 = vector.extract_strided_slice %54 {offsets = [0, 256], sizes = [16, 128], strides = [1, 1]} : vector<16x384xf32> to vector<16x128xf32>
    %76 = vector.extract_strided_slice %50 {offsets = [0, 256], sizes = [16, 128], strides = [1, 1]} : vector<16x384xf32> to vector<16x128xf32>
    %77 = vector.broadcast %11 : vector<1x128xf32> to vector<16x128xf32>
    %78 = arith.addf %76, %77 : vector<16x128xf32>
    %79 = arith.mulf %64, %78 : vector<16x128xf32>
    %80 = arith.addf %75, %79 : vector<16x128xf32>
    %81 = math.tanh %80 : vector<16x128xf32>
    %82 = arith.subf %47, %81 : vector<16x128xf32>
    %83 = arith.mulf %74, %82 : vector<16x128xf32>
    %84 = arith.addf %81, %83 : vector<16x128xf32>
    %85 = arith.index_cast %52 : i32 to index
    %c0_33 = arith.constant 0 : index
    %86 = vector.load %arg7[%85, %c0_33] : memref<128x128xf32, #tpu.memory_space<vmem>>, vector<16x128xf32>
    tpu.vector_store %arg7[%85, %c0_33], %84 {strides = array<i32>} : memref<128x128xf32, #tpu.memory_space<vmem>>, vector<16x128xf32>,
    %c2_i32 = arith.constant 2 : i32
    %cst_34 = arith.constant dense<0.000000e+00> : vector<16x384xf32>
    %87 = tpu.matmul %84, %10, %cst_34 {dimension_numbers = #tpu.dot_dimension_numbers<[1], [0], [0], [1], [0, 0, 1, 1], [], []>} : vector<16x128xf32>, vector<128x384xf32>, vector<16x384xf32> -> vector<16x384xf32>
    %c16_i32_35 = arith.constant 16 : i32
    %88 = arith.muli %c2_i32, %c16_i32_35 : i32
    %89 = tpu.assume_multiple %88, 16 : i32
    %90 = arith.index_cast %89 : i32 to index
    %c0_36 = arith.constant 0 : index
    %91 = vector.load %arg9[%90, %c0_36] : memref<128x384xf32, #tpu.memory_space<vmem>>, vector<16x384xf32>
    %92 = vector.extract_strided_slice %91 {offsets = [0, 0], sizes = [16, 128], strides = [1, 1]} : vector<16x384xf32> to vector<16x128xf32>
    %93 = vector.extract_strided_slice %87 {offsets = [0, 0], sizes = [16, 128], strides = [1, 1]} : vector<16x384xf32> to vector<16x128xf32>
    %94 = arith.addf %92, %93 : vector<16x128xf32>
    %cst_37 = arith.constant 0.000000e+00 : f32
    %95 = vector.broadcast %cst_37 : f32 to vector<16x128xf32>
    %96 = arith.subf %95, %94 : vector<16x128xf32>
    %97 = math.exp %96 : vector<16x128xf32>
    %cst_38 = arith.constant 1.000000e+00 : f32
    %98 = vector.broadcast %cst_38 : f32 to vector<16x128xf32>
    %99 = arith.addf %98, %97 : vector<16x128xf32>
    %cst_39 = arith.constant 1.000000e+00 : f32
    %100 = vector.broadcast %cst_39 : f32 to vector<16x128xf32>
    %101 = arith.divf %100, %99 : vector<16x128xf32>
    %102 = vector.extract_strided_slice %91 {offsets = [0, 128], sizes = [16, 128], strides = [1, 1]} : vector<16x384xf32> to vector<16x128xf32>
    %103 = vector.extract_strided_slice %87 {offsets = [0, 128], sizes = [16, 128], strides = [1, 1]} : vector<16x384xf32> to vector<16x128xf32>
    %104 = arith.addf %102, %103 : vector<16x128xf32>
    %cst_40 = arith.constant 0.000000e+00 : f32
    %105 = vector.broadcast %cst_40 : f32 to vector<16x128xf32>
    %106 = arith.subf %105, %104 : vector<16x128xf32>
    %107 = math.exp %106 : vector<16x128xf32>
    %cst_41 = arith.constant 1.000000e+00 : f32
    %108 = vector.broadcast %cst_41 : f32 to vector<16x128xf32>
    %109 = arith.addf %108, %107 : vector<16x128xf32>
    %cst_42 = arith.constant 1.000000e+00 : f32
    %110 = vector.broadcast %cst_42 : f32 to vector<16x128xf32>
    %111 = arith.divf %110, %109 : vector<16x128xf32>
    %112 = vector.extract_strided_slice %91 {offsets = [0, 256], sizes = [16, 128], strides = [1, 1]} : vector<16x384xf32> to vector<16x128xf32>
    %113 = vector.extract_strided_slice %87 {offsets = [0, 256], sizes = [16, 128], strides = [1, 1]} : vector<16x384xf32> to vector<16x128xf32>
    %114 = vector.broadcast %11 : vector<1x128xf32> to vector<16x128xf32>
    %115 = arith.addf %113, %114 : vector<16x128xf32>
    %116 = arith.mulf %101, %115 : vector<16x128xf32>
    %117 = arith.addf %112, %116 : vector<16x128xf32>
    %118 = math.tanh %117 : vector<16x128xf32>
    %119 = arith.subf %84, %118 : vector<16x128xf32>
    %120 = arith.mulf %111, %119 : vector<16x128xf32>
    %121 = arith.addf %118, %120 : vector<16x128xf32>
    %122 = arith.index_cast %89 : i32 to index
    %c0_43 = arith.constant 0 : index
    %123 = vector.load %arg7[%122, %c0_43] : memref<128x128xf32, #tpu.memory_space<vmem>>, vector<16x128xf32>
    tpu.vector_store %arg7[%122, %c0_43], %121 {strides = array<i32>} : memref<128x128xf32, #tpu.memory_space<vmem>>, vector<16x128xf32>,
    %c3_i32 = arith.constant 3 : i32
    %cst_44 = arith.constant dense<0.000000e+00> : vector<16x384xf32>
    %124 = tpu.matmul %121, %10, %cst_44 {dimension_numbers = #tpu.dot_dimension_numbers<[1], [0], [0], [1], [0, 0, 1, 1], [], []>} : vector<16x128xf32>, vector<128x384xf32>, vector<16x384xf32> -> vector<16x384xf32>
    %c16_i32_45 = arith.constant 16 : i32
    %125 = arith.muli %c3_i32, %c16_i32_45 : i32
    %126 = tpu.assume_multiple %125, 16 : i32
    %127 = arith.index_cast %126 : i32 to index
    %c0_46 = arith.constant 0 : index
    %128 = vector.load %arg9[%127, %c0_46] : memref<128x384xf32, #tpu.memory_space<vmem>>, vector<16x384xf32>
    %129 = vector.extract_strided_slice %128 {offsets = [0, 0], sizes = [16, 128], strides = [1, 1]} : vector<16x384xf32> to vector<16x128xf32>
    %130 = vector.extract_strided_slice %124 {offsets = [0, 0], sizes = [16, 128], strides = [1, 1]} : vector<16x384xf32> to vector<16x128xf32>
    %131 = arith.addf %129, %130 : vector<16x128xf32>
    %cst_47 = arith.constant 0.000000e+00 : f32
    %132 = vector.broadcast %cst_47 : f32 to vector<16x128xf32>
    %133 = arith.subf %132, %131 : vector<16x128xf32>
    %134 = math.exp %133 : vector<16x128xf32>
    %cst_48 = arith.constant 1.000000e+00 : f32
    %135 = vector.broadcast %cst_48 : f32 to vector<16x128xf32>
    %136 = arith.addf %135, %134 : vector<16x128xf32>
    %cst_49 = arith.constant 1.000000e+00 : f32
    %137 = vector.broadcast %cst_49 : f32 to vector<16x128xf32>
    %138 = arith.divf %137, %136 : vector<16x128xf32>
    %139 = vector.extract_strided_slice %128 {offsets = [0, 128], sizes = [16, 128], strides = [1, 1]} : vector<16x384xf32> to vector<16x128xf32>
    %140 = vector.extract_strided_slice %124 {offsets = [0, 128], sizes = [16, 128], strides = [1, 1]} : vector<16x384xf32> to vector<16x128xf32>
    %141 = arith.addf %139, %140 : vector<16x128xf32>
    %cst_50 = arith.constant 0.000000e+00 : f32
    %142 = vector.broadcast %cst_50 : f32 to vector<16x128xf32>
    %143 = arith.subf %142, %141 : vector<16x128xf32>
    %144 = math.exp %143 : vector<16x128xf32>
    %cst_51 = arith.constant 1.000000e+00 : f32
    %145 = vector.broadcast %cst_51 : f32 to vector<16x128xf32>
    %146 = arith.addf %145, %144 : vector<16x128xf32>
    %cst_52 = arith.constant 1.000000e+00 : f32
    %147 = vector.broadcast %cst_52 : f32 to vector<16x128xf32>
    %148 = arith.divf %147, %146 : vector<16x128xf32>
    %149 = vector.extract_strided_slice %128 {offsets = [0, 256], sizes = [16, 128], strides = [1, 1]} : vector<16x384xf32> to vector<16x128xf32>
    %150 = vector.extract_strided_slice %124 {offsets = [0, 256], sizes = [16, 128], strides = [1, 1]} : vector<16x384xf32> to vector<16x128xf32>
    %151 = vector.broadcast %11 : vector<1x128xf32> to vector<16x128xf32>
    %152 = arith.addf %150, %151 : vector<16x128xf32>
    %153 = arith.mulf %138, %152 : vector<16x128xf32>
    %154 = arith.addf %149, %153 : vector<16x128xf32>
    %155 = math.tanh %154 : vector<16x128xf32>
    %156 = arith.subf %121, %155 : vector<16x128xf32>
    %157 = arith.mulf %148, %156 : vector<16x128xf32>
    %158 = arith.addf %155, %157 : vector<16x128xf32>
    %159 = arith.index_cast %126 : i32 to index
    %c0_53 = arith.constant 0 : index
    %160 = vector.load %arg7[%159, %c0_53] : memref<128x128xf32, #tpu.memory_space<vmem>>, vector<16x128xf32>
    tpu.vector_store %arg7[%159, %c0_53], %158 {strides = array<i32>} : memref<128x128xf32, #tpu.memory_space<vmem>>, vector<16x128xf32>,
    %c4_i32 = arith.constant 4 : i32
    %cst_54 = arith.constant dense<0.000000e+00> : vector<16x384xf32>
    %161 = tpu.matmul %158, %10, %cst_54 {dimension_numbers = #tpu.dot_dimension_numbers<[1], [0], [0], [1], [0, 0, 1, 1], [], []>} : vector<16x128xf32>, vector<128x384xf32>, vector<16x384xf32> -> vector<16x384xf32>
    %c16_i32_55 = arith.constant 16 : i32
    %162 = arith.muli %c4_i32, %c16_i32_55 : i32
    %163 = tpu.assume_multiple %162, 16 : i32
    %164 = arith.index_cast %163 : i32 to index
    %c0_56 = arith.constant 0 : index
    %165 = vector.load %arg9[%164, %c0_56] : memref<128x384xf32, #tpu.memory_space<vmem>>, vector<16x384xf32>
    %166 = vector.extract_strided_slice %165 {offsets = [0, 0], sizes = [16, 128], strides = [1, 1]} : vector<16x384xf32> to vector<16x128xf32>
    %167 = vector.extract_strided_slice %161 {offsets = [0, 0], sizes = [16, 128], strides = [1, 1]} : vector<16x384xf32> to vector<16x128xf32>
    %168 = arith.addf %166, %167 : vector<16x128xf32>
    %cst_57 = arith.constant 0.000000e+00 : f32
    %169 = vector.broadcast %cst_57 : f32 to vector<16x128xf32>
    %170 = arith.subf %169, %168 : vector<16x128xf32>
    %171 = math.exp %170 : vector<16x128xf32>
    %cst_58 = arith.constant 1.000000e+00 : f32
    %172 = vector.broadcast %cst_58 : f32 to vector<16x128xf32>
    %173 = arith.addf %172, %171 : vector<16x128xf32>
    %cst_59 = arith.constant 1.000000e+00 : f32
    %174 = vector.broadcast %cst_59 : f32 to vector<16x128xf32>
    %175 = arith.divf %174, %173 : vector<16x128xf32>
    %176 = vector.extract_strided_slice %165 {offsets = [0, 128], sizes = [16, 128], strides = [1, 1]} : vector<16x384xf32> to vector<16x128xf32>
    %177 = vector.extract_strided_slice %161 {offsets = [0, 128], sizes = [16, 128], strides = [1, 1]} : vector<16x384xf32> to vector<16x128xf32>
    %178 = arith.addf %176, %177 : vector<16x128xf32>
    %cst_60 = arith.constant 0.000000e+00 : f32
    %179 = vector.broadcast %cst_60 : f32 to vector<16x128xf32>
    %180 = arith.subf %179, %178 : vector<16x128xf32>
    %181 = math.exp %180 : vector<16x128xf32>
    %cst_61 = arith.constant 1.000000e+00 : f32
    %182 = vector.broadcast %cst_61 : f32 to vector<16x128xf32>
    %183 = arith.addf %182, %181 : vector<16x128xf32>
    %cst_62 = arith.constant 1.000000e+00 : f32
    %184 = vector.broadcast %cst_62 : f32 to vector<16x128xf32>
    %185 = arith.divf %184, %183 : vector<16x128xf32>
    %186 = vector.extract_strided_slice %165 {offsets = [0, 256], sizes = [16, 128], strides = [1, 1]} : vector<16x384xf32> to vector<16x128xf32>
    %187 = vector.extract_strided_slice %161 {offsets = [0, 256], sizes = [16, 128], strides = [1, 1]} : vector<16x384xf32> to vector<16x128xf32>
    %188 = vector.broadcast %11 : vector<1x128xf32> to vector<16x128xf32>
    %189 = arith.addf %187, %188 : vector<16x128xf32>
    %190 = arith.mulf %175, %189 : vector<16x128xf32>
    %191 = arith.addf %186, %190 : vector<16x128xf32>
    %192 = math.tanh %191 : vector<16x128xf32>
    %193 = arith.subf %158, %192 : vector<16x128xf32>
    %194 = arith.mulf %185, %193 : vector<16x128xf32>
    %195 = arith.addf %192, %194 : vector<16x128xf32>
    %196 = arith.index_cast %163 : i32 to index
    %c0_63 = arith.constant 0 : index
    %197 = vector.load %arg7[%196, %c0_63] : memref<128x128xf32, #tpu.memory_space<vmem>>, vector<16x128xf32>
    tpu.vector_store %arg7[%196, %c0_63], %195 {strides = array<i32>} : memref<128x128xf32, #tpu.memory_space<vmem>>, vector<16x128xf32>,
    %c5_i32 = arith.constant 5 : i32
    %cst_64 = arith.constant dense<0.000000e+00> : vector<16x384xf32>
    %198 = tpu.matmul %195, %10, %cst_64 {dimension_numbers = #tpu.dot_dimension_numbers<[1], [0], [0], [1], [0, 0, 1, 1], [], []>} : vector<16x128xf32>, vector<128x384xf32>, vector<16x384xf32> -> vector<16x384xf32>
    %c16_i32_65 = arith.constant 16 : i32
    %199 = arith.muli %c5_i32, %c16_i32_65 : i32
    %200 = tpu.assume_multiple %199, 16 : i32
    %201 = arith.index_cast %200 : i32 to index
    %c0_66 = arith.constant 0 : index
    %202 = vector.load %arg9[%201, %c0_66] : memref<128x384xf32, #tpu.memory_space<vmem>>, vector<16x384xf32>
    %203 = vector.extract_strided_slice %202 {offsets = [0, 0], sizes = [16, 128], strides = [1, 1]} : vector<16x384xf32> to vector<16x128xf32>
    %204 = vector.extract_strided_slice %198 {offsets = [0, 0], sizes = [16, 128], strides = [1, 1]} : vector<16x384xf32> to vector<16x128xf32>
    %205 = arith.addf %203, %204 : vector<16x128xf32>
    %cst_67 = arith.constant 0.000000e+00 : f32
    %206 = vector.broadcast %cst_67 : f32 to vector<16x128xf32>
    %207 = arith.subf %206, %205 : vector<16x128xf32>
    %208 = math.exp %207 : vector<16x128xf32>
    %cst_68 = arith.constant 1.000000e+00 : f32
    %209 = vector.broadcast %cst_68 : f32 to vector<16x128xf32>
    %210 = arith.addf %209, %208 : vector<16x128xf32>
    %cst_69 = arith.constant 1.000000e+00 : f32
    %211 = vector.broadcast %cst_69 : f32 to vector<16x128xf32>
    %212 = arith.divf %211, %210 : vector<16x128xf32>
    %213 = vector.extract_strided_slice %202 {offsets = [0, 128], sizes = [16, 128], strides = [1, 1]} : vector<16x384xf32> to vector<16x128xf32>
    %214 = vector.extract_strided_slice %198 {offsets = [0, 128], sizes = [16, 128], strides = [1, 1]} : vector<16x384xf32> to vector<16x128xf32>
    %215 = arith.addf %213, %214 : vector<16x128xf32>
    %cst_70 = arith.constant 0.000000e+00 : f32
    %216 = vector.broadcast %cst_70 : f32 to vector<16x128xf32>
    %217 = arith.subf %216, %215 : vector<16x128xf32>
    %218 = math.exp %217 : vector<16x128xf32>
    %cst_71 = arith.constant 1.000000e+00 : f32
    %219 = vector.broadcast %cst_71 : f32 to vector<16x128xf32>
    %220 = arith.addf %219, %218 : vector<16x128xf32>
    %cst_72 = arith.constant 1.000000e+00 : f32
    %221 = vector.broadcast %cst_72 : f32 to vector<16x128xf32>
    %222 = arith.divf %221, %220 : vector<16x128xf32>
    %223 = vector.extract_strided_slice %202 {offsets = [0, 256], sizes = [16, 128], strides = [1, 1]} : vector<16x384xf32> to vector<16x128xf32>
    %224 = vector.extract_strided_slice %198 {offsets = [0, 256], sizes = [16, 128], strides = [1, 1]} : vector<16x384xf32> to vector<16x128xf32>
    %225 = vector.broadcast %11 : vector<1x128xf32> to vector<16x128xf32>
    %226 = arith.addf %224, %225 : vector<16x128xf32>
    %227 = arith.mulf %212, %226 : vector<16x128xf32>
    %228 = arith.addf %223, %227 : vector<16x128xf32>
    %229 = math.tanh %228 : vector<16x128xf32>
    %230 = arith.subf %195, %229 : vector<16x128xf32>
    %231 = arith.mulf %222, %230 : vector<16x128xf32>
    %232 = arith.addf %229, %231 : vector<16x128xf32>
    %233 = arith.index_cast %200 : i32 to index
    %c0_73 = arith.constant 0 : index
    %234 = vector.load %arg7[%233, %c0_73] : memref<128x128xf32, #tpu.memory_space<vmem>>, vector<16x128xf32>
    tpu.vector_store %arg7[%233, %c0_73], %232 {strides = array<i32>} : memref<128x128xf32, #tpu.memory_space<vmem>>, vector<16x128xf32>,
    %c6_i32 = arith.constant 6 : i32
    %cst_74 = arith.constant dense<0.000000e+00> : vector<16x384xf32>
    %235 = tpu.matmul %232, %10, %cst_74 {dimension_numbers = #tpu.dot_dimension_numbers<[1], [0], [0], [1], [0, 0, 1, 1], [], []>} : vector<16x128xf32>, vector<128x384xf32>, vector<16x384xf32> -> vector<16x384xf32>
    %c16_i32_75 = arith.constant 16 : i32
    %236 = arith.muli %c6_i32, %c16_i32_75 : i32
    %237 = tpu.assume_multiple %236, 16 : i32
    %238 = arith.index_cast %237 : i32 to index
    %c0_76 = arith.constant 0 : index
    %239 = vector.load %arg9[%238, %c0_76] : memref<128x384xf32, #tpu.memory_space<vmem>>, vector<16x384xf32>
    %240 = vector.extract_strided_slice %239 {offsets = [0, 0], sizes = [16, 128], strides = [1, 1]} : vector<16x384xf32> to vector<16x128xf32>
    %241 = vector.extract_strided_slice %235 {offsets = [0, 0], sizes = [16, 128], strides = [1, 1]} : vector<16x384xf32> to vector<16x128xf32>
    %242 = arith.addf %240, %241 : vector<16x128xf32>
    %cst_77 = arith.constant 0.000000e+00 : f32
    %243 = vector.broadcast %cst_77 : f32 to vector<16x128xf32>
    %244 = arith.subf %243, %242 : vector<16x128xf32>
    %245 = math.exp %244 : vector<16x128xf32>
    %cst_78 = arith.constant 1.000000e+00 : f32
    %246 = vector.broadcast %cst_78 : f32 to vector<16x128xf32>
    %247 = arith.addf %246, %245 : vector<16x128xf32>
    %cst_79 = arith.constant 1.000000e+00 : f32
    %248 = vector.broadcast %cst_79 : f32 to vector<16x128xf32>
    %249 = arith.divf %248, %247 : vector<16x128xf32>
    %250 = vector.extract_strided_slice %239 {offsets = [0, 128], sizes = [16, 128], strides = [1, 1]} : vector<16x384xf32> to vector<16x128xf32>
    %251 = vector.extract_strided_slice %235 {offsets = [0, 128], sizes = [16, 128], strides = [1, 1]} : vector<16x384xf32> to vector<16x128xf32>
    %252 = arith.addf %250, %251 : vector<16x128xf32>
    %cst_80 = arith.constant 0.000000e+00 : f32
    %253 = vector.broadcast %cst_80 : f32 to vector<16x128xf32>
    %254 = arith.subf %253, %252 : vector<16x128xf32>
    %255 = math.exp %254 : vector<16x128xf32>
    %cst_81 = arith.constant 1.000000e+00 : f32
    %256 = vector.broadcast %cst_81 : f32 to vector<16x128xf32>
    %257 = arith.addf %256, %255 : vector<16x128xf32>
    %cst_82 = arith.constant 1.000000e+00 : f32
    %258 = vector.broadcast %cst_82 : f32 to vector<16x128xf32>
    %259 = arith.divf %258, %257 : vector<16x128xf32>
    %260 = vector.extract_strided_slice %239 {offsets = [0, 256], sizes = [16, 128], strides = [1, 1]} : vector<16x384xf32> to vector<16x128xf32>
    %261 = vector.extract_strided_slice %235 {offsets = [0, 256], sizes = [16, 128], strides = [1, 1]} : vector<16x384xf32> to vector<16x128xf32>
    %262 = vector.broadcast %11 : vector<1x128xf32> to vector<16x128xf32>
    %263 = arith.addf %261, %262 : vector<16x128xf32>
    %264 = arith.mulf %249, %263 : vector<16x128xf32>
    %265 = arith.addf %260, %264 : vector<16x128xf32>
    %266 = math.tanh %265 : vector<16x128xf32>
    %267 = arith.subf %232, %266 : vector<16x128xf32>
    %268 = arith.mulf %259, %267 : vector<16x128xf32>
    %269 = arith.addf %266, %268 : vector<16x128xf32>
    %270 = arith.index_cast %237 : i32 to index
    %c0_83 = arith.constant 0 : index
    %271 = vector.load %arg7[%270, %c0_83] : memref<128x128xf32, #tpu.memory_space<vmem>>, vector<16x128xf32>
    tpu.vector_store %arg7[%270, %c0_83], %269 {strides = array<i32>} : memref<128x128xf32, #tpu.memory_space<vmem>>, vector<16x128xf32>,
    %c7_i32 = arith.constant 7 : i32
    %cst_84 = arith.constant dense<0.000000e+00> : vector<16x384xf32>
    %272 = tpu.matmul %269, %10, %cst_84 {dimension_numbers = #tpu.dot_dimension_numbers<[1], [0], [0], [1], [0, 0, 1, 1], [], []>} : vector<16x128xf32>, vector<128x384xf32>, vector<16x384xf32> -> vector<16x384xf32>
    %c16_i32_85 = arith.constant 16 : i32
    %273 = arith.muli %c7_i32, %c16_i32_85 : i32
    %274 = tpu.assume_multiple %273, 16 : i32
    %275 = arith.index_cast %274 : i32 to index
    %c0_86 = arith.constant 0 : index
    %276 = vector.load %arg9[%275, %c0_86] : memref<128x384xf32, #tpu.memory_space<vmem>>, vector<16x384xf32>
    %277 = vector.extract_strided_slice %276 {offsets = [0, 0], sizes = [16, 128], strides = [1, 1]} : vector<16x384xf32> to vector<16x128xf32>
    %278 = vector.extract_strided_slice %272 {offsets = [0, 0], sizes = [16, 128], strides = [1, 1]} : vector<16x384xf32> to vector<16x128xf32>
    %279 = arith.addf %277, %278 : vector<16x128xf32>
    %cst_87 = arith.constant 0.000000e+00 : f32
    %280 = vector.broadcast %cst_87 : f32 to vector<16x128xf32>
    %281 = arith.subf %280, %279 : vector<16x128xf32>
    %282 = math.exp %281 : vector<16x128xf32>
    %cst_88 = arith.constant 1.000000e+00 : f32
    %283 = vector.broadcast %cst_88 : f32 to vector<16x128xf32>
    %284 = arith.addf %283, %282 : vector<16x128xf32>
    %cst_89 = arith.constant 1.000000e+00 : f32
    %285 = vector.broadcast %cst_89 : f32 to vector<16x128xf32>
    %286 = arith.divf %285, %284 : vector<16x128xf32>
    %287 = vector.extract_strided_slice %276 {offsets = [0, 128], sizes = [16, 128], strides = [1, 1]} : vector<16x384xf32> to vector<16x128xf32>
    %288 = vector.extract_strided_slice %272 {offsets = [0, 128], sizes = [16, 128], strides = [1, 1]} : vector<16x384xf32> to vector<16x128xf32>
    %289 = arith.addf %287, %288 : vector<16x128xf32>
    %cst_90 = arith.constant 0.000000e+00 : f32
    %290 = vector.broadcast %cst_90 : f32 to vector<16x128xf32>
    %291 = arith.subf %290, %289 : vector<16x128xf32>
    %292 = math.exp %291 : vector<16x128xf32>
    %cst_91 = arith.constant 1.000000e+00 : f32
    %293 = vector.broadcast %cst_91 : f32 to vector<16x128xf32>
    %294 = arith.addf %293, %292 : vector<16x128xf32>
    %cst_92 = arith.constant 1.000000e+00 : f32
    %295 = vector.broadcast %cst_92 : f32 to vector<16x128xf32>
    %296 = arith.divf %295, %294 : vector<16x128xf32>
    %297 = vector.extract_strided_slice %276 {offsets = [0, 256], sizes = [16, 128], strides = [1, 1]} : vector<16x384xf32> to vector<16x128xf32>
    %298 = vector.extract_strided_slice %272 {offsets = [0, 256], sizes = [16, 128], strides = [1, 1]} : vector<16x384xf32> to vector<16x128xf32>
    %299 = vector.broadcast %11 : vector<1x128xf32> to vector<16x128xf32>
    %300 = arith.addf %298, %299 : vector<16x128xf32>
    %301 = arith.mulf %286, %300 : vector<16x128xf32>
    %302 = arith.addf %297, %301 : vector<16x128xf32>
    %303 = math.tanh %302 : vector<16x128xf32>
    %304 = arith.subf %269, %303 : vector<16x128xf32>
    %305 = arith.mulf %296, %304 : vector<16x128xf32>
    %306 = arith.addf %303, %305 : vector<16x128xf32>
    %307 = arith.index_cast %274 : i32 to index
    %c0_93 = arith.constant 0 : index
    %308 = vector.load %arg7[%307, %c0_93] : memref<128x128xf32, #tpu.memory_space<vmem>>, vector<16x128xf32>
    tpu.vector_store %arg7[%307, %c0_93], %306 {strides = array<i32>} : memref<128x128xf32, #tpu.memory_space<vmem>>, vector<16x128xf32>,
    %c8_i32 = arith.constant 8 : i32
    %c0_94 = arith.constant 0 : index
    %c0_95 = arith.constant 0 : index
    %309 = vector.load %arg8[%c0_94, %c0_95] : memref<16x128xf32, #tpu.memory_space<vmem>>, vector<16x128xf32>
    tpu.vector_store %arg8[%c0_94, %c0_95], %306 {strides = array<i32>} : memref<16x128xf32, #tpu.memory_space<vmem>>, vector<16x128xf32>,
    return
  }
  func.func @transform_0(%arg0: i32) -> (i32, i32) {
    %c0_i32 = arith.constant 0 : i32
    %c0_i32_0 = arith.constant 0 : i32
    return %arg0, %c0_i32 : i32, i32
  }
  func.func @transform_1(%arg0: i32) -> (i32, i32) {
    %c0_i32 = arith.constant 0 : i32
    %c0_i32_0 = arith.constant 0 : i32
    %c0_i32_1 = arith.constant 0 : i32
    return %c0_i32, %c0_i32_0 : i32, i32
  }
  func.func @transform_2(%arg0: i32) -> (i32, i32) {
    %c0_i32 = arith.constant 0 : i32
    %c0_i32_0 = arith.constant 0 : i32
    %c0_i32_1 = arith.constant 0 : i32
    return %c0_i32, %c0_i32_0 : i32, i32
  }
  func.func @transform_3(%arg0: i32) -> (i32, i32) {
    %c0_i32 = arith.constant 0 : i32
    %c0_i32_0 = arith.constant 0 : i32
    %c0_i32_1 = arith.constant 0 : i32
    return %c0_i32, %c0_i32_0 : i32, i32
  }
  func.func @transform_4(%arg0: i32) -> (i32, i32) {
    %c0_i32 = arith.constant 0 : i32
    %c0_i32_0 = arith.constant 0 : i32
    %c0_i32_1 = arith.constant 0 : i32
    return %c0_i32, %c0_i32_0 : i32, i32
  }
  func.func @transform_5(%arg0: i32) -> (i32, i32) {
    %c0_i32 = arith.constant 0 : i32
    %c0_i32_0 = arith.constant 0 : i32
    %c0_i32_1 = arith.constant 0 : i32
    return %c0_i32, %c0_i32_0 : i32, i32
  }
  func.func @transform_6(%arg0: i32) -> (i32, i32) {
    %c0_i32 = arith.constant 0 : i32
    %c0_i32_0 = arith.constant 0 : i32
    return %arg0, %c0_i32 : i32, i32
  }
  func.func @transform_7(%arg0: i32) -> (i32, i32) {
    %c0_i32 = arith.constant 0 : i32
    %c0_i32_0 = arith.constant 0 : i32
    %c0_i32_1 = arith.constant 0 : i32
    return %c0_i32, %c0_i32_0 : i32, i32
  }
}

</mosaic_0001>

<llo_original>
// kernel: new_rnn_cell_forward.3
$region0: #{new_rnn_cell_forward.3}
  #allocation0 [shape = 'u32[]', space=smem, size = 0x4, offset = 0x4, fixed_abs, tag = 'smem constant byte address 0x4 - core index']
  #allocation1 [shape = 'u32[144,128]{1,0:T(1,128)}', space=vmem, size = 0x12000, scoped, tag = 'internal scratch']
  %s0 = inlined_call_operand.vmem [shape: f32[128,128], index: 0, kind: input, shape index: {}]
  %s1 = inlined_call_operand.vmem [shape: f32[128,4], index: 1, kind: input, shape index: {}]
  %s2 = inlined_call_operand.vmem [shape: f32[128,4], index: 2, kind: input, shape index: {}]
  %s3 = inlined_call_operand.vmem [shape: f32[1,4], index: 3, kind: input, shape index: {}]
  %s4 = inlined_call_operand.vmem [shape: f32[1,4], index: 4, kind: input, shape index: {}]
  %s5 = inlined_call_operand.vmem [shape: f32[1,4], index: 5, kind: input, shape index: {}]
  %s6 = inlined_call_operand.vmem [shape: f32[4,16], index: 6, kind: input, shape index: {}]
  %s7 = inlined_call_operand.vmem [shape: f32[1,16], index: 7, kind: input, shape index: {}]
  %s8 = inlined_call_operand.vmem [shape: f32[16,4], index: 8, kind: input, shape index: {}]
  %s9 = inlined_call_operand.vmem [shape: f32[1,4], index: 9, kind: input, shape index: {}]
  %s10 = inlined_call_operand.vmem [shape: f32[1,4], index: 10, kind: input, shape index: {}]
  %s11 = inlined_call_operand.vmem [shape: f32[1,4], index: 11, kind: input, shape index: {}]
  %s12 = inlined_call_operand.vmem [shape: f32[128,4], index: 12, kind: output, shape index: {}]
  %s13 = sld [smem:[#allocation0]]
  $region58: #{new_rnn_cell_forward.3} parent=0
    _
  %s15 = ssub.s32 1, %s13
  %s16 = scalar_select 0, %s15, %s13
  // Predicated region
  $region2: #{new_rnn_cell_forward.3} parent=0 // pred_check
    _
  $region3: #{new_rnn_cell_forward.3} parent=0 // pred_check_branch
    %18 = sbr.rel (0) target = $region5
  $region4: #{new_rnn_cell_forward.3} parent=0 // pred_region
    _
  $region5: #{new_rnn_cell_forward.3} parent=0 // pred_fallthru
    _
  // Predicated region
  $region6: #{new_rnn_cell_forward.3} parent=0 // pred_check
    _
  $region7: #{new_rnn_cell_forward.3} parent=0 // pred_check_branch
    %20 = sbr.rel (0) target = $region9
  $region8: #{new_rnn_cell_forward.3} parent=0 // pred_region
    _
  $region9: #{new_rnn_cell_forward.3} parent=0 // pred_fallthru
    _
  // Predicated region
  $region10: #{new_rnn_cell_forward.3} parent=0 // pred_check
    _
  $region11: #{new_rnn_cell_forward.3} parent=0 // pred_check_branch
    %22 = sbr.rel (0) target = $region13
  $region12: #{new_rnn_cell_forward.3} parent=0 // pred_region
    _
  $region13: #{new_rnn_cell_forward.3} parent=0 // pred_fallthru
    _
  // Predicated region
  $region14: #{new_rnn_cell_forward.3} parent=0 // pred_check
    _
  $region15: #{new_rnn_cell_forward.3} parent=0 // pred_check_branch
    %24 = sbr.rel (0) target = $region17
  $region16: #{new_rnn_cell_forward.3} parent=0 // pred_region
    _
  $region17: #{new_rnn_cell_forward.3} parent=0 // pred_fallthru
    _
  // Predicated region
  $region18: #{new_rnn_cell_forward.3} parent=0 // pred_check
    _
  $region19: #{new_rnn_cell_forward.3} parent=0 // pred_check_branch
    %26 = sbr.rel (0) target = $region21
  $region20: #{new_rnn_cell_forward.3} parent=0 // pred_region
    _
  $region21: #{new_rnn_cell_forward.3} parent=0 // pred_fallthru
    _
  // Predicated region
  $region22: #{new_rnn_cell_forward.3} parent=0 // pred_check
    _
  $region23: #{new_rnn_cell_forward.3} parent=0 // pred_check_branch
    %28 = sbr.rel (0) target = $region25
  $region24: #{new_rnn_cell_forward.3} parent=0 // pred_region
    _
  $region25: #{new_rnn_cell_forward.3} parent=0 // pred_fallthru
    _
  // Predicated region
  $region26: #{new_rnn_cell_forward.3} parent=0 // pred_check
    _
  $region27: #{new_rnn_cell_forward.3} parent=0 // pred_check_branch
    %30 = sbr.rel (0) target = $region29
  $region28: #{new_rnn_cell_forward.3} parent=0 // pred_region
    _
  $region29: #{new_rnn_cell_forward.3} parent=0 // pred_fallthru
    _
  // Predicated region
  $region30: #{new_rnn_cell_forward.3} parent=0 // pred_check
    _
  $region31: #{new_rnn_cell_forward.3} parent=0 // pred_check_branch
    %32 = sbr.rel (0) target = $region33
  $region32: #{new_rnn_cell_forward.3} parent=0 // pred_region
    _
  $region33: #{new_rnn_cell_forward.3} parent=0 // pred_fallthru
    _
  // Predicated region
  $region34: #{new_rnn_cell_forward.3} parent=0 // pred_check
    _
  $region35: #{new_rnn_cell_forward.3} parent=0 // pred_check_branch
    %34 = sbr.rel (0) target = $region37
  $region36: #{new_rnn_cell_forward.3} parent=0 // pred_region
    _
  $region37: #{new_rnn_cell_forward.3} parent=0 // pred_fallthru
    _
  // Predicated region
  $region38: #{new_rnn_cell_forward.3} parent=0 // pred_check
    _
  $region39: #{new_rnn_cell_forward.3} parent=0 // pred_check_branch
    %36 = sbr.rel (0) target = $region41
  $region40: #{new_rnn_cell_forward.3} parent=0 // pred_region
    _
  $region41: #{new_rnn_cell_forward.3} parent=0 // pred_fallthru
    _
  // Predicated region
  $region42: #{new_rnn_cell_forward.3} parent=0 // pred_check
    _
  $region43: #{new_rnn_cell_forward.3} parent=0 // pred_check_branch
    %38 = sbr.rel (0) target = $region45
  $region44: #{new_rnn_cell_forward.3} parent=0 // pred_region
    _
  $region45: #{new_rnn_cell_forward.3} parent=0 // pred_fallthru
    _
  // Predicated region
  $region46: #{new_rnn_cell_forward.3} parent=0 // pred_check
    _
  $region47: #{new_rnn_cell_forward.3} parent=0 // pred_check_branch
    %40 = sbr.rel (0) target = $region49
  $region48: #{new_rnn_cell_forward.3} parent=0 // pred_region
    _
  $region49: #{new_rnn_cell_forward.3} parent=0 // pred_fallthru
    _
  %v41 = vld [vmem:[%s0] sm:$0xff]
  %v42 = vld [vmem:[%s0 + $0x8] sm:$0xff]
  %v43 = vld [vmem:[%s0 + $0x10] sm:$0xff]
  %v44 = vld [vmem:[%s0 + $0x18] sm:$0xff]
  %v45 = vld [vmem:[%s0 + $0x20] sm:$0xff]
  %v46 = vld [vmem:[%s0 + $0x28] sm:$0xff]
  %v47 = vld [vmem:[%s0 + $0x30] sm:$0xff]
  %v48 = vld [vmem:[%s0 + $0x38] sm:$0xff]
  %v49 = vld [vmem:[%s0 + $0x40] sm:$0xff]
  %v50 = vld [vmem:[%s0 + $0x48] sm:$0xff]
  %v51 = vld [vmem:[%s0 + $0x50] sm:$0xff]
  %v52 = vld [vmem:[%s0 + $0x58] sm:$0xff]
  %v53 = vld [vmem:[%s0 + $0x60] sm:$0xff]
  %v54 = vld [vmem:[%s0 + $0x68] sm:$0xff]
  %v55 = vld [vmem:[%s0 + $0x70] sm:$0xff]
  %v56 = vld [vmem:[%s0 + $0x78] sm:$0xff]
  %v57 = vld [vmem:[%s2] sm:$0xff]
  %v58 = vld [vmem:[%s2 + $0x8] sm:$0xff]
  %v59 = vld [vmem:[%s2 + $0x10] sm:$0xff]
  %v60 = vld [vmem:[%s2 + $0x18] sm:$0xff]
  %v61 = vld [vmem:[%s2 + $0x20] sm:$0xff]
  %v62 = vld [vmem:[%s2 + $0x28] sm:$0xff]
  %v63 = vld [vmem:[%s2 + $0x30] sm:$0xff]
  %v64 = vld [vmem:[%s2 + $0x38] sm:$0xff]
  %v65 = vld [vmem:[%s2 + $0x40] sm:$0xff]
  %v66 = vld [vmem:[%s2 + $0x48] sm:$0xff]
  %v67 = vld [vmem:[%s2 + $0x50] sm:$0xff]
  %v68 = vld [vmem:[%s2 + $0x58] sm:$0xff]
  %v69 = vld [vmem:[%s2 + $0x60] sm:$0xff]
  %v70 = vld [vmem:[%s2 + $0x68] sm:$0xff]
  %v71 = vld [vmem:[%s2 + $0x70] sm:$0xff]
  %v72 = vld [vmem:[%s2 + $0x78] sm:$0xff]
  %v73 = vld [vmem:[%s3] sm:$0x1]
  %v75 = vlaneseq
  %v76 = vshrl.u32 %v75, 7
  %v77 = vsub.s32 0, %v76
  %v78 = vrot.slane %v73, %v77
  %80 = vmatprep.subr.mxu0 0.0
  %81 = vmatpush1.msra.mxu0 %v57
  %82 = vmatprep.subr.mxu0 0.0
  %83 = vmatpush1.msra.mxu0 %v58
  %84 = vmatprep.subr.mxu0 0.0
  %85 = vmatpush1.msra.mxu0 %v59
  %86 = vmatprep.subr.mxu0 0.0
  %87 = vmatpush1.msra.mxu0 %v60
  %88 = vmatprep.subr.mxu0 0.0
  %89 = vmatpush1.msra.mxu0 %v61
  %90 = vmatprep.subr.mxu0 0.0
  %91 = vmatpush1.msra.mxu0 %v62
  %92 = vmatprep.subr.mxu0 0.0
  %93 = vmatpush1.msra.mxu0 %v63
  %94 = vmatprep.subr.mxu0 0.0
  %95 = vmatpush1.msra.mxu0 %v64
  %96 = vmatprep.subr.mxu0 0.0
  %97 = vmatpush1.msra.mxu0 %v65
  %98 = vmatprep.subr.mxu0 0.0
  %99 = vmatpush1.msra.mxu0 %v66
  %100 = vmatprep.subr.mxu0 0.0
  %101 = vmatpush1.msra.mxu0 %v67
  %102 = vmatprep.subr.mxu0 0.0
  %103 = vmatpush1.msra.mxu0 %v68
  %104 = vmatprep.subr.mxu0 0.0
  %105 = vmatpush1.msra.mxu0 %v69
  %106 = vmatprep.subr.mxu0 0.0
  %107 = vmatpush1.msra.mxu0 %v70
  %108 = vmatprep.subr.mxu0 0.0
  %109 = vmatpush1.msra.mxu0 %v71
  %110 = vmatprep.subr.mxu0 0.0
  %111 = vmatpush1.msra.mxu0 %v72
  %112 = vmatprep.subr.mxu0 0.0
  %113 = vmatpush1.msra.mxu0 0.0
  %114 = vmatprep.subr.mxu0 0.0
  %115 = vmatpush1.msra.mxu0 0.0
  %116 = vmatprep.subr.mxu0 0.0
  %117 = vmatpush1.msra.mxu0 0.0
  %118 = vmatprep.subr.mxu0 0.0
  %119 = vmatpush1.msra.mxu0 0.0
  %120 = vmatprep.subr.mxu0 0.0
  %121 = vmatpush1.msra.mxu0 0.0
  %122 = vmatprep.subr.mxu0 0.0
  %123 = vmatpush1.msra.mxu0 0.0
  %124 = vmatprep.subr.mxu0 0.0
  %125 = vmatpush1.msra.mxu0 0.0
  %126 = vmatprep.subr.mxu0 0.0
  %127 = vmatpush1.msra.mxu0 0.0
  %128 = vmatprep.subr.mxu0 0.0
  %129 = vmatpush1.msra.mxu0 0.0
  %130 = vmatprep.subr.mxu0 0.0
  %131 = vmatpush1.msra.mxu0 0.0
  %132 = vmatprep.subr.mxu0 0.0
  %133 = vmatpush1.msra.mxu0 0.0
  %134 = vmatprep.subr.mxu0 0.0
  %135 = vmatpush1.msra.mxu0 0.0
  %136 = vmatprep.subr.mxu0 0.0
  %137 = vmatpush1.msra.mxu0 0.0
  %138 = vmatprep.subr.mxu0 0.0
  %139 = vmatpush1.msra.mxu0 0.0
  %140 = vmatprep.subr.mxu0 0.0
  %141 = vmatpush1.msra.mxu0 0.0
  %142 = vmatprep.subr.mxu0 0.0
  %143 = vmatpush1.msra.mxu0 0.0
  %144 = vmatprep.mubr.f32.mxu0 0.0
  %145 = vmatmul.mubr.f32.gmra.mrb[0].mxu0 %v41
  %v146 = vpop.f32.mrb[0].mxu0
  %v147 = vadd.f32 %v78, %v146
  %v148 = vpop.f32.mrb[0].mxu0
  %149 = vmatprep.mubr.f32.mxu0 0.0
  %150 = vmatmul.mubr.f32.gmra.mrb[0].mxu0 %v42
  %v151 = vpop.f32.mrb[0].mxu0
  %v152 = vadd.f32 %v78, %v151
  %v153 = vpop.f32.mrb[0].mxu0
  %154 = vmatprep.mubr.f32.mxu0 0.0
  %155 = vmatmul.mubr.f32.gmra.mrb[0].mxu0 %v43
  %v156 = vpop.f32.mrb[0].mxu0
  %v157 = vadd.f32 %v78, %v156
  %v158 = vpop.f32.mrb[0].mxu0
  %159 = vmatprep.mubr.f32.mxu0 0.0
  %160 = vmatmul.mubr.f32.gmra.mrb[0].mxu0 %v44
  %v161 = vpop.f32.mrb[0].mxu0
  %v162 = vadd.f32 %v78, %v161
  %v163 = vpop.f32.mrb[0].mxu0
  %164 = vmatprep.mubr.f32.mxu0 0.0
  %165 = vmatmul.mubr.f32.gmra.mrb[0].mxu0 %v45
  %v166 = vpop.f32.mrb[0].mxu0
  %v167 = vadd.f32 %v78, %v166
  %v168 = vpop.f32.mrb[0].mxu0
  %169 = vmatprep.mubr.f32.mxu0 0.0
  %170 = vmatmul.mubr.f32.gmra.mrb[0].mxu0 %v46
  %v171 = vpop.f32.mrb[0].mxu0
  %v172 = vadd.f32 %v78, %v171
  %v173 = vpop.f32.mrb[0].mxu0
  %174 = vmatprep.mubr.f32.mxu0 0.0
  %175 = vmatmul.mubr.f32.gmra.mrb[0].mxu0 %v47
  %v176 = vpop.f32.mrb[0].mxu0
  %v177 = vadd.f32 %v78, %v176
  %v178 = vpop.f32.mrb[0].mxu0
  %179 = vmatprep.mubr.f32.mxu0 0.0
  %180 = vmatmul.mubr.f32.gmra.mrb[0].mxu0 %v48
  %v181 = vpop.f32.mrb[0].mxu0
  %v182 = vadd.f32 %v78, %v181
  %v183 = vpop.f32.mrb[0].mxu0
  %184 = vmatprep.mubr.f32.mxu0 0.0
  %185 = vmatmul.mubr.f32.gmra.mrb[0].mxu0 %v49
  %v186 = vpop.f32.mrb[0].mxu0
  %v187 = vadd.f32 %v78, %v186
  %v188 = vpop.f32.mrb[0].mxu0
  %189 = vmatprep.mubr.f32.mxu0 0.0
  %190 = vmatmul.mubr.f32.gmra.mrb[0].mxu0 %v50
  %v191 = vpop.f32.mrb[0].mxu0
  %v192 = vadd.f32 %v78, %v191
  %v193 = vpop.f32.mrb[0].mxu0
  %194 = vmatprep.mubr.f32.mxu0 0.0
  %195 = vmatmul.mubr.f32.gmra.mrb[0].mxu0 %v51
  %v196 = vpop.f32.mrb[0].mxu0
  %v197 = vadd.f32 %v78, %v196
  %v198 = vpop.f32.mrb[0].mxu0
  %199 = vmatprep.mubr.f32.mxu0 0.0
  %200 = vmatmul.mubr.f32.gmra.mrb[0].mxu0 %v52
  %v201 = vpop.f32.mrb[0].mxu0
  %v202 = vadd.f32 %v78, %v201
  %v203 = vpop.f32.mrb[0].mxu0
  %204 = vmatprep.mubr.f32.mxu0 0.0
  %205 = vmatmul.mubr.f32.gmra.mrb[0].mxu0 %v53
  %v206 = vpop.f32.mrb[0].mxu0
  %v207 = vadd.f32 %v78, %v206
  %v208 = vpop.f32.mrb[0].mxu0
  %209 = vmatprep.mubr.f32.mxu0 0.0
  %210 = vmatmul.mubr.f32.gmra.mrb[0].mxu0 %v54
  %v211 = vpop.f32.mrb[0].mxu0
  %v212 = vadd.f32 %v78, %v211
  %v213 = vpop.f32.mrb[0].mxu0
  %214 = vmatprep.mubr.f32.mxu0 0.0
  %215 = vmatmul.mubr.f32.gmra.mrb[0].mxu0 %v55
  %v216 = vpop.f32.mrb[0].mxu0
  %v217 = vadd.f32 %v78, %v216
  %v218 = vpop.f32.mrb[0].mxu0
  %219 = vmatprep.mubr.f32.mxu0 0.0
  %220 = vmatmul.mubr.f32.gmra.mrb[0].mxu0 %v56
  %v221 = vpop.f32.mrb[0].mxu0
  %v222 = vadd.f32 %v78, %v221
  %v223 = vpop.f32.mrb[0].mxu0
  %224 = vdwg.mxu0
  %v225 = vld [vmem:[%s1] sm:$0xff]
  %v226 = vld [vmem:[%s1 + $0x8] sm:$0xff]
  %v227 = vld [vmem:[%s1 + $0x10] sm:$0xff]
  %v228 = vld [vmem:[%s1 + $0x18] sm:$0xff]
  %v229 = vld [vmem:[%s1 + $0x20] sm:$0xff]
  %v230 = vld [vmem:[%s1 + $0x28] sm:$0xff]
  %v231 = vld [vmem:[%s1 + $0x30] sm:$0xff]
  %v232 = vld [vmem:[%s1 + $0x38] sm:$0xff]
  %v233 = vld [vmem:[%s1 + $0x40] sm:$0xff]
  %v234 = vld [vmem:[%s1 + $0x48] sm:$0xff]
  %v235 = vld [vmem:[%s1 + $0x50] sm:$0xff]
  %v236 = vld [vmem:[%s1 + $0x58] sm:$0xff]
  %v237 = vld [vmem:[%s1 + $0x60] sm:$0xff]
  %v238 = vld [vmem:[%s1 + $0x68] sm:$0xff]
  %v239 = vld [vmem:[%s1 + $0x70] sm:$0xff]
  %v240 = vld [vmem:[%s1 + $0x78] sm:$0xff]
  %v241 = vadd.f32 %v147, %v225
  %v242 = vadd.f32 %v152, %v226
  %v243 = vadd.f32 %v157, %v227
  %v244 = vadd.f32 %v162, %v228
  %v245 = vadd.f32 %v167, %v229
  %v246 = vadd.f32 %v172, %v230
  %v247 = vadd.f32 %v177, %v231
  %v248 = vadd.f32 %v182, %v232
  %v249 = vadd.f32 %v187, %v233
  %v250 = vadd.f32 %v192, %v234
  %v251 = vadd.f32 %v197, %v235
  %v252 = vadd.f32 %v202, %v236
  %v253 = vadd.f32 %v207, %v237
  %v254 = vadd.f32 %v212, %v238
  %v255 = vadd.f32 %v217, %v239
  %v256 = vadd.f32 %v222, %v240
  %v257 = vld [vmem:[%s4] sm:$0x1]
  %v258 = vld [vmem:[%s5] sm:$0x1]
  %vm259 = vcmask 31744
  %v260 = vsel %vm259, %v241, 0.0
  %261 = vadd.xlane.f32.xlu0 %v260
  %v262 = vpop.xlane.xlu0 %261
  %v263 = vsel %vm259, %v242, 0.0
  %264 = vadd.xlane.f32.xlu0 %v263
  %v265 = vpop.xlane.xlu0 %264
  %v266 = vsel %vm259, %v243, 0.0
  %267 = vadd.xlane.f32.xlu0 %v266
  %v268 = vpop.xlane.xlu0 %267
  %v269 = vsel %vm259, %v244, 0.0
  %270 = vadd.xlane.f32.xlu0 %v269
  %v271 = vpop.xlane.xlu0 %270
  %v272 = vsel %vm259, %v245, 0.0
  %273 = vadd.xlane.f32.xlu0 %v272
  %v274 = vpop.xlane.xlu0 %273
  %v275 = vsel %vm259, %v246, 0.0
  %276 = vadd.xlane.f32.xlu0 %v275
  %v277 = vpop.xlane.xlu0 %276
  %v278 = vsel %vm259, %v247, 0.0
  %279 = vadd.xlane.f32.xlu0 %v278
  %v280 = vpop.xlane.xlu0 %279
  %v281 = vsel %vm259, %v248, 0.0
  %282 = vadd.xlane.f32.xlu0 %v281
  %v283 = vpop.xlane.xlu0 %282
  %v284 = vsel %vm259, %v249, 0.0
  %285 = vadd.xlane.f32.xlu0 %v284
  %v286 = vpop.xlane.xlu0 %285
  %v287 = vsel %vm259, %v250, 0.0
  %288 = vadd.xlane.f32.xlu0 %v287
  %v289 = vpop.xlane.xlu0 %288
  %v290 = vsel %vm259, %v251, 0.0
  %291 = vadd.xlane.f32.xlu0 %v290
  %v292 = vpop.xlane.xlu0 %291
  %v293 = vsel %vm259, %v252, 0.0
  %294 = vadd.xlane.f32.xlu0 %v293
  %v295 = vpop.xlane.xlu0 %294
  %v296 = vsel %vm259, %v253, 0.0
  %297 = vadd.xlane.f32.xlu0 %v296
  %v298 = vpop.xlane.xlu0 %297
  %v299 = vsel %vm259, %v254, 0.0
  %300 = vadd.xlane.f32.xlu0 %v299
  %v301 = vpop.xlane.xlu0 %300
  %v302 = vsel %vm259, %v255, 0.0
  %303 = vadd.xlane.f32.xlu0 %v302
  %v304 = vpop.xlane.xlu0 %303
  %v305 = vsel %vm259, %v256, 0.0
  %306 = vadd.xlane.f32.xlu0 %v305
  %v307 = vpop.xlane.xlu0 %306
  %v308 = vrcp.pop 4.0
  %v309 = vmul.f32 %v262, %v308
  %v310 = vmul.f32 %v265, %v308
  %v311 = vmul.f32 %v268, %v308
  %v312 = vmul.f32 %v271, %v308
  %v313 = vmul.f32 %v274, %v308
  %v314 = vmul.f32 %v277, %v308
  %v315 = vmul.f32 %v280, %v308
  %v316 = vmul.f32 %v283, %v308
  %v317 = vmul.f32 %v286, %v308
  %v318 = vmul.f32 %v289, %v308
  %v319 = vmul.f32 %v292, %v308
  %v320 = vmul.f32 %v295, %v308
  %v321 = vmul.f32 %v298, %v308
  %v322 = vmul.f32 %v301, %v308
  %v323 = vmul.f32 %v304, %v308
  %v324 = vmul.f32 %v307, %v308
  %v325 = vsub.f32 %v241, %v309
  %v326 = vsub.f32 %v242, %v310
  %v327 = vsub.f32 %v243, %v311
  %v328 = vsub.f32 %v244, %v312
  %v329 = vsub.f32 %v245, %v313
  %v330 = vsub.f32 %v246, %v314
  %v331 = vsub.f32 %v247, %v315
  %v332 = vsub.f32 %v248, %v316
  %v333 = vsub.f32 %v249, %v317
  %v334 = vsub.f32 %v250, %v318
  %v335 = vsub.f32 %v251, %v319
  %v336 = vsub.f32 %v252, %v320
  %v337 = vsub.f32 %v253, %v321
  %v338 = vsub.f32 %v254, %v322
  %v339 = vsub.f32 %v255, %v323
  %v340 = vsub.f32 %v256, %v324
  %v341 = vmul.f32 %v325, %v325
  %v342 = vmul.f32 %v326, %v326
  %v343 = vmul.f32 %v327, %v327
  %v344 = vmul.f32 %v328, %v328
  %v345 = vmul.f32 %v329, %v329
  %v346 = vmul.f32 %v330, %v330
  %v347 = vmul.f32 %v331, %v331
  %v348 = vmul.f32 %v332, %v332
  %v349 = vmul.f32 %v333, %v333
  %v350 = vmul.f32 %v334, %v334
  %v351 = vmul.f32 %v335, %v335
  %v352 = vmul.f32 %v336, %v336
  %v353 = vmul.f32 %v337, %v337
  %v354 = vmul.f32 %v338, %v338
  %v355 = vmul.f32 %v339, %v339
  %v356 = vmul.f32 %v340, %v340
  %v357 = vsel %vm259, %v341, 0.0
  %358 = vadd.xlane.f32.xlu0 %v357
  %v359 = vpop.xlane.xlu0 %358
  %v360 = vsel %vm259, %v342, 0.0
  %361 = vadd.xlane.f32.xlu0 %v360
  %v362 = vpop.xlane.xlu0 %361
  %v363 = vsel %vm259, %v343, 0.0
  %364 = vadd.xlane.f32.xlu0 %v363
  %v365 = vpop.xlane.xlu0 %364
  %v366 = vsel %vm259, %v344, 0.0
  %367 = vadd.xlane.f32.xlu0 %v366
  %v368 = vpop.xlane.xlu0 %367
  %v369 = vsel %vm259, %v345, 0.0
  %370 = vadd.xlane.f32.xlu0 %v369
  %v371 = vpop.xlane.xlu0 %370
  %v372 = vsel %vm259, %v346, 0.0
  %373 = vadd.xlane.f32.xlu0 %v372
  %v374 = vpop.xlane.xlu0 %373
  %v375 = vsel %vm259, %v347, 0.0
  %376 = vadd.xlane.f32.xlu0 %v375
  %v377 = vpop.xlane.xlu0 %376
  %v378 = vsel %vm259, %v348, 0.0
  %379 = vadd.xlane.f32.xlu0 %v378
  %v380 = vpop.xlane.xlu0 %379
  %v381 = vsel %vm259, %v349, 0.0
  %382 = vadd.xlane.f32.xlu0 %v381
  %v383 = vpop.xlane.xlu0 %382
  %v384 = vsel %vm259, %v350, 0.0
  %385 = vadd.xlane.f32.xlu0 %v384
  %v386 = vpop.xlane.xlu0 %385
  %v387 = vsel %vm259, %v351, 0.0
  %388 = vadd.xlane.f32.xlu0 %v387
  %v389 = vpop.xlane.xlu0 %388
  %v390 = vsel %vm259, %v352, 0.0
  %391 = vadd.xlane.f32.xlu0 %v390
  %v392 = vpop.xlane.xlu0 %391
  %v393 = vsel %vm259, %v353, 0.0
  %394 = vadd.xlane.f32.xlu0 %v393
  %v395 = vpop.xlane.xlu0 %394
  %v396 = vsel %vm259, %v354, 0.0
  %397 = vadd.xlane.f32.xlu0 %v396
  %v398 = vpop.xlane.xlu0 %397
  %v399 = vsel %vm259, %v355, 0.0
  %400 = vadd.xlane.f32.xlu0 %v399
  %v401 = vpop.xlane.xlu0 %400
  %v402 = vsel %vm259, %v356, 0.0
  %403 = vadd.xlane.f32.xlu0 %v402
  %v404 = vpop.xlane.xlu0 %403
  %v405 = vmul.f32 %v359, %v308
  %v406 = vmul.f32 %v362, %v308
  %v407 = vmul.f32 %v365, %v308
  %v408 = vmul.f32 %v368, %v308
  %v409 = vmul.f32 %v371, %v308
  %v410 = vmul.f32 %v374, %v308
  %v411 = vmul.f32 %v377, %v308
  %v412 = vmul.f32 %v380, %v308
  %v413 = vmul.f32 %v383, %v308
  %v414 = vmul.f32 %v386, %v308
  %v415 = vmul.f32 %v389, %v308
  %v416 = vmul.f32 %v392, %v308
  %v417 = vmul.f32 %v395, %v308
  %v418 = vmul.f32 %v398, %v308
  %v419 = vmul.f32 %v401, %v308
  %v420 = vmul.f32 %v404, %v308
  %v421 = vadd.f32 %v405, 1e-05
  %v422 = vadd.f32 %v406, 1e-05
  %v423 = vadd.f32 %v407, 1e-05
  %v424 = vadd.f32 %v408, 1e-05
  %v425 = vadd.f32 %v409, 1e-05
  %v426 = vadd.f32 %v410, 1e-05
  %v427 = vadd.f32 %v411, 1e-05
  %v428 = vadd.f32 %v412, 1e-05
  %v429 = vadd.f32 %v413, 1e-05
  %v430 = vadd.f32 %v414, 1e-05
  %v431 = vadd.f32 %v415, 1e-05
  %v432 = vadd.f32 %v416, 1e-05
  %v433 = vadd.f32 %v417, 1e-05
  %v434 = vadd.f32 %v418, 1e-05
  %v435 = vadd.f32 %v419, 1e-05
  %v436 = vadd.f32 %v420, 1e-05
  %v437 = vrsqrt.pop %v421
  %v438 = vrsqrt.pop %v422
  %v439 = vrsqrt.pop %v423
  %v440 = vrsqrt.pop %v424
  %v441 = vrsqrt.pop %v425
  %v442 = vrsqrt.pop %v426
  %v443 = vrsqrt.pop %v427
  %v444 = vrsqrt.pop %v428
  %v445 = vrsqrt.pop %v429
  %v446 = vrsqrt.pop %v430
  %v447 = vrsqrt.pop %v431
  %v448 = vrsqrt.pop %v432
  %v449 = vrsqrt.pop %v433
  %v450 = vrsqrt.pop %v434
  %v451 = vrsqrt.pop %v435
  %v452 = vrsqrt.pop %v436
  %v453 = vmul.f32 %v325, %v437
  %v454 = vmul.f32 %v326, %v438
  %v455 = vmul.f32 %v327, %v439
  %v456 = vmul.f32 %v328, %v440
  %v457 = vmul.f32 %v329, %v441
  %v458 = vmul.f32 %v330, %v442
  %v459 = vmul.f32 %v331, %v443
  %v460 = vmul.f32 %v332, %v444
  %v461 = vmul.f32 %v333, %v445
  %v462 = vmul.f32 %v334, %v446
  %v463 = vmul.f32 %v335, %v447
  %v464 = vmul.f32 %v336, %v448
  %v465 = vmul.f32 %v337, %v449
  %v466 = vmul.f32 %v338, %v450
  %v467 = vmul.f32 %v339, %v451
  %v468 = vmul.f32 %v340, %v452
  %v470 = vlaneseq
  %v471 = vshrl.u32 %v470, 7
  %v472 = vsub.s32 0, %v471
  %v473 = vrot.slane %v257, %v472
  %v475 = vmul.f32 %v453, %v473
  %v476 = vmul.f32 %v454, %v473
  %v477 = vmul.f32 %v455, %v473
  %v478 = vmul.f32 %v456, %v473
  %v479 = vmul.f32 %v457, %v473
  %v480 = vmul.f32 %v458, %v473
  %v481 = vmul.f32 %v459, %v473
  %v482 = vmul.f32 %v460, %v473
  %v483 = vmul.f32 %v461, %v473
  %v484 = vmul.f32 %v462, %v473
  %v485 = vmul.f32 %v463, %v473
  %v486 = vmul.f32 %v464, %v473
  %v487 = vmul.f32 %v465, %v473
  %v488 = vmul.f32 %v466, %v473
  %v489 = vmul.f32 %v467, %v473
  %v490 = vmul.f32 %v468, %v473
  %v492 = vlaneseq
  %v493 = vshrl.u32 %v492, 7
  %v494 = vsub.s32 0, %v493
  %v495 = vrot.slane %v258, %v494
  %v497 = vadd.f32 %v475, %v495
  %v498 = vadd.f32 %v476, %v495
  %v499 = vadd.f32 %v477, %v495
  %v500 = vadd.f32 %v478, %v495
  %v501 = vadd.f32 %v479, %v495
  %v502 = vadd.f32 %v480, %v495
  %v503 = vadd.f32 %v481, %v495
  %v504 = vadd.f32 %v482, %v495
  %v505 = vadd.f32 %v483, %v495
  %v506 = vadd.f32 %v484, %v495
  %v507 = vadd.f32 %v485, %v495
  %v508 = vadd.f32 %v486, %v495
  %v509 = vadd.f32 %v487, %v495
  %v510 = vadd.f32 %v488, %v495
  %v511 = vadd.f32 %v489, %v495
  %v512 = vadd.f32 %v490, %v495
  %v513 = vld [vmem:[%s6] sm:$0xf]
  %v514 = vld [vmem:[%s7] sm:$0x1]
  %v516 = vlaneseq
  %v517 = vshrl.u32 %v516, 7
  %v518 = vsub.s32 0, %v517
  %v519 = vrot.slane %v514, %v518
  %v522 = vsel %vm259, %v497, 0
  %v525 = vsel %vm259, %v498, 0
  %v528 = vsel %vm259, %v499, 0
  %v531 = vsel %vm259, %v500, 0
  %v534 = vsel %vm259, %v501, 0
  %v537 = vsel %vm259, %v502, 0
  %v540 = vsel %vm259, %v503, 0
  %v543 = vsel %vm259, %v504, 0
  %v546 = vsel %vm259, %v505, 0
  %v549 = vsel %vm259, %v506, 0
  %v552 = vsel %vm259, %v507, 0
  %v555 = vsel %vm259, %v508, 0
  %v558 = vsel %vm259, %v509, 0
  %v561 = vsel %vm259, %v510, 0
  %v564 = vsel %vm259, %v511, 0
  %v567 = vsel %vm259, %v512, 0
  %vm569 = vcmask 1043456
  %v571 = vsel %vm569, %v513, 0
  %573 = vmatprep.subr.mxu0 0.0
  %574 = vmatpush1.msra.mxu0 %v571
  %575 = vmatprep.subr.mxu0 0.0
  %576 = vmatpush1.msra.mxu0 0.0
  %577 = vmatprep.subr.mxu0 0.0
  %578 = vmatpush1.msra.mxu0 0.0
  %579 = vmatprep.subr.mxu0 0.0
  %580 = vmatpush1.msra.mxu0 0.0
  %581 = vmatprep.subr.mxu0 0.0
  %582 = vmatpush1.msra.mxu0 0.0
  %583 = vmatprep.subr.mxu0 0.0
  %584 = vmatpush1.msra.mxu0 0.0
  %585 = vmatprep.subr.mxu0 0.0
  %586 = vmatpush1.msra.mxu0 0.0
  %587 = vmatprep.subr.mxu0 0.0
  %588 = vmatpush1.msra.mxu0 0.0
  %589 = vmatprep.subr.mxu0 0.0
  %590 = vmatpush1.msra.mxu0 0.0
  %591 = vmatprep.subr.mxu0 0.0
  %592 = vmatpush1.msra.mxu0 0.0
  %593 = vmatprep.subr.mxu0 0.0
  %594 = vmatpush1.msra.mxu0 0.0
  %595 = vmatprep.subr.mxu0 0.0
  %596 = vmatpush1.msra.mxu0 0.0
  %597 = vmatprep.subr.mxu0 0.0
  %598 = vmatpush1.msra.mxu0 0.0
  %599 = vmatprep.subr.mxu0 0.0
  %600 = vmatpush1.msra.mxu0 0.0
  %601 = vmatprep.subr.mxu0 0.0
  %602 = vmatpush1.msra.mxu0 0.0
  %603 = vmatprep.subr.mxu0 0.0
  %604 = vmatpush1.msra.mxu0 0.0
  %605 = vmatprep.subr.mxu0 0.0
  %606 = vmatpush1.msra.mxu0 0.0
  %607 = vmatprep.subr.mxu0 0.0
  %608 = vmatpush1.msra.mxu0 0.0
  %609 = vmatprep.subr.mxu0 0.0
  %610 = vmatpush1.msra.mxu0 0.0
  %611 = vmatprep.subr.mxu0 0.0
  %612 = vmatpush1.msra.mxu0 0.0
  %613 = vmatprep.subr.mxu0 0.0
  %614 = vmatpush1.msra.mxu0 0.0
  %615 = vmatprep.subr.mxu0 0.0
  %616 = vmatpush1.msra.mxu0 0.0
  %617 = vmatprep.subr.mxu0 0.0
  %618 = vmatpush1.msra.mxu0 0.0
  %619 = vmatprep.subr.mxu0 0.0
  %620 = vmatpush1.msra.mxu0 0.0
  %621 = vmatprep.subr.mxu0 0.0
  %622 = vmatpush1.msra.mxu0 0.0
  %623 = vmatprep.subr.mxu0 0.0
  %624 = vmatpush1.msra.mxu0 0.0
  %625 = vmatprep.subr.mxu0 0.0
  %626 = vmatpush1.msra.mxu0 0.0
  %627 = vmatprep.subr.mxu0 0.0
  %628 = vmatpush1.msra.mxu0 0.0
  %629 = vmatprep.subr.mxu0 0.0
  %630 = vmatpush1.msra.mxu0 0.0
  %631 = vmatprep.subr.mxu0 0.0
  %632 = vmatpush1.msra.mxu0 0.0
  %633 = vmatprep.subr.mxu0 0.0
  %634 = vmatpush1.msra.mxu0 0.0
  %635 = vmatprep.subr.mxu0 0.0
  %636 = vmatpush1.msra.mxu0 0.0
  %637 = vmatprep.mubr.f32.mxu0 0.0
  %638 = vmatmul.mubr.f32.gmra.mrb[0].mxu0 %v522
  %v639 = vpop.f32.mrb[0].mxu0
  %v640 = vadd.f32 %v519, %v639
  %v641 = vpop.f32.mrb[0].mxu0
  %642 = vmatprep.mubr.f32.mxu0 0.0
  %643 = vmatmul.mubr.f32.gmra.mrb[0].mxu0 %v525
  %v644 = vpop.f32.mrb[0].mxu0
  %v645 = vadd.f32 %v519, %v644
  %v646 = vpop.f32.mrb[0].mxu0
  %647 = vmatprep.mubr.f32.mxu0 0.0
  %648 = vmatmul.mubr.f32.gmra.mrb[0].mxu0 %v528
  %v649 = vpop.f32.mrb[0].mxu0
  %v650 = vadd.f32 %v519, %v649
  %v651 = vpop.f32.mrb[0].mxu0
  %652 = vmatprep.mubr.f32.mxu0 0.0
  %653 = vmatmul.mubr.f32.gmra.mrb[0].mxu0 %v531
  %v654 = vpop.f32.mrb[0].mxu0
  %v655 = vadd.f32 %v519, %v654
  %v656 = vpop.f32.mrb[0].mxu0
  %657 = vmatprep.mubr.f32.mxu0 0.0
  %658 = vmatmul.mubr.f32.gmra.mrb[0].mxu0 %v534
  %v659 = vpop.f32.mrb[0].mxu0
  %v660 = vadd.f32 %v519, %v659
  %v661 = vpop.f32.mrb[0].mxu0
  %662 = vmatprep.mubr.f32.mxu0 0.0
  %663 = vmatmul.mubr.f32.gmra.mrb[0].mxu0 %v537
  %v664 = vpop.f32.mrb[0].mxu0
  %v665 = vadd.f32 %v519, %v664
  %v666 = vpop.f32.mrb[0].mxu0
  %667 = vmatprep.mubr.f32.mxu0 0.0
  %668 = vmatmul.mubr.f32.gmra.mrb[0].mxu0 %v540
  %v669 = vpop.f32.mrb[0].mxu0
  %v670 = vadd.f32 %v519, %v669
  %v671 = vpop.f32.mrb[0].mxu0
  %672 = vmatprep.mubr.f32.mxu0 0.0
  %673 = vmatmul.mubr.f32.gmra.mrb[0].mxu0 %v543
  %v674 = vpop.f32.mrb[0].mxu0
  %v675 = vadd.f32 %v519, %v674
  %v676 = vpop.f32.mrb[0].mxu0
  %677 = vmatprep.mubr.f32.mxu0 0.0
  %678 = vmatmul.mubr.f32.gmra.mrb[0].mxu0 %v546
  %v679 = vpop.f32.mrb[0].mxu0
  %v680 = vadd.f32 %v519, %v679
  %v681 = vpop.f32.mrb[0].mxu0
  %682 = vmatprep.mubr.f32.mxu0 0.0
  %683 = vmatmul.mubr.f32.gmra.mrb[0].mxu0 %v549
  %v684 = vpop.f32.mrb[0].mxu0
  %v685 = vadd.f32 %v519, %v684
  %v686 = vpop.f32.mrb[0].mxu0
  %687 = vmatprep.mubr.f32.mxu0 0.0
  %688 = vmatmul.mubr.f32.gmra.mrb[0].mxu0 %v552
  %v689 = vpop.f32.mrb[0].mxu0
  %v690 = vadd.f32 %v519, %v689
  %v691 = vpop.f32.mrb[0].mxu0
  %692 = vmatprep.mubr.f32.mxu0 0.0
  %693 = vmatmul.mubr.f32.gmra.mrb[0].mxu0 %v555
  %v694 = vpop.f32.mrb[0].mxu0
  %v695 = vadd.f32 %v519, %v694
  %v696 = vpop.f32.mrb[0].mxu0
  %697 = vmatprep.mubr.f32.mxu0 0.0
  %698 = vmatmul.mubr.f32.gmra.mrb[0].mxu0 %v558
  %v699 = vpop.f32.mrb[0].mxu0
  %v700 = vadd.f32 %v519, %v699
  %v701 = vpop.f32.mrb[0].mxu0
  %702 = vmatprep.mubr.f32.mxu0 0.0
  %703 = vmatmul.mubr.f32.gmra.mrb[0].mxu0 %v561
  %v704 = vpop.f32.mrb[0].mxu0
  %v705 = vadd.f32 %v519, %v704
  %v706 = vpop.f32.mrb[0].mxu0
  %707 = vmatprep.mubr.f32.mxu0 0.0
  %708 = vmatmul.mubr.f32.gmra.mrb[0].mxu0 %v564
  %v709 = vpop.f32.mrb[0].mxu0
  %v710 = vadd.f32 %v519, %v709
  %v711 = vpop.f32.mrb[0].mxu0
  %712 = vmatprep.mubr.f32.mxu0 0.0
  %713 = vmatmul.mubr.f32.gmra.mrb[0].mxu0 %v567
  %v714 = vpop.f32.mrb[0].mxu0
  %v715 = vadd.f32 %v519, %v714
  %v716 = vpop.f32.mrb[0].mxu0
  %717 = vdwg.mxu0
  %v718 = vmul.f32 %v640, 0.5
  %v719 = vmul.f32 %v645, 0.5
  %v720 = vmul.f32 %v650, 0.5
  %v721 = vmul.f32 %v655, 0.5
  %v722 = vmul.f32 %v660, 0.5
  %v723 = vmul.f32 %v665, 0.5
  %v724 = vmul.f32 %v670, 0.5
  %v725 = vmul.f32 %v675, 0.5
  %v726 = vmul.f32 %v680, 0.5
  %v727 = vmul.f32 %v685, 0.5
  %v728 = vmul.f32 %v690, 0.5
  %v729 = vmul.f32 %v695, 0.5
  %v730 = vmul.f32 %v700, 0.5
  %v731 = vmul.f32 %v705, 0.5
  %v732 = vmul.f32 %v710, 0.5
  %v733 = vmul.f32 %v715, 0.5
  %v734 = vmul.f32 %v640, 0.70710677
  %v735 = vmul.f32 %v645, 0.70710677
  %v736 = vmul.f32 %v650, 0.70710677
  %v737 = vmul.f32 %v655, 0.70710677
  %v738 = vmul.f32 %v660, 0.70710677
  %v739 = vmul.f32 %v665, 0.70710677
  %v740 = vmul.f32 %v670, 0.70710677
  %v741 = vmul.f32 %v675, 0.70710677
  %v742 = vmul.f32 %v680, 0.70710677
  %v743 = vmul.f32 %v685, 0.70710677
  %v744 = vmul.f32 %v690, 0.70710677
  %v745 = vmul.f32 %v695, 0.70710677
  %v746 = vmul.f32 %v700, 0.70710677
  %v747 = vmul.f32 %v705, 0.70710677
  %v748 = vmul.f32 %v710, 0.70710677
  %v749 = vmul.f32 %v715, 0.70710677
  %v750 = vand.u32 2147483647, %v734
  %v751 = vand.u32 2147483647, %v735
  %v752 = vand.u32 2147483647, %v736
  %v753 = vand.u32 2147483647, %v737
  %v754 = vand.u32 2147483647, %v738
  %v755 = vand.u32 2147483647, %v739
  %v756 = vand.u32 2147483647, %v740
  %v757 = vand.u32 2147483647, %v741
  %v758 = vand.u32 2147483647, %v742
  %v759 = vand.u32 2147483647, %v743
  %v760 = vand.u32 2147483647, %v744
  %v761 = vand.u32 2147483647, %v745
  %v762 = vand.u32 2147483647, %v746
  %v763 = vand.u32 2147483647, %v747
  %v764 = vand.u32 2147483647, %v748
  %v765 = vand.u32 2147483647, %v749
  %v766 = vmul.f32 %v750, 0.3275911
  %v767 = vmul.f32 %v751, 0.3275911
  %v768 = vmul.f32 %v752, 0.3275911
  %v769 = vmul.f32 %v753, 0.3275911
  %v770 = vmul.f32 %v754, 0.3275911
  %v771 = vmul.f32 %v755, 0.3275911
  %v772 = vmul.f32 %v756, 0.3275911
  %v773 = vmul.f32 %v757, 0.3275911
  %v774 = vmul.f32 %v758, 0.3275911
  %v775 = vmul.f32 %v759, 0.3275911
  %v776 = vmul.f32 %v760, 0.3275911
  %v777 = vmul.f32 %v761, 0.3275911
  %v778 = vmul.f32 %v762, 0.3275911
  %v779 = vmul.f32 %v763, 0.3275911
  %v780 = vmul.f32 %v764, 0.3275911
  %v781 = vmul.f32 %v765, 0.3275911
  %v782 = vadd.f32 %v766, 1.0
  %v783 = vadd.f32 %v767, 1.0
  %v784 = vadd.f32 %v768, 1.0
  %v785 = vadd.f32 %v769, 1.0
  %v786 = vadd.f32 %v770, 1.0
  %v787 = vadd.f32 %v771, 1.0
  %v788 = vadd.f32 %v772, 1.0
  %v789 = vadd.f32 %v773, 1.0
  %v790 = vadd.f32 %v774, 1.0
  %v791 = vadd.f32 %v775, 1.0
  %v792 = vadd.f32 %v776, 1.0
  %v793 = vadd.f32 %v777, 1.0
  %v794 = vadd.f32 %v778, 1.0
  %v795 = vadd.f32 %v779, 1.0
  %v796 = vadd.f32 %v780, 1.0
  %v797 = vadd.f32 %v781, 1.0
  %v798 = vrcp.pop %v782
  %v799 = vmul.f32 1.0, %v798
  %v800 = vrcp.pop %v783
  %v801 = vmul.f32 1.0, %v800
  %v802 = vrcp.pop %v784
  %v803 = vmul.f32 1.0, %v802
  %v804 = vrcp.pop %v785
  %v805 = vmul.f32 1.0, %v804
  %v806 = vrcp.pop %v786
  %v807 = vmul.f32 1.0, %v806
  %v808 = vrcp.pop %v787
  %v809 = vmul.f32 1.0, %v808
  %v810 = vrcp.pop %v788
  %v811 = vmul.f32 1.0, %v810
  %v812 = vrcp.pop %v789
  %v813 = vmul.f32 1.0, %v812
  %v814 = vrcp.pop %v790
  %v815 = vmul.f32 1.0, %v814
  %v816 = vrcp.pop %v791
  %v817 = vmul.f32 1.0, %v816
  %v818 = vrcp.pop %v792
  %v819 = vmul.f32 1.0, %v818
  %v820 = vrcp.pop %v793
  %v821 = vmul.f32 1.0, %v820
  %v822 = vrcp.pop %v794
  %v823 = vmul.f32 1.0, %v822
  %v824 = vrcp.pop %v795
  %v825 = vmul.f32 1.0, %v824
  %v826 = vrcp.pop %v796
  %v827 = vmul.f32 1.0, %v826
  %v828 = vrcp.pop %v797
  %v829 = vmul.f32 1.0, %v828
  %v830 = vmul.f32 %v799, 1.0614054
  %v831 = vmul.f32 %v801, 1.0614054
  %v832 = vmul.f32 %v803, 1.0614054
  %v833 = vmul.f32 %v805, 1.0614054
  %v834 = vmul.f32 %v807, 1.0614054
  %v835 = vmul.f32 %v809, 1.0614054
  %v836 = vmul.f32 %v811, 1.0614054
  %v837 = vmul.f32 %v813, 1.0614054
  %v838 = vmul.f32 %v815, 1.0614054
  %v839 = vmul.f32 %v817, 1.0614054
  %v840 = vmul.f32 %v819, 1.0614054
  %v841 = vmul.f32 %v821, 1.0614054
  %v842 = vmul.f32 %v823, 1.0614054
  %v843 = vmul.f32 %v825, 1.0614054
  %v844 = vmul.f32 %v827, 1.0614054
  %v845 = vmul.f32 %v829, 1.0614054
  %v846 = vadd.f32 %v830, -1.4531521
  %v847 = vadd.f32 %v831, -1.4531521
  %v848 = vadd.f32 %v832, -1.4531521
  %v849 = vadd.f32 %v833, -1.4531521
  %v850 = vadd.f32 %v834, -1.4531521
  %v851 = vadd.f32 %v835, -1.4531521
  %v852 = vadd.f32 %v836, -1.4531521
  %v853 = vadd.f32 %v837, -1.4531521
  %v854 = vadd.f32 %v838, -1.4531521
  %v855 = vadd.f32 %v839, -1.4531521
  %v856 = vadd.f32 %v840, -1.4531521
  %v857 = vadd.f32 %v841, -1.4531521
  %v858 = vadd.f32 %v842, -1.4531521
  %v859 = vadd.f32 %v843, -1.4531521
  %v860 = vadd.f32 %v844, -1.4531521
  %v861 = vadd.f32 %v845, -1.4531521
  %v862 = vmul.f32 %v846, %v799
  %v863 = vmul.f32 %v847, %v801
  %v864 = vmul.f32 %v848, %v803
  %v865 = vmul.f32 %v849, %v805
  %v866 = vmul.f32 %v850, %v807
  %v867 = vmul.f32 %v851, %v809
  %v868 = vmul.f32 %v852, %v811
  %v869 = vmul.f32 %v853, %v813
  %v870 = vmul.f32 %v854, %v815
  %v871 = vmul.f32 %v855, %v817
  %v872 = vmul.f32 %v856, %v819
  %v873 = vmul.f32 %v857, %v821
  %v874 = vmul.f32 %v858, %v823
  %v875 = vmul.f32 %v859, %v825
  %v876 = vmul.f32 %v860, %v827
  %v877 = vmul.f32 %v861, %v829
  %v878 = vadd.f32 %v862, 1.4214138
  %v879 = vadd.f32 %v863, 1.4214138
  %v880 = vadd.f32 %v864, 1.4214138
  %v881 = vadd.f32 %v865, 1.4214138
  %v882 = vadd.f32 %v866, 1.4214138
  %v883 = vadd.f32 %v867, 1.4214138
  %v884 = vadd.f32 %v868, 1.4214138
  %v885 = vadd.f32 %v869, 1.4214138
  %v886 = vadd.f32 %v870, 1.4214138
  %v887 = vadd.f32 %v871, 1.4214138
  %v888 = vadd.f32 %v872, 1.4214138
  %v889 = vadd.f32 %v873, 1.4214138
  %v890 = vadd.f32 %v874, 1.4214138
  %v891 = vadd.f32 %v875, 1.4214138
  %v892 = vadd.f32 %v876, 1.4214138
  %v893 = vadd.f32 %v877, 1.4214138
  %v894 = vmul.f32 %v878, %v799
  %v895 = vmul.f32 %v879, %v801
  %v896 = vmul.f32 %v880, %v803
  %v897 = vmul.f32 %v881, %v805
  %v898 = vmul.f32 %v882, %v807
  %v899 = vmul.f32 %v883, %v809
  %v900 = vmul.f32 %v884, %v811
  %v901 = vmul.f32 %v885, %v813
  %v902 = vmul.f32 %v886, %v815
  %v903 = vmul.f32 %v887, %v817
  %v904 = vmul.f32 %v888, %v819
  %v905 = vmul.f32 %v889, %v821
  %v906 = vmul.f32 %v890, %v823
  %v907 = vmul.f32 %v891, %v825
  %v908 = vmul.f32 %v892, %v827
  %v909 = vmul.f32 %v893, %v829
  %v910 = vadd.f32 %v894, -0.28449672
  %v911 = vadd.f32 %v895, -0.28449672
  %v912 = vadd.f32 %v896, -0.28449672
  %v913 = vadd.f32 %v897, -0.28449672
  %v914 = vadd.f32 %v898, -0.28449672
  %v915 = vadd.f32 %v899, -0.28449672
  %v916 = vadd.f32 %v900, -0.28449672
  %v917 = vadd.f32 %v901, -0.28449672
  %v918 = vadd.f32 %v902, -0.28449672
  %v919 = vadd.f32 %v903, -0.28449672
  %v920 = vadd.f32 %v904, -0.28449672
  %v921 = vadd.f32 %v905, -0.28449672
  %v922 = vadd.f32 %v906, -0.28449672
  %v923 = vadd.f32 %v907, -0.28449672
  %v924 = vadd.f32 %v908, -0.28449672
  %v925 = vadd.f32 %v909, -0.28449672
  %v926 = vmul.f32 %v910, %v799
  %v927 = vmul.f32 %v911, %v801
  %v928 = vmul.f32 %v912, %v803
  %v929 = vmul.f32 %v913, %v805
  %v930 = vmul.f32 %v914, %v807
  %v931 = vmul.f32 %v915, %v809
  %v932 = vmul.f32 %v916, %v811
  %v933 = vmul.f32 %v917, %v813
  %v934 = vmul.f32 %v918, %v815
  %v935 = vmul.f32 %v919, %v817
  %v936 = vmul.f32 %v920, %v819
  %v937 = vmul.f32 %v921, %v821
  %v938 = vmul.f32 %v922, %v823
  %v939 = vmul.f32 %v923, %v825
  %v940 = vmul.f32 %v924, %v827
  %v941 = vmul.f32 %v925, %v829
  %v942 = vadd.f32 %v926, 0.2548296
  %v943 = vadd.f32 %v927, 0.2548296
  %v944 = vadd.f32 %v928, 0.2548296
  %v945 = vadd.f32 %v929, 0.2548296
  %v946 = vadd.f32 %v930, 0.2548296
  %v947 = vadd.f32 %v931, 0.2548296
  %v948 = vadd.f32 %v932, 0.2548296
  %v949 = vadd.f32 %v933, 0.2548296
  %v950 = vadd.f32 %v934, 0.2548296
  %v951 = vadd.f32 %v935, 0.2548296
  %v952 = vadd.f32 %v936, 0.2548296
  %v953 = vadd.f32 %v937, 0.2548296
  %v954 = vadd.f32 %v938, 0.2548296
  %v955 = vadd.f32 %v939, 0.2548296
  %v956 = vadd.f32 %v940, 0.2548296
  %v957 = vadd.f32 %v941, 0.2548296
  %v958 = vmul.f32 %v942, %v799
  %v959 = vmul.f32 %v943, %v801
  %v960 = vmul.f32 %v944, %v803
  %v961 = vmul.f32 %v945, %v805
  %v962 = vmul.f32 %v946, %v807
  %v963 = vmul.f32 %v947, %v809
  %v964 = vmul.f32 %v948, %v811
  %v965 = vmul.f32 %v949, %v813
  %v966 = vmul.f32 %v950, %v815
  %v967 = vmul.f32 %v951, %v817
  %v968 = vmul.f32 %v952, %v819
  %v969 = vmul.f32 %v953, %v821
  %v970 = vmul.f32 %v954, %v823
  %v971 = vmul.f32 %v955, %v825
  %v972 = vmul.f32 %v956, %v827
  %v973 = vmul.f32 %v957, %v829
  %v974 = vsub.f32 0.0, %v750
  %v975 = vsub.f32 0.0, %v751
  %v976 = vsub.f32 0.0, %v752
  %v977 = vsub.f32 0.0, %v753
  %v978 = vsub.f32 0.0, %v754
  %v979 = vsub.f32 0.0, %v755
  %v980 = vsub.f32 0.0, %v756
  %v981 = vsub.f32 0.0, %v757
  %v982 = vsub.f32 0.0, %v758
  %v983 = vsub.f32 0.0, %v759
  %v984 = vsub.f32 0.0, %v760
  %v985 = vsub.f32 0.0, %v761
  %v986 = vsub.f32 0.0, %v762
  %v987 = vsub.f32 0.0, %v763
  %v988 = vsub.f32 0.0, %v764
  %v989 = vsub.f32 0.0, %v765
  %v990 = vmul.f32 %v974, %v750
  %v991 = vmul.f32 %v975, %v751
  %v992 = vmul.f32 %v976, %v752
  %v993 = vmul.f32 %v977, %v753
  %v994 = vmul.f32 %v978, %v754
  %v995 = vmul.f32 %v979, %v755
  %v996 = vmul.f32 %v980, %v756
  %v997 = vmul.f32 %v981, %v757
  %v998 = vmul.f32 %v982, %v758
  %v999 = vmul.f32 %v983, %v759
  %v1000 = vmul.f32 %v984, %v760
  %v1001 = vmul.f32 %v985, %v761
  %v1002 = vmul.f32 %v986, %v762
  %v1003 = vmul.f32 %v987, %v763
  %v1004 = vmul.f32 %v988, %v764
  %v1005 = vmul.f32 %v989, %v765
  %v1006 = vmul.f32 %v990, 1.442695
  %v1007 = vpow.pop %v1006
  %v1008 = vmul.f32 %v991, 1.442695
  %v1009 = vpow.pop %v1008
  %v1010 = vmul.f32 %v992, 1.442695
  %v1011 = vpow.pop %v1010
  %v1012 = vmul.f32 %v993, 1.442695
  %v1013 = vpow.pop %v1012
  %v1014 = vmul.f32 %v994, 1.442695
  %v1015 = vpow.pop %v1014
  %v1016 = vmul.f32 %v995, 1.442695
  %v1017 = vpow.pop %v1016
  %v1018 = vmul.f32 %v996, 1.442695
  %v1019 = vpow.pop %v1018
  %v1020 = vmul.f32 %v997, 1.442695
  %v1021 = vpow.pop %v1020
  %v1022 = vmul.f32 %v998, 1.442695
  %v1023 = vpow.pop %v1022
  %v1024 = vmul.f32 %v999, 1.442695
  %v1025 = vpow.pop %v1024
  %v1026 = vmul.f32 %v1000, 1.442695
  %v1027 = vpow.pop %v1026
  %v1028 = vmul.f32 %v1001, 1.442695
  %v1029 = vpow.pop %v1028
  %v1030 = vmul.f32 %v1002, 1.442695
  %v1031 = vpow.pop %v1030
  %v1032 = vmul.f32 %v1003, 1.442695
  %v1033 = vpow.pop %v1032
  %v1034 = vmul.f32 %v1004, 1.442695
  %v1035 = vpow.pop %v1034
  %v1036 = vmul.f32 %v1005, 1.442695
  %v1037 = vpow.pop %v1036
  %v1038 = vmul.f32 %v958, %v1007
  %v1039 = vmul.f32 %v959, %v1009
  %v1040 = vmul.f32 %v960, %v1011
  %v1041 = vmul.f32 %v961, %v1013
  %v1042 = vmul.f32 %v962, %v1015
  %v1043 = vmul.f32 %v963, %v1017
  %v1044 = vmul.f32 %v964, %v1019
  %v1045 = vmul.f32 %v965, %v1021
  %v1046 = vmul.f32 %v966, %v1023
  %v1047 = vmul.f32 %v967, %v1025
  %v1048 = vmul.f32 %v968, %v1027
  %v1049 = vmul.f32 %v969, %v1029
  %v1050 = vmul.f32 %v970, %v1031
  %v1051 = vmul.f32 %v971, %v1033
  %v1052 = vmul.f32 %v972, %v1035
  %v1053 = vmul.f32 %v973, %v1037
  %v1054 = vsub.f32 1.0, %v1038
  %v1055 = vsub.f32 1.0, %v1039
  %v1056 = vsub.f32 1.0, %v1040
  %v1057 = vsub.f32 1.0, %v1041
  %v1058 = vsub.f32 1.0, %v1042
  %v1059 = vsub.f32 1.0, %v1043
  %v1060 = vsub.f32 1.0, %v1044
  %v1061 = vsub.f32 1.0, %v1045
  %v1062 = vsub.f32 1.0, %v1046
  %v1063 = vsub.f32 1.0, %v1047
  %v1064 = vsub.f32 1.0, %v1048
  %v1065 = vsub.f32 1.0, %v1049
  %v1066 = vsub.f32 1.0, %v1050
  %v1067 = vsub.f32 1.0, %v1051
  %v1068 = vsub.f32 1.0, %v1052
  %v1069 = vsub.f32 1.0, %v1053
  %vm1070 = vcmp.ge.f32.partialorder %v734, 0.0
  %vm1071 = vcmp.ge.f32.partialorder %v735, 0.0
  %vm1072 = vcmp.ge.f32.partialorder %v736, 0.0
  %vm1073 = vcmp.ge.f32.partialorder %v737, 0.0
  %vm1074 = vcmp.ge.f32.partialorder %v738, 0.0
  %vm1075 = vcmp.ge.f32.partialorder %v739, 0.0
  %vm1076 = vcmp.ge.f32.partialorder %v740, 0.0
  %vm1077 = vcmp.ge.f32.partialorder %v741, 0.0
  %vm1078 = vcmp.ge.f32.partialorder %v742, 0.0
  %vm1079 = vcmp.ge.f32.partialorder %v743, 0.0
  %vm1080 = vcmp.ge.f32.partialorder %v744, 0.0
  %vm1081 = vcmp.ge.f32.partialorder %v745, 0.0
  %vm1082 = vcmp.ge.f32.partialorder %v746, 0.0
  %vm1083 = vcmp.ge.f32.partialorder %v747, 0.0
  %vm1084 = vcmp.ge.f32.partialorder %v748, 0.0
  %vm1085 = vcmp.ge.f32.partialorder %v749, 0.0
  %v1086 = vsub.f32 0.0, %v1054
  %v1087 = vsub.f32 0.0, %v1055
  %v1088 = vsub.f32 0.0, %v1056
  %v1089 = vsub.f32 0.0, %v1057
  %v1090 = vsub.f32 0.0, %v1058
  %v1091 = vsub.f32 0.0, %v1059
  %v1092 = vsub.f32 0.0, %v1060
  %v1093 = vsub.f32 0.0, %v1061
  %v1094 = vsub.f32 0.0, %v1062
  %v1095 = vsub.f32 0.0, %v1063
  %v1096 = vsub.f32 0.0, %v1064
  %v1097 = vsub.f32 0.0, %v1065
  %v1098 = vsub.f32 0.0, %v1066
  %v1099 = vsub.f32 0.0, %v1067
  %v1100 = vsub.f32 0.0, %v1068
  %v1101 = vsub.f32 0.0, %v1069
  %v1102 = vsel %vm1070, %v1054, %v1086
  %v1103 = vsel %vm1071, %v1055, %v1087
  %v1104 = vsel %vm1072, %v1056, %v1088
  %v1105 = vsel %vm1073, %v1057, %v1089
  %v1106 = vsel %vm1074, %v1058, %v1090
  %v1107 = vsel %vm1075, %v1059, %v1091
  %v1108 = vsel %vm1076, %v1060, %v1092
  %v1109 = vsel %vm1077, %v1061, %v1093
  %v1110 = vsel %vm1078, %v1062, %v1094
  %v1111 = vsel %vm1079, %v1063, %v1095
  %v1112 = vsel %vm1080, %v1064, %v1096
  %v1113 = vsel %vm1081, %v1065, %v1097
  %v1114 = vsel %vm1082, %v1066, %v1098
  %v1115 = vsel %vm1083, %v1067, %v1099
  %v1116 = vsel %vm1084, %v1068, %v1100
  %v1117 = vsel %vm1085, %v1069, %v1101
  %v1118 = vadd.f32 %v1102, 1.0
  %v1119 = vadd.f32 %v1103, 1.0
  %v1120 = vadd.f32 %v1104, 1.0
  %v1121 = vadd.f32 %v1105, 1.0
  %v1122 = vadd.f32 %v1106, 1.0
  %v1123 = vadd.f32 %v1107, 1.0
  %v1124 = vadd.f32 %v1108, 1.0
  %v1125 = vadd.f32 %v1109, 1.0
  %v1126 = vadd.f32 %v1110, 1.0
  %v1127 = vadd.f32 %v1111, 1.0
  %v1128 = vadd.f32 %v1112, 1.0
  %v1129 = vadd.f32 %v1113, 1.0
  %v1130 = vadd.f32 %v1114, 1.0
  %v1131 = vadd.f32 %v1115, 1.0
  %v1132 = vadd.f32 %v1116, 1.0
  %v1133 = vadd.f32 %v1117, 1.0
  %v1134 = vmul.f32 %v718, %v1118
  %v1135 = vmul.f32 %v719, %v1119
  %v1136 = vmul.f32 %v720, %v1120
  %v1137 = vmul.f32 %v721, %v1121
  %v1138 = vmul.f32 %v722, %v1122
  %v1139 = vmul.f32 %v723, %v1123
  %v1140 = vmul.f32 %v724, %v1124
  %v1141 = vmul.f32 %v725, %v1125
  %v1142 = vmul.f32 %v726, %v1126
  %v1143 = vmul.f32 %v727, %v1127
  %v1144 = vmul.f32 %v728, %v1128
  %v1145 = vmul.f32 %v729, %v1129
  %v1146 = vmul.f32 %v730, %v1130
  %v1147 = vmul.f32 %v731, %v1131
  %v1148 = vmul.f32 %v732, %v1132
  %v1149 = vmul.f32 %v733, %v1133
  %v1150 = vld [vmem:[%s8] sm:$0xff]
  %v1151 = vld [vmem:[%s8 + $0x8] sm:$0xff]
  %v1152 = vld [vmem:[%s9] sm:$0x1]
  %v1154 = vlaneseq
  %v1155 = vshrl.u32 %v1154, 7
  %v1156 = vsub.s32 0, %v1155
  %v1157 = vrot.slane %v1152, %v1156
  %vm1159 = vcmask 130048
  %v1161 = vsel %vm1159, %v1134, 0
  %v1164 = vsel %vm1159, %v1135, 0
  %v1167 = vsel %vm1159, %v1136, 0
  %v1170 = vsel %vm1159, %v1137, 0
  %v1173 = vsel %vm1159, %v1138, 0
  %v1176 = vsel %vm1159, %v1139, 0
  %v1179 = vsel %vm1159, %v1140, 0
  %v1182 = vsel %vm1159, %v1141, 0
  %v1185 = vsel %vm1159, %v1142, 0
  %v1188 = vsel %vm1159, %v1143, 0
  %v1191 = vsel %vm1159, %v1144, 0
  %v1194 = vsel %vm1159, %v1145, 0
  %v1197 = vsel %vm1159, %v1146, 0
  %v1200 = vsel %vm1159, %v1147, 0
  %v1203 = vsel %vm1159, %v1148, 0
  %v1206 = vsel %vm1159, %v1149, 0
  %1208 = vmatprep.subr.mxu0 0.0
  %1209 = vmatpush1.msra.mxu0 %v1150
  %1210 = vmatprep.subr.mxu0 0.0
  %1211 = vmatpush1.msra.mxu0 %v1151
  %1212 = vmatprep.subr.mxu0 0.0
  %1213 = vmatpush1.msra.mxu0 0.0
  %1214 = vmatprep.subr.mxu0 0.0
  %1215 = vmatpush1.msra.mxu0 0.0
  %1216 = vmatprep.subr.mxu0 0.0
  %1217 = vmatpush1.msra.mxu0 0.0
  %1218 = vmatprep.subr.mxu0 0.0
  %1219 = vmatpush1.msra.mxu0 0.0
  %1220 = vmatprep.subr.mxu0 0.0
  %1221 = vmatpush1.msra.mxu0 0.0
  %1222 = vmatprep.subr.mxu0 0.0
  %1223 = vmatpush1.msra.mxu0 0.0
  %1224 = vmatprep.subr.mxu0 0.0
  %1225 = vmatpush1.msra.mxu0 0.0
  %1226 = vmatprep.subr.mxu0 0.0
  %1227 = vmatpush1.msra.mxu0 0.0
  %1228 = vmatprep.subr.mxu0 0.0
  %1229 = vmatpush1.msra.mxu0 0.0
  %1230 = vmatprep.subr.mxu0 0.0
  %1231 = vmatpush1.msra.mxu0 0.0
  %1232 = vmatprep.subr.mxu0 0.0
  %1233 = vmatpush1.msra.mxu0 0.0
  %1234 = vmatprep.subr.mxu0 0.0
  %1235 = vmatpush1.msra.mxu0 0.0
  %1236 = vmatprep.subr.mxu0 0.0
  %1237 = vmatpush1.msra.mxu0 0.0
  %1238 = vmatprep.subr.mxu0 0.0
  %1239 = vmatpush1.msra.mxu0 0.0
  %1240 = vmatprep.subr.mxu0 0.0
  %1241 = vmatpush1.msra.mxu0 0.0
  %1242 = vmatprep.subr.mxu0 0.0
  %1243 = vmatpush1.msra.mxu0 0.0
  %1244 = vmatprep.subr.mxu0 0.0
  %1245 = vmatpush1.msra.mxu0 0.0
  %1246 = vmatprep.subr.mxu0 0.0
  %1247 = vmatpush1.msra.mxu0 0.0
  %1248 = vmatprep.subr.mxu0 0.0
  %1249 = vmatpush1.msra.mxu0 0.0
  %1250 = vmatprep.subr.mxu0 0.0
  %1251 = vmatpush1.msra.mxu0 0.0
  %1252 = vmatprep.subr.mxu0 0.0
  %1253 = vmatpush1.msra.mxu0 0.0
  %1254 = vmatprep.subr.mxu0 0.0
  %1255 = vmatpush1.msra.mxu0 0.0
  %1256 = vmatprep.subr.mxu0 0.0
  %1257 = vmatpush1.msra.mxu0 0.0
  %1258 = vmatprep.subr.mxu0 0.0
  %1259 = vmatpush1.msra.mxu0 0.0
  %1260 = vmatprep.subr.mxu0 0.0
  %1261 = vmatpush1.msra.mxu0 0.0
  %1262 = vmatprep.subr.mxu0 0.0
  %1263 = vmatpush1.msra.mxu0 0.0
  %1264 = vmatprep.subr.mxu0 0.0
  %1265 = vmatpush1.msra.mxu0 0.0
  %1266 = vmatprep.subr.mxu0 0.0
  %1267 = vmatpush1.msra.mxu0 0.0
  %1268 = vmatprep.subr.mxu0 0.0
  %1269 = vmatpush1.msra.mxu0 0.0
  %1270 = vmatprep.subr.mxu0 0.0
  %1271 = vmatpush1.msra.mxu0 0.0
  %1272 = vmatprep.mubr.f32.mxu0 0.0
  %1273 = vmatmul.mubr.f32.gmra.mrb[0].mxu0 %v1161
  %v1274 = vpop.f32.mrb[0].mxu0
  %v1275 = vadd.f32 %v1157, %v1274
  %v1276 = vpop.f32.mrb[0].mxu0
  %1277 = vmatprep.mubr.f32.mxu0 0.0
  %1278 = vmatmul.mubr.f32.gmra.mrb[0].mxu0 %v1164
  %v1279 = vpop.f32.mrb[0].mxu0
  %v1280 = vadd.f32 %v1157, %v1279
  %v1281 = vpop.f32.mrb[0].mxu0
  %1282 = vmatprep.mubr.f32.mxu0 0.0
  %1283 = vmatmul.mubr.f32.gmra.mrb[0].mxu0 %v1167
  %v1284 = vpop.f32.mrb[0].mxu0
  %v1285 = vadd.f32 %v1157, %v1284
  %v1286 = vpop.f32.mrb[0].mxu0
  %1287 = vmatprep.mubr.f32.mxu0 0.0
  %1288 = vmatmul.mubr.f32.gmra.mrb[0].mxu0 %v1170
  %v1289 = vpop.f32.mrb[0].mxu0
  %v1290 = vadd.f32 %v1157, %v1289
  %v1291 = vpop.f32.mrb[0].mxu0
  %1292 = vmatprep.mubr.f32.mxu0 0.0
  %1293 = vmatmul.mubr.f32.gmra.mrb[0].mxu0 %v1173
  %v1294 = vpop.f32.mrb[0].mxu0
  %v1295 = vadd.f32 %v1157, %v1294
  %v1296 = vpop.f32.mrb[0].mxu0
  %1297 = vmatprep.mubr.f32.mxu0 0.0
  %1298 = vmatmul.mubr.f32.gmra.mrb[0].mxu0 %v1176
  %v1299 = vpop.f32.mrb[0].mxu0
  %v1300 = vadd.f32 %v1157, %v1299
  %v1301 = vpop.f32.mrb[0].mxu0
  %1302 = vmatprep.mubr.f32.mxu0 0.0
  %1303 = vmatmul.mubr.f32.gmra.mrb[0].mxu0 %v1179
  %v1304 = vpop.f32.mrb[0].mxu0
  %v1305 = vadd.f32 %v1157, %v1304
  %v1306 = vpop.f32.mrb[0].mxu0
  %1307 = vmatprep.mubr.f32.mxu0 0.0
  %1308 = vmatmul.mubr.f32.gmra.mrb[0].mxu0 %v1182
  %v1309 = vpop.f32.mrb[0].mxu0
  %v1310 = vadd.f32 %v1157, %v1309
  %v1311 = vpop.f32.mrb[0].mxu0
  %1312 = vmatprep.mubr.f32.mxu0 0.0
  %1313 = vmatmul.mubr.f32.gmra.mrb[0].mxu0 %v1185
  %v1314 = vpop.f32.mrb[0].mxu0
  %v1315 = vadd.f32 %v1157, %v1314
  %v1316 = vpop.f32.mrb[0].mxu0
  %1317 = vmatprep.mubr.f32.mxu0 0.0
  %1318 = vmatmul.mubr.f32.gmra.mrb[0].mxu0 %v1188
  %v1319 = vpop.f32.mrb[0].mxu0
  %v1320 = vadd.f32 %v1157, %v1319
  %v1321 = vpop.f32.mrb[0].mxu0
  %1322 = vmatprep.mubr.f32.mxu0 0.0
  %1323 = vmatmul.mubr.f32.gmra.mrb[0].mxu0 %v1191
  %v1324 = vpop.f32.mrb[0].mxu0
  %v1325 = vadd.f32 %v1157, %v1324
  %v1326 = vpop.f32.mrb[0].mxu0
  %1327 = vmatprep.mubr.f32.mxu0 0.0
  %1328 = vmatmul.mubr.f32.gmra.mrb[0].mxu0 %v1194
  %v1329 = vpop.f32.mrb[0].mxu0
  %v1330 = vadd.f32 %v1157, %v1329
  %v1331 = vpop.f32.mrb[0].mxu0
  %1332 = vmatprep.mubr.f32.mxu0 0.0
  %1333 = vmatmul.mubr.f32.gmra.mrb[0].mxu0 %v1197
  %v1334 = vpop.f32.mrb[0].mxu0
  %v1335 = vadd.f32 %v1157, %v1334
  %v1336 = vpop.f32.mrb[0].mxu0
  %1337 = vmatprep.mubr.f32.mxu0 0.0
  %1338 = vmatmul.mubr.f32.gmra.mrb[0].mxu0 %v1200
  %v1339 = vpop.f32.mrb[0].mxu0
  %v1340 = vadd.f32 %v1157, %v1339
  %v1341 = vpop.f32.mrb[0].mxu0
  %1342 = vmatprep.mubr.f32.mxu0 0.0
  %1343 = vmatmul.mubr.f32.gmra.mrb[0].mxu0 %v1203
  %v1344 = vpop.f32.mrb[0].mxu0
  %v1345 = vadd.f32 %v1157, %v1344
  %v1346 = vpop.f32.mrb[0].mxu0
  %1347 = vmatprep.mubr.f32.mxu0 0.0
  %1348 = vmatmul.mubr.f32.gmra.mrb[0].mxu0 %v1206
  %v1349 = vpop.f32.mrb[0].mxu0
  %v1350 = vadd.f32 %v1157, %v1349
  %v1351 = vpop.f32.mrb[0].mxu0
  %1352 = vdwg.mxu0
  %v1353 = vadd.f32 %v1275, %v497
  %v1354 = vadd.f32 %v1280, %v498
  %v1355 = vadd.f32 %v1285, %v499
  %v1356 = vadd.f32 %v1290, %v500
  %v1357 = vadd.f32 %v1295, %v501
  %v1358 = vadd.f32 %v1300, %v502
  %v1359 = vadd.f32 %v1305, %v503
  %v1360 = vadd.f32 %v1310, %v504
  %v1361 = vadd.f32 %v1315, %v505
  %v1362 = vadd.f32 %v1320, %v506
  %v1363 = vadd.f32 %v1325, %v507
  %v1364 = vadd.f32 %v1330, %v508
  %v1365 = vadd.f32 %v1335, %v509
  %v1366 = vadd.f32 %v1340, %v510
  %v1367 = vadd.f32 %v1345, %v511
  %v1368 = vadd.f32 %v1350, %v512
  %v1369 = vld [vmem:[%s10] sm:$0x1]
  %v1370 = vld [vmem:[%s11] sm:$0x1]
  %v1371 = vsel %vm259, %v1353, 0.0
  %1372 = vadd.xlane.f32.xlu0 %v1371
  %v1373 = vpop.xlane.xlu0 %1372
  %v1374 = vsel %vm259, %v1354, 0.0
  %1375 = vadd.xlane.f32.xlu0 %v1374
  %v1376 = vpop.xlane.xlu0 %1375
  %v1377 = vsel %vm259, %v1355, 0.0
  %1378 = vadd.xlane.f32.xlu0 %v1377
  %v1379 = vpop.xlane.xlu0 %1378
  %v1380 = vsel %vm259, %v1356, 0.0
  %1381 = vadd.xlane.f32.xlu0 %v1380
  %v1382 = vpop.xlane.xlu0 %1381
  %v1383 = vsel %vm259, %v1357, 0.0
  %1384 = vadd.xlane.f32.xlu0 %v1383
  %v1385 = vpop.xlane.xlu0 %1384
  %v1386 = vsel %vm259, %v1358, 0.0
  %1387 = vadd.xlane.f32.xlu0 %v1386
  %v1388 = vpop.xlane.xlu0 %1387
  %v1389 = vsel %vm259, %v1359, 0.0
  %1390 = vadd.xlane.f32.xlu0 %v1389
  %v1391 = vpop.xlane.xlu0 %1390
  %v1392 = vsel %vm259, %v1360, 0.0
  %1393 = vadd.xlane.f32.xlu0 %v1392
  %v1394 = vpop.xlane.xlu0 %1393
  %v1395 = vsel %vm259, %v1361, 0.0
  %1396 = vadd.xlane.f32.xlu0 %v1395
  %v1397 = vpop.xlane.xlu0 %1396
  %v1398 = vsel %vm259, %v1362, 0.0
  %1399 = vadd.xlane.f32.xlu0 %v1398
  %v1400 = vpop.xlane.xlu0 %1399
  %v1401 = vsel %vm259, %v1363, 0.0
  %1402 = vadd.xlane.f32.xlu0 %v1401
  %v1403 = vpop.xlane.xlu0 %1402
  %v1404 = vsel %vm259, %v1364, 0.0
  %1405 = vadd.xlane.f32.xlu0 %v1404
  %v1406 = vpop.xlane.xlu0 %1405
  %v1407 = vsel %vm259, %v1365, 0.0
  %1408 = vadd.xlane.f32.xlu0 %v1407
  %v1409 = vpop.xlane.xlu0 %1408
  %v1410 = vsel %vm259, %v1366, 0.0
  %1411 = vadd.xlane.f32.xlu0 %v1410
  %v1412 = vpop.xlane.xlu0 %1411
  %v1413 = vsel %vm259, %v1367, 0.0
  %1414 = vadd.xlane.f32.xlu0 %v1413
  %v1415 = vpop.xlane.xlu0 %1414
  %v1416 = vsel %vm259, %v1368, 0.0
  %1417 = vadd.xlane.f32.xlu0 %v1416
  %v1418 = vpop.xlane.xlu0 %1417
  %v1419 = vmul.f32 %v1373, %v308
  %v1420 = vmul.f32 %v1376, %v308
  %v1421 = vmul.f32 %v1379, %v308
  %v1422 = vmul.f32 %v1382, %v308
  %v1423 = vmul.f32 %v1385, %v308
  %v1424 = vmul.f32 %v1388, %v308
  %v1425 = vmul.f32 %v1391, %v308
  %v1426 = vmul.f32 %v1394, %v308
  %v1427 = vmul.f32 %v1397, %v308
  %v1428 = vmul.f32 %v1400, %v308
  %v1429 = vmul.f32 %v1403, %v308
  %v1430 = vmul.f32 %v1406, %v308
  %v1431 = vmul.f32 %v1409, %v308
  %v1432 = vmul.f32 %v1412, %v308
  %v1433 = vmul.f32 %v1415, %v308
  %v1434 = vmul.f32 %v1418, %v308
  %v1435 = vsub.f32 %v1353, %v1419
  %v1436 = vsub.f32 %v1354, %v1420
  %v1437 = vsub.f32 %v1355, %v1421
  %v1438 = vsub.f32 %v1356, %v1422
  %v1439 = vsub.f32 %v1357, %v1423
  %v1440 = vsub.f32 %v1358, %v1424
  %v1441 = vsub.f32 %v1359, %v1425
  %v1442 = vsub.f32 %v1360, %v1426
  %v1443 = vsub.f32 %v1361, %v1427
  %v1444 = vsub.f32 %v1362, %v1428
  %v1445 = vsub.f32 %v1363, %v1429
  %v1446 = vsub.f32 %v1364, %v1430
  %v1447 = vsub.f32 %v1365, %v1431
  %v1448 = vsub.f32 %v1366, %v1432
  %v1449 = vsub.f32 %v1367, %v1433
  %v1450 = vsub.f32 %v1368, %v1434
  %v1451 = vmul.f32 %v1435, %v1435
  %v1452 = vmul.f32 %v1436, %v1436
  %v1453 = vmul.f32 %v1437, %v1437
  %v1454 = vmul.f32 %v1438, %v1438
  %v1455 = vmul.f32 %v1439, %v1439
  %v1456 = vmul.f32 %v1440, %v1440
  %v1457 = vmul.f32 %v1441, %v1441
  %v1458 = vmul.f32 %v1442, %v1442
  %v1459 = vmul.f32 %v1443, %v1443
  %v1460 = vmul.f32 %v1444, %v1444
  %v1461 = vmul.f32 %v1445, %v1445
  %v1462 = vmul.f32 %v1446, %v1446
  %v1463 = vmul.f32 %v1447, %v1447
  %v1464 = vmul.f32 %v1448, %v1448
  %v1465 = vmul.f32 %v1449, %v1449
  %v1466 = vmul.f32 %v1450, %v1450
  %v1467 = vsel %vm259, %v1451, 0.0
  %1468 = vadd.xlane.f32.xlu0 %v1467
  %v1469 = vpop.xlane.xlu0 %1468
  %v1470 = vsel %vm259, %v1452, 0.0
  %1471 = vadd.xlane.f32.xlu0 %v1470
  %v1472 = vpop.xlane.xlu0 %1471
  %v1473 = vsel %vm259, %v1453, 0.0
  %1474 = vadd.xlane.f32.xlu0 %v1473
  %v1475 = vpop.xlane.xlu0 %1474
  %v1476 = vsel %vm259, %v1454, 0.0
  %1477 = vadd.xlane.f32.xlu0 %v1476
  %v1478 = vpop.xlane.xlu0 %1477
  %v1479 = vsel %vm259, %v1455, 0.0
  %1480 = vadd.xlane.f32.xlu0 %v1479
  %v1481 = vpop.xlane.xlu0 %1480
  %v1482 = vsel %vm259, %v1456, 0.0
  %1483 = vadd.xlane.f32.xlu0 %v1482
  %v1484 = vpop.xlane.xlu0 %1483
  %v1485 = vsel %vm259, %v1457, 0.0
  %1486 = vadd.xlane.f32.xlu0 %v1485
  %v1487 = vpop.xlane.xlu0 %1486
  %v1488 = vsel %vm259, %v1458, 0.0
  %1489 = vadd.xlane.f32.xlu0 %v1488
  %v1490 = vpop.xlane.xlu0 %1489
  %v1491 = vsel %vm259, %v1459, 0.0
  %1492 = vadd.xlane.f32.xlu0 %v1491
  %v1493 = vpop.xlane.xlu0 %1492
  %v1494 = vsel %vm259, %v1460, 0.0
  %1495 = vadd.xlane.f32.xlu0 %v1494
  %v1496 = vpop.xlane.xlu0 %1495
  %v1497 = vsel %vm259, %v1461, 0.0
  %1498 = vadd.xlane.f32.xlu0 %v1497
  %v1499 = vpop.xlane.xlu0 %1498
  %v1500 = vsel %vm259, %v1462, 0.0
  %1501 = vadd.xlane.f32.xlu0 %v1500
  %v1502 = vpop.xlane.xlu0 %1501
  %v1503 = vsel %vm259, %v1463, 0.0
  %1504 = vadd.xlane.f32.xlu0 %v1503
  %v1505 = vpop.xlane.xlu0 %1504
  %v1506 = vsel %vm259, %v1464, 0.0
  %1507 = vadd.xlane.f32.xlu0 %v1506
  %v1508 = vpop.xlane.xlu0 %1507
  %v1509 = vsel %vm259, %v1465, 0.0
  %1510 = vadd.xlane.f32.xlu0 %v1509
  %v1511 = vpop.xlane.xlu0 %1510
  %v1512 = vsel %vm259, %v1466, 0.0
  %1513 = vadd.xlane.f32.xlu0 %v1512
  %v1514 = vpop.xlane.xlu0 %1513
  %v1515 = vmul.f32 %v1469, %v308
  %v1516 = vmul.f32 %v1472, %v308
  %v1517 = vmul.f32 %v1475, %v308
  %v1518 = vmul.f32 %v1478, %v308
  %v1519 = vmul.f32 %v1481, %v308
  %v1520 = vmul.f32 %v1484, %v308
  %v1521 = vmul.f32 %v1487, %v308
  %v1522 = vmul.f32 %v1490, %v308
  %v1523 = vmul.f32 %v1493, %v308
  %v1524 = vmul.f32 %v1496, %v308
  %v1525 = vmul.f32 %v1499, %v308
  %v1526 = vmul.f32 %v1502, %v308
  %v1527 = vmul.f32 %v1505, %v308
  %v1528 = vmul.f32 %v1508, %v308
  %v1529 = vmul.f32 %v1511, %v308
  %v1530 = vmul.f32 %v1514, %v308
  %v1531 = vadd.f32 %v1515, 1e-05
  %v1532 = vadd.f32 %v1516, 1e-05
  %v1533 = vadd.f32 %v1517, 1e-05
  %v1534 = vadd.f32 %v1518, 1e-05
  %v1535 = vadd.f32 %v1519, 1e-05
  %v1536 = vadd.f32 %v1520, 1e-05
  %v1537 = vadd.f32 %v1521, 1e-05
  %v1538 = vadd.f32 %v1522, 1e-05
  %v1539 = vadd.f32 %v1523, 1e-05
  %v1540 = vadd.f32 %v1524, 1e-05
  %v1541 = vadd.f32 %v1525, 1e-05
  %v1542 = vadd.f32 %v1526, 1e-05
  %v1543 = vadd.f32 %v1527, 1e-05
  %v1544 = vadd.f32 %v1528, 1e-05
  %v1545 = vadd.f32 %v1529, 1e-05
  %v1546 = vadd.f32 %v1530, 1e-05
  %v1547 = vrsqrt.pop %v1531
  %v1548 = vrsqrt.pop %v1532
  %v1549 = vrsqrt.pop %v1533
  %v1550 = vrsqrt.pop %v1534
  %v1551 = vrsqrt.pop %v1535
  %v1552 = vrsqrt.pop %v1536
  %v1553 = vrsqrt.pop %v1537
  %v1554 = vrsqrt.pop %v1538
  %v1555 = vrsqrt.pop %v1539
  %v1556 = vrsqrt.pop %v1540
  %v1557 = vrsqrt.pop %v1541
  %v1558 = vrsqrt.pop %v1542
  %v1559 = vrsqrt.pop %v1543
  %v1560 = vrsqrt.pop %v1544
  %v1561 = vrsqrt.pop %v1545
  %v1562 = vrsqrt.pop %v1546
  %v1563 = vmul.f32 %v1435, %v1547
  %v1564 = vmul.f32 %v1436, %v1548
  %v1565 = vmul.f32 %v1437, %v1549
  %v1566 = vmul.f32 %v1438, %v1550
  %v1567 = vmul.f32 %v1439, %v1551
  %v1568 = vmul.f32 %v1440, %v1552
  %v1569 = vmul.f32 %v1441, %v1553
  %v1570 = vmul.f32 %v1442, %v1554
  %v1571 = vmul.f32 %v1443, %v1555
  %v1572 = vmul.f32 %v1444, %v1556
  %v1573 = vmul.f32 %v1445, %v1557
  %v1574 = vmul.f32 %v1446, %v1558
  %v1575 = vmul.f32 %v1447, %v1559
  %v1576 = vmul.f32 %v1448, %v1560
  %v1577 = vmul.f32 %v1449, %v1561
  %v1578 = vmul.f32 %v1450, %v1562
  %v1580 = vlaneseq
  %v1581 = vshrl.u32 %v1580, 7
  %v1582 = vsub.s32 0, %v1581
  %v1583 = vrot.slane %v1369, %v1582
  %v1585 = vmul.f32 %v1563, %v1583
  %v1586 = vmul.f32 %v1564, %v1583
  %v1587 = vmul.f32 %v1565, %v1583
  %v1588 = vmul.f32 %v1566, %v1583
  %v1589 = vmul.f32 %v1567, %v1583
  %v1590 = vmul.f32 %v1568, %v1583
  %v1591 = vmul.f32 %v1569, %v1583
  %v1592 = vmul.f32 %v1570, %v1583
  %v1593 = vmul.f32 %v1571, %v1583
  %v1594 = vmul.f32 %v1572, %v1583
  %v1595 = vmul.f32 %v1573, %v1583
  %v1596 = vmul.f32 %v1574, %v1583
  %v1597 = vmul.f32 %v1575, %v1583
  %v1598 = vmul.f32 %v1576, %v1583
  %v1599 = vmul.f32 %v1577, %v1583
  %v1600 = vmul.f32 %v1578, %v1583
  %v1602 = vlaneseq
  %v1603 = vshrl.u32 %v1602, 7
  %v1604 = vsub.s32 0, %v1603
  %v1605 = vrot.slane %v1370, %v1604
  %v1607 = vadd.f32 %v1585, %v1605
  %v1608 = vadd.f32 %v1586, %v1605
  %v1609 = vadd.f32 %v1587, %v1605
  %v1610 = vadd.f32 %v1588, %v1605
  %v1611 = vadd.f32 %v1589, %v1605
  %v1612 = vadd.f32 %v1590, %v1605
  %v1613 = vadd.f32 %v1591, %v1605
  %v1614 = vadd.f32 %v1592, %v1605
  %v1615 = vadd.f32 %v1593, %v1605
  %v1616 = vadd.f32 %v1594, %v1605
  %v1617 = vadd.f32 %v1595, %v1605
  %v1618 = vadd.f32 %v1596, %v1605
  %v1619 = vadd.f32 %v1597, %v1605
  %v1620 = vadd.f32 %v1598, %v1605
  %v1621 = vadd.f32 %v1599, %v1605
  %v1622 = vadd.f32 %v1600, %v1605
  %1623 = vst.msk [vmem:[%s12] sm:$0xff] %vm259, %v1607
  %1624 = vst.msk [vmem:[%s12 + $0x8] sm:$0xff] %vm259, %v1608
  %1625 = vst.msk [vmem:[%s12 + $0x10] sm:$0xff] %vm259, %v1609
  %1626 = vst.msk [vmem:[%s12 + $0x18] sm:$0xff] %vm259, %v1610
  %1627 = vst.msk [vmem:[%s12 + $0x20] sm:$0xff] %vm259, %v1611
  %1628 = vst.msk [vmem:[%s12 + $0x28] sm:$0xff] %vm259, %v1612
  %1629 = vst.msk [vmem:[%s12 + $0x30] sm:$0xff] %vm259, %v1613
  %1630 = vst.msk [vmem:[%s12 + $0x38] sm:$0xff] %vm259, %v1614
  %1631 = vst.msk [vmem:[%s12 + $0x40] sm:$0xff] %vm259, %v1615
  %1632 = vst.msk [vmem:[%s12 + $0x48] sm:$0xff] %vm259, %v1616
  %1633 = vst.msk [vmem:[%s12 + $0x50] sm:$0xff] %vm259, %v1617
  %1634 = vst.msk [vmem:[%s12 + $0x58] sm:$0xff] %vm259, %v1618
  %1635 = vst.msk [vmem:[%s12 + $0x60] sm:$0xff] %vm259, %v1619
  %1636 = vst.msk [vmem:[%s12 + $0x68] sm:$0xff] %vm259, %v1620
  %1637 = vst.msk [vmem:[%s12 + $0x70] sm:$0xff] %vm259, %v1621
  %1638 = vst.msk [vmem:[%s12 + $0x78] sm:$0xff] %vm259, %v1622
  // Predicated region
  $region50: #{new_rnn_cell_forward.3} parent=0 // pred_check
    _
  $region51: #{new_rnn_cell_forward.3} parent=0 // pred_check_branch
    %1640 = sbr.rel (0) target = $region53
  $region52: #{new_rnn_cell_forward.3} parent=0 // pred_region
    _
  $region53: #{new_rnn_cell_forward.3} parent=0 // pred_fallthru
    _
  // Predicated region
  $region54: #{new_rnn_cell_forward.3} parent=0 // pred_check
    _
  $region55: #{new_rnn_cell_forward.3} parent=0 // pred_check_branch
    %1642 = sbr.rel (0) target = $region57
  $region56: #{new_rnn_cell_forward.3} parent=0 // pred_region
    _
  $region57: #{new_rnn_cell_forward.3} parent=0 // pred_fallthru
    _

// kernel: new_rnn_cell_forward.2
$region0: #{new_rnn_cell_forward.2}
  #allocation0 [shape = 'u32[]', space=smem, size = 0x4, offset = 0x4, fixed_abs, tag = 'smem constant byte address 0x4 - core index']
  #allocation1 [shape = 'u32[144,128]{1,0:T(1,128)}', space=vmem, size = 0x12000, scoped, tag = 'internal scratch']
  #allocation2 [shape = 'f32[128,384]{1,0:T(8,128)}', space=vmem, size = 0x30000, scoped, tag = 'scratch operand']
  %s0 = inlined_call_operand.vmem [shape: f32[128,4], index: 0, kind: input, shape index: {}]
  %s1 = inlined_call_operand.vmem [shape: f32[16,128], index: 1, kind: input, shape index: {}]
  %s2 = inlined_call_operand.vmem [shape: f32[4,384], index: 2, kind: input, shape index: {}]
  %s3 = inlined_call_operand.vmem [shape: f32[128,384], index: 3, kind: input, shape index: {}]
  %s4 = inlined_call_operand.vmem [shape: f32[1,384], index: 4, kind: input, shape index: {}]
  %s5 = inlined_call_operand.vmem [shape: f32[1,128], index: 5, kind: input, shape index: {}]
  %s6 = inlined_call_operand.vmem [shape: f32[128,128], index: 6, kind: output, shape index: {0}]
  %s7 = inlined_call_operand.vmem [shape: f32[16,128], index: 7, kind: output, shape index: {1}]
  %8 = xla_tuple %s6, %s7
  %s9 = sld [smem:[#allocation0]]
  $region46: #{new_rnn_cell_forward.2} parent=0
    _
  %s11 = ssub.s32 1, %s9
  %s12 = scalar_select 0, %s11, %s9
  // Predicated region
  $region2: #{new_rnn_cell_forward.2} parent=0 // pred_check
    _
  $region3: #{new_rnn_cell_forward.2} parent=0 // pred_check_branch
    %14 = sbr.rel (0) target = $region5
  $region4: #{new_rnn_cell_forward.2} parent=0 // pred_region
    _
  $region5: #{new_rnn_cell_forward.2} parent=0 // pred_fallthru
    _
  // Predicated region
  $region6: #{new_rnn_cell_forward.2} parent=0 // pred_check
    _
  $region7: #{new_rnn_cell_forward.2} parent=0 // pred_check_branch
    %16 = sbr.rel (0) target = $region9
  $region8: #{new_rnn_cell_forward.2} parent=0 // pred_region
    _
  $region9: #{new_rnn_cell_forward.2} parent=0 // pred_fallthru
    _
  // Predicated region
  $region10: #{new_rnn_cell_forward.2} parent=0 // pred_check
    _
  $region11: #{new_rnn_cell_forward.2} parent=0 // pred_check_branch
    %18 = sbr.rel (0) target = $region13
  $region12: #{new_rnn_cell_forward.2} parent=0 // pred_region
    _
  $region13: #{new_rnn_cell_forward.2} parent=0 // pred_fallthru
    _
  // Predicated region
  $region14: #{new_rnn_cell_forward.2} parent=0 // pred_check
    _
  $region15: #{new_rnn_cell_forward.2} parent=0 // pred_check_branch
    %20 = sbr.rel (0) target = $region17
  $region16: #{new_rnn_cell_forward.2} parent=0 // pred_region
    _
  $region17: #{new_rnn_cell_forward.2} parent=0 // pred_fallthru
    _
  // Predicated region
  $region18: #{new_rnn_cell_forward.2} parent=0 // pred_check
    _
  $region19: #{new_rnn_cell_forward.2} parent=0 // pred_check_branch
    %22 = sbr.rel (0) target = $region21
  $region20: #{new_rnn_cell_forward.2} parent=0 // pred_region
    _
  $region21: #{new_rnn_cell_forward.2} parent=0 // pred_fallthru
    _
  // Predicated region
  $region22: #{new_rnn_cell_forward.2} parent=0 // pred_check
    _
  $region23: #{new_rnn_cell_forward.2} parent=0 // pred_check_branch
    %24 = sbr.rel (0) target = $region25
  $region24: #{new_rnn_cell_forward.2} parent=0 // pred_region
    _
  $region25: #{new_rnn_cell_forward.2} parent=0 // pred_fallthru
    _
  %p25 = scmp.eq.s32.totalorder 0, 0
  // Predicated region
  $region26: #{new_rnn_cell_forward.2} parent=0 // pred_check
    %p26 = pneg %p25
  $region27: #{new_rnn_cell_forward.2} parent=0 // pred_check_branch
    %28 = sbr.rel (%p26) target = $region29
  $region28: #{new_rnn_cell_forward.2} parent=0 // pred_region
    %v29 = vld [vmem:[%s1] sm:$0xff]
    %v30 = vld [vmem:[%s1 + $0x8] sm:$0xff]
    %31 = vst [vmem:[%s7] sm:$0xff] %v29
    %32 = vst [vmem:[%s7 + $0x8] sm:$0xff] %v30
  $region29: #{new_rnn_cell_forward.2} parent=0 // pred_fallthru
    _
  %v33 = vld [vmem:[%s0] sm:$0xff]
  %v34 = vld [vmem:[%s0 + $0x8] sm:$0xff]
  %v35 = vld [vmem:[%s0 + $0x10] sm:$0xff]
  %v36 = vld [vmem:[%s0 + $0x18] sm:$0xff]
  %v37 = vld [vmem:[%s0 + $0x20] sm:$0xff]
  %v38 = vld [vmem:[%s0 + $0x28] sm:$0xff]
  %v39 = vld [vmem:[%s0 + $0x30] sm:$0xff]
  %v40 = vld [vmem:[%s0 + $0x38] sm:$0xff]
  %v41 = vld [vmem:[%s0 + $0x40] sm:$0xff]
  %v42 = vld [vmem:[%s0 + $0x48] sm:$0xff]
  %v43 = vld [vmem:[%s0 + $0x50] sm:$0xff]
  %v44 = vld [vmem:[%s0 + $0x58] sm:$0xff]
  %v45 = vld [vmem:[%s0 + $0x60] sm:$0xff]
  %v46 = vld [vmem:[%s0 + $0x68] sm:$0xff]
  %v47 = vld [vmem:[%s0 + $0x70] sm:$0xff]
  %v48 = vld [vmem:[%s0 + $0x78] sm:$0xff]
  %v49 = vld [vmem:[%s2] sm:$0xff]
  %v50 = vld [vmem:[%s2 + $0x8] sm:$0xf]
  %v51 = vld [vmem:[%s4] sm:$0x7]
  %v53 = vlaneseq
  %v54 = vshrl.u32 %v53, 7
  %v55 = vsub.s32 0, %v54
  %v56 = vrot.slane %v51, %v55
  %v57 = vlaneseq
  %v58 = vshrl.u32 %v57, 7
  %v59 = vsub.s32 1, %v58
  %v60 = vrot.slane %v51, %v59
  %v61 = vlaneseq
  %v62 = vshrl.u32 %v61, 7
  %v63 = vsub.s32 2, %v62
  %v64 = vrot.slane %v51, %v63
  %v70 = vcombine.high %v49, %v49
  %vm71 = vcmask 31744
  %v73 = vsel %vm71, %v33, 0
  %v76 = vsel %vm71, %v34, 0
  %v79 = vsel %vm71, %v35, 0
  %v82 = vsel %vm71, %v36, 0
  %v85 = vsel %vm71, %v37, 0
  %v88 = vsel %vm71, %v38, 0
  %v91 = vsel %vm71, %v39, 0
  %v94 = vsel %vm71, %v40, 0
  %v97 = vsel %vm71, %v41, 0
  %v100 = vsel %vm71, %v42, 0
  %v103 = vsel %vm71, %v43, 0
  %v106 = vsel %vm71, %v44, 0
  %v109 = vsel %vm71, %v45, 0
  %v112 = vsel %vm71, %v46, 0
  %v115 = vsel %vm71, %v47, 0
  %v118 = vsel %vm71, %v48, 0
  %vm120 = vcmask 1043456
  %v121 = vsel %vm120, %v49, 0
  %v123 = vsel %vm120, %v70, 0
  %v125 = vsel %vm120, %v50, 0
  %127 = vmatprep.subr.mxu0 %v123
  %128 = vmatpush1.msra.mxu0 %v121
  %129 = vmatprep.subr.mxu0 0.0
  %130 = vmatpush1.msra.mxu0 0.0
  %131 = vmatprep.subr.mxu0 0.0
  %132 = vmatpush1.msra.mxu0 0.0
  %133 = vmatprep.subr.mxu0 0.0
  %134 = vmatpush1.msra.mxu0 0.0
  %135 = vmatprep.subr.mxu0 0.0
  %136 = vmatpush1.msra.mxu0 0.0
  %137 = vmatprep.subr.mxu0 0.0
  %138 = vmatpush1.msra.mxu0 0.0
  %139 = vmatprep.subr.mxu0 0.0
  %140 = vmatpush1.msra.mxu0 0.0
  %141 = vmatprep.subr.mxu0 0.0
  %142 = vmatpush1.msra.mxu0 0.0
  %143 = vmatprep.subr.mxu0 0.0
  %144 = vmatpush1.msra.mxu0 0.0
  %145 = vmatprep.subr.mxu0 0.0
  %146 = vmatpush1.msra.mxu0 0.0
  %147 = vmatprep.subr.mxu0 0.0
  %148 = vmatpush1.msra.mxu0 0.0
  %149 = vmatprep.subr.mxu0 0.0
  %150 = vmatpush1.msra.mxu0 0.0
  %151 = vmatprep.subr.mxu0 0.0
  %152 = vmatpush1.msra.mxu0 0.0
  %153 = vmatprep.subr.mxu0 0.0
  %154 = vmatpush1.msra.mxu0 0.0
  %155 = vmatprep.subr.mxu0 0.0
  %156 = vmatpush1.msra.mxu0 0.0
  %157 = vmatprep.subr.mxu0 0.0
  %158 = vmatpush1.msra.mxu0 0.0
  %159 = vmatprep.subr.mxu0 0.0
  %160 = vmatpush1.msra.mxu0 0.0
  %161 = vmatprep.subr.mxu0 0.0
  %162 = vmatpush1.msra.mxu0 0.0
  %163 = vmatprep.subr.mxu0 0.0
  %164 = vmatpush1.msra.mxu0 0.0
  %165 = vmatprep.subr.mxu0 0.0
  %166 = vmatpush1.msra.mxu0 0.0
  %167 = vmatprep.subr.mxu0 0.0
  %168 = vmatpush1.msra.mxu0 0.0
  %169 = vmatprep.subr.mxu0 0.0
  %170 = vmatpush1.msra.mxu0 0.0
  %171 = vmatprep.subr.mxu0 0.0
  %172 = vmatpush1.msra.mxu0 0.0
  %173 = vmatprep.subr.mxu0 0.0
  %174 = vmatpush1.msra.mxu0 0.0
  %175 = vmatprep.subr.mxu0 0.0
  %176 = vmatpush1.msra.mxu0 0.0
  %177 = vmatprep.subr.mxu0 0.0
  %178 = vmatpush1.msra.mxu0 0.0
  %179 = vmatprep.subr.mxu0 0.0
  %180 = vmatpush1.msra.mxu0 0.0
  %181 = vmatprep.subr.mxu0 0.0
  %182 = vmatpush1.msra.mxu0 0.0
  %183 = vmatprep.subr.mxu0 0.0
  %184 = vmatpush1.msra.mxu0 0.0
  %185 = vmatprep.subr.mxu0 0.0
  %186 = vmatpush1.msra.mxu0 0.0
  %187 = vmatprep.subr.mxu0 0.0
  %188 = vmatpush1.msra.mxu0 0.0
  %189 = vmatprep.subr.mxu0 0.0
  %190 = vmatpush1.msra.mxu0 0.0
  %191 = vmatprep.mubr.f32.mxu0 0.0
  %192 = vmatmul.mubr.f32.gmra.mrb[0].mxu0 %v73
  %v193 = vpop.f32.mrb[0].mxu0
  %v194 = vadd.f32 %v56, %v193
  %v195 = vpop.f32.mrb[0].mxu0
  %v196 = vadd.f32 %v60, %v195
  %197 = vmatprep.mubr.f32.mxu0 0.0
  %198 = vmatmul.mubr.f32.gmra.mrb[0].mxu0 %v76
  %v199 = vpop.f32.mrb[0].mxu0
  %v200 = vadd.f32 %v56, %v199
  %v201 = vpop.f32.mrb[0].mxu0
  %v202 = vadd.f32 %v60, %v201
  %203 = vmatprep.mubr.f32.mxu0 0.0
  %204 = vmatmul.mubr.f32.gmra.mrb[0].mxu0 %v79
  %v205 = vpop.f32.mrb[0].mxu0
  %v206 = vadd.f32 %v56, %v205
  %v207 = vpop.f32.mrb[0].mxu0
  %v208 = vadd.f32 %v60, %v207
  %209 = vmatprep.mubr.f32.mxu0 0.0
  %210 = vmatmul.mubr.f32.gmra.mrb[0].mxu0 %v82
  %v211 = vpop.f32.mrb[0].mxu0
  %v212 = vadd.f32 %v56, %v211
  %v213 = vpop.f32.mrb[0].mxu0
  %v214 = vadd.f32 %v60, %v213
  %215 = vmatprep.mubr.f32.mxu0 0.0
  %216 = vmatmul.mubr.f32.gmra.mrb[0].mxu0 %v85
  %v217 = vpop.f32.mrb[0].mxu0
  %v218 = vadd.f32 %v56, %v217
  %v219 = vpop.f32.mrb[0].mxu0
  %v220 = vadd.f32 %v60, %v219
  %221 = vmatprep.mubr.f32.mxu0 0.0
  %222 = vmatmul.mubr.f32.gmra.mrb[0].mxu0 %v88
  %v223 = vpop.f32.mrb[0].mxu0
  %v224 = vadd.f32 %v56, %v223
  %v225 = vpop.f32.mrb[0].mxu0
  %v226 = vadd.f32 %v60, %v225
  %227 = vmatprep.mubr.f32.mxu0 0.0
  %228 = vmatmul.mubr.f32.gmra.mrb[0].mxu0 %v91
  %v229 = vpop.f32.mrb[0].mxu0
  %v230 = vadd.f32 %v56, %v229
  %v231 = vpop.f32.mrb[0].mxu0
  %v232 = vadd.f32 %v60, %v231
  %233 = vmatprep.mubr.f32.mxu0 0.0
  %234 = vmatmul.mubr.f32.gmra.mrb[0].mxu0 %v94
  %v235 = vpop.f32.mrb[0].mxu0
  %v236 = vadd.f32 %v56, %v235
  %v237 = vpop.f32.mrb[0].mxu0
  %v238 = vadd.f32 %v60, %v237
  %239 = vmatprep.mubr.f32.mxu0 0.0
  %240 = vmatmul.mubr.f32.gmra.mrb[0].mxu0 %v97
  %v241 = vpop.f32.mrb[0].mxu0
  %v242 = vadd.f32 %v56, %v241
  %v243 = vpop.f32.mrb[0].mxu0
  %v244 = vadd.f32 %v60, %v243
  %245 = vmatprep.mubr.f32.mxu0 0.0
  %246 = vmatmul.mubr.f32.gmra.mrb[0].mxu0 %v100
  %v247 = vpop.f32.mrb[0].mxu0
  %v248 = vadd.f32 %v56, %v247
  %v249 = vpop.f32.mrb[0].mxu0
  %v250 = vadd.f32 %v60, %v249
  %251 = vmatprep.mubr.f32.mxu0 0.0
  %252 = vmatmul.mubr.f32.gmra.mrb[0].mxu0 %v103
  %v253 = vpop.f32.mrb[0].mxu0
  %v254 = vadd.f32 %v56, %v253
  %v255 = vpop.f32.mrb[0].mxu0
  %v256 = vadd.f32 %v60, %v255
  %257 = vmatprep.mubr.f32.mxu0 0.0
  %258 = vmatmul.mubr.f32.gmra.mrb[0].mxu0 %v106
  %v259 = vpop.f32.mrb[0].mxu0
  %v260 = vadd.f32 %v56, %v259
  %v261 = vpop.f32.mrb[0].mxu0
  %v262 = vadd.f32 %v60, %v261
  %263 = vmatprep.mubr.f32.mxu0 0.0
  %264 = vmatmul.mubr.f32.gmra.mrb[0].mxu0 %v109
  %v265 = vpop.f32.mrb[0].mxu0
  %v266 = vadd.f32 %v56, %v265
  %v267 = vpop.f32.mrb[0].mxu0
  %v268 = vadd.f32 %v60, %v267
  %269 = vmatprep.mubr.f32.mxu0 0.0
  %270 = vmatmul.mubr.f32.gmra.mrb[0].mxu0 %v112
  %v271 = vpop.f32.mrb[0].mxu0
  %v272 = vadd.f32 %v56, %v271
  %v273 = vpop.f32.mrb[0].mxu0
  %v274 = vadd.f32 %v60, %v273
  %275 = vmatprep.mubr.f32.mxu0 0.0
  %276 = vmatmul.mubr.f32.gmra.mrb[0].mxu0 %v115
  %v277 = vpop.f32.mrb[0].mxu0
  %v278 = vadd.f32 %v56, %v277
  %v279 = vpop.f32.mrb[0].mxu0
  %v280 = vadd.f32 %v60, %v279
  %281 = vmatprep.mubr.f32.mxu0 0.0
  %282 = vmatmul.mubr.f32.gmra.mrb[0].mxu0 %v118
  %v283 = vpop.f32.mrb[0].mxu0
  %v284 = vadd.f32 %v56, %v283
  %v285 = vpop.f32.mrb[0].mxu0
  %v286 = vadd.f32 %v60, %v285
  %287 = vdwg.mxu0
  %288 = vmatprep.subr.mxu0 0.0
  %289 = vmatpush1.msra.mxu0 %v125
  %290 = vmatprep.subr.mxu0 0.0
  %291 = vmatpush1.msra.mxu0 0.0
  %292 = vmatprep.subr.mxu0 0.0
  %293 = vmatpush1.msra.mxu0 0.0
  %294 = vmatprep.subr.mxu0 0.0
  %295 = vmatpush1.msra.mxu0 0.0
  %296 = vmatprep.subr.mxu0 0.0
  %297 = vmatpush1.msra.mxu0 0.0
  %298 = vmatprep.subr.mxu0 0.0
  %299 = vmatpush1.msra.mxu0 0.0
  %300 = vmatprep.subr.mxu0 0.0
  %301 = vmatpush1.msra.mxu0 0.0
  %302 = vmatprep.subr.mxu0 0.0
  %303 = vmatpush1.msra.mxu0 0.0
  %304 = vmatprep.subr.mxu0 0.0
  %305 = vmatpush1.msra.mxu0 0.0
  %306 = vmatprep.subr.mxu0 0.0
  %307 = vmatpush1.msra.mxu0 0.0
  %308 = vmatprep.subr.mxu0 0.0
  %309 = vmatpush1.msra.mxu0 0.0
  %310 = vmatprep.subr.mxu0 0.0
  %311 = vmatpush1.msra.mxu0 0.0
  %312 = vmatprep.subr.mxu0 0.0
  %313 = vmatpush1.msra.mxu0 0.0
  %314 = vmatprep.subr.mxu0 0.0
  %315 = vmatpush1.msra.mxu0 0.0
  %316 = vmatprep.subr.mxu0 0.0
  %317 = vmatpush1.msra.mxu0 0.0
  %318 = vmatprep.subr.mxu0 0.0
  %319 = vmatpush1.msra.mxu0 0.0
  %320 = vmatprep.subr.mxu0 0.0
  %321 = vmatpush1.msra.mxu0 0.0
  %322 = vmatprep.subr.mxu0 0.0
  %323 = vmatpush1.msra.mxu0 0.0
  %324 = vmatprep.subr.mxu0 0.0
  %325 = vmatpush1.msra.mxu0 0.0
  %326 = vmatprep.subr.mxu0 0.0
  %327 = vmatpush1.msra.mxu0 0.0
  %328 = vmatprep.subr.mxu0 0.0
  %329 = vmatpush1.msra.mxu0 0.0
  %330 = vmatprep.subr.mxu0 0.0
  %331 = vmatpush1.msra.mxu0 0.0
  %332 = vmatprep.subr.mxu0 0.0
  %333 = vmatpush1.msra.mxu0 0.0
  %334 = vmatprep.subr.mxu0 0.0
  %335 = vmatpush1.msra.mxu0 0.0
  %336 = vmatprep.subr.mxu0 0.0
  %337 = vmatpush1.msra.mxu0 0.0
  %338 = vmatprep.subr.mxu0 0.0
  %339 = vmatpush1.msra.mxu0 0.0
  %340 = vmatprep.subr.mxu0 0.0
  %341 = vmatpush1.msra.mxu0 0.0
  %342 = vmatprep.subr.mxu0 0.0
  %343 = vmatpush1.msra.mxu0 0.0
  %344 = vmatprep.subr.mxu0 0.0
  %345 = vmatpush1.msra.mxu0 0.0
  %346 = vmatprep.subr.mxu0 0.0
  %347 = vmatpush1.msra.mxu0 0.0
  %348 = vmatprep.subr.mxu0 0.0
  %349 = vmatpush1.msra.mxu0 0.0
  %350 = vmatprep.subr.mxu0 0.0
  %351 = vmatpush1.msra.mxu0 0.0
  %352 = vmatprep.mubr.f32.mxu0 0.0
  %353 = vmatmul.mubr.f32.gmra.mrb[0].mxu0 %v73
  %v354 = vpop.f32.mrb[0].mxu0
  %v355 = vadd.f32 %v64, %v354
  %v356 = vpop.f32.mrb[0].mxu0
  %357 = vmatprep.mubr.f32.mxu0 0.0
  %358 = vmatmul.mubr.f32.gmra.mrb[0].mxu0 %v76
  %v359 = vpop.f32.mrb[0].mxu0
  %v360 = vadd.f32 %v64, %v359
  %v361 = vpop.f32.mrb[0].mxu0
  %362 = vmatprep.mubr.f32.mxu0 0.0
  %363 = vmatmul.mubr.f32.gmra.mrb[0].mxu0 %v79
  %v364 = vpop.f32.mrb[0].mxu0
  %v365 = vadd.f32 %v64, %v364
  %v366 = vpop.f32.mrb[0].mxu0
  %367 = vmatprep.mubr.f32.mxu0 0.0
  %368 = vmatmul.mubr.f32.gmra.mrb[0].mxu0 %v82
  %v369 = vpop.f32.mrb[0].mxu0
  %v370 = vadd.f32 %v64, %v369
  %v371 = vpop.f32.mrb[0].mxu0
  %372 = vmatprep.mubr.f32.mxu0 0.0
  %373 = vmatmul.mubr.f32.gmra.mrb[0].mxu0 %v85
  %v374 = vpop.f32.mrb[0].mxu0
  %v375 = vadd.f32 %v64, %v374
  %v376 = vpop.f32.mrb[0].mxu0
  %377 = vmatprep.mubr.f32.mxu0 0.0
  %378 = vmatmul.mubr.f32.gmra.mrb[0].mxu0 %v88
  %v379 = vpop.f32.mrb[0].mxu0
  %v380 = vadd.f32 %v64, %v379
  %v381 = vpop.f32.mrb[0].mxu0
  %382 = vmatprep.mubr.f32.mxu0 0.0
  %383 = vmatmul.mubr.f32.gmra.mrb[0].mxu0 %v91
  %v384 = vpop.f32.mrb[0].mxu0
  %v385 = vadd.f32 %v64, %v384
  %v386 = vpop.f32.mrb[0].mxu0
  %387 = vmatprep.mubr.f32.mxu0 0.0
  %388 = vmatmul.mubr.f32.gmra.mrb[0].mxu0 %v94
  %v389 = vpop.f32.mrb[0].mxu0
  %v390 = vadd.f32 %v64, %v389
  %v391 = vpop.f32.mrb[0].mxu0
  %392 = vmatprep.mubr.f32.mxu0 0.0
  %393 = vmatmul.mubr.f32.gmra.mrb[0].mxu0 %v97
  %v394 = vpop.f32.mrb[0].mxu0
  %v395 = vadd.f32 %v64, %v394
  %v396 = vpop.f32.mrb[0].mxu0
  %397 = vmatprep.mubr.f32.mxu0 0.0
  %398 = vmatmul.mubr.f32.gmra.mrb[0].mxu0 %v100
  %v399 = vpop.f32.mrb[0].mxu0
  %v400 = vadd.f32 %v64, %v399
  %v401 = vpop.f32.mrb[0].mxu0
  %402 = vmatprep.mubr.f32.mxu0 0.0
  %403 = vmatmul.mubr.f32.gmra.mrb[0].mxu0 %v103
  %v404 = vpop.f32.mrb[0].mxu0
  %v405 = vadd.f32 %v64, %v404
  %v406 = vpop.f32.mrb[0].mxu0
  %407 = vmatprep.mubr.f32.mxu0 0.0
  %408 = vmatmul.mubr.f32.gmra.mrb[0].mxu0 %v106
  %v409 = vpop.f32.mrb[0].mxu0
  %v410 = vadd.f32 %v64, %v409
  %v411 = vpop.f32.mrb[0].mxu0
  %412 = vmatprep.mubr.f32.mxu0 0.0
  %413 = vmatmul.mubr.f32.gmra.mrb[0].mxu0 %v109
  %v414 = vpop.f32.mrb[0].mxu0
  %v415 = vadd.f32 %v64, %v414
  %v416 = vpop.f32.mrb[0].mxu0
  %417 = vmatprep.mubr.f32.mxu0 0.0
  %418 = vmatmul.mubr.f32.gmra.mrb[0].mxu0 %v112
  %v419 = vpop.f32.mrb[0].mxu0
  %v420 = vadd.f32 %v64, %v419
  %v421 = vpop.f32.mrb[0].mxu0
  %422 = vmatprep.mubr.f32.mxu0 0.0
  %423 = vmatmul.mubr.f32.gmra.mrb[0].mxu0 %v115
  %v424 = vpop.f32.mrb[0].mxu0
  %v425 = vadd.f32 %v64, %v424
  %v426 = vpop.f32.mrb[0].mxu0
  %427 = vmatprep.mubr.f32.mxu0 0.0
  %428 = vmatmul.mubr.f32.gmra.mrb[0].mxu0 %v118
  %v429 = vpop.f32.mrb[0].mxu0
  %v430 = vadd.f32 %v64, %v429
  %v431 = vpop.f32.mrb[0].mxu0
  %432 = vdwg.mxu0
  %433 = vst [vmem:[#allocation2] sm:$0xff] %v194
  %434 = vst [vmem:[#allocation2 + $0x8] sm:$0xff] %v196
  %435 = vst [vmem:[#allocation2 + $0x10] sm:$0xff] %v355
  %436 = vst [vmem:[#allocation2 + $0x18] sm:$0xff] %v200
  %437 = vst [vmem:[#allocation2 + $0x20] sm:$0xff] %v202
  %438 = vst [vmem:[#allocation2 + $0x28] sm:$0xff] %v360
  %439 = vst [vmem:[#allocation2 + $0x30] sm:$0xff] %v206
  %440 = vst [vmem:[#allocation2 + $0x38] sm:$0xff] %v208
  %441 = vst [vmem:[#allocation2 + $0x40] sm:$0xff] %v365
  %442 = vst [vmem:[#allocation2 + $0x48] sm:$0xff] %v212
  %443 = vst [vmem:[#allocation2 + $0x50] sm:$0xff] %v214
  %444 = vst [vmem:[#allocation2 + $0x58] sm:$0xff] %v370
  %445 = vst [vmem:[#allocation2 + $0x60] sm:$0xff] %v218
  %446 = vst [vmem:[#allocation2 + $0x68] sm:$0xff] %v220
  %447 = vst [vmem:[#allocation2 + $0x70] sm:$0xff] %v375
  %448 = vst [vmem:[#allocation2 + $0x78] sm:$0xff] %v224
  %449 = vst [vmem:[#allocation2 + $0x80] sm:$0xff] %v226
  %450 = vst [vmem:[#allocation2 + $0x88] sm:$0xff] %v380
  %451 = vst [vmem:[#allocation2 + $0x90] sm:$0xff] %v230
  %452 = vst [vmem:[#allocation2 + $0x98] sm:$0xff] %v232
  %453 = vst [vmem:[#allocation2 + $0xa0] sm:$0xff] %v385
  %454 = vst [vmem:[#allocation2 + $0xa8] sm:$0xff] %v236
  %455 = vst [vmem:[#allocation2 + $0xb0] sm:$0xff] %v238
  %456 = vst [vmem:[#allocation2 + $0xb8] sm:$0xff] %v390
  %457 = vst [vmem:[#allocation2 + $0xc0] sm:$0xff] %v242
  %458 = vst [vmem:[#allocation2 + $0xc8] sm:$0xff] %v244
  %459 = vst [vmem:[#allocation2 + $0xd0] sm:$0xff] %v395
  %460 = vst [vmem:[#allocation2 + $0xd8] sm:$0xff] %v248
  %461 = vst [vmem:[#allocation2 + $0xe0] sm:$0xff] %v250
  %462 = vst [vmem:[#allocation2 + $0xe8] sm:$0xff] %v400
  %463 = vst [vmem:[#allocation2 + $0xf0] sm:$0xff] %v254
  %464 = vst [vmem:[#allocation2 + $0xf8] sm:$0xff] %v256
  %465 = vst [vmem:[#allocation2 + $0x100] sm:$0xff] %v405
  %466 = vst [vmem:[#allocation2 + $0x108] sm:$0xff] %v260
  %467 = vst [vmem:[#allocation2 + $0x110] sm:$0xff] %v262
  %468 = vst [vmem:[#allocation2 + $0x118] sm:$0xff] %v410
  %469 = vst [vmem:[#allocation2 + $0x120] sm:$0xff] %v266
  %470 = vst [vmem:[#allocation2 + $0x128] sm:$0xff] %v268
  %471 = vst [vmem:[#allocation2 + $0x130] sm:$0xff] %v415
  %472 = vst [vmem:[#allocation2 + $0x138] sm:$0xff] %v272
  %473 = vst [vmem:[#allocation2 + $0x140] sm:$0xff] %v274
  %474 = vst [vmem:[#allocation2 + $0x148] sm:$0xff] %v420
  %475 = vst [vmem:[#allocation2 + $0x150] sm:$0xff] %v278
  %476 = vst [vmem:[#allocation2 + $0x158] sm:$0xff] %v280
  %477 = vst [vmem:[#allocation2 + $0x160] sm:$0xff] %v425
  %478 = vst [vmem:[#allocation2 + $0x168] sm:$0xff] %v284
  %479 = vst [vmem:[#allocation2 + $0x170] sm:$0xff] %v286
  %480 = vst [vmem:[#allocation2 + $0x178] sm:$0xff] %v430
  %v481 = vld [vmem:[%s3] sm:$0xff]
  %v482 = vld [vmem:[%s3 + $0x8] sm:$0xff]
  %v483 = vld [vmem:[%s3 + $0x10] sm:$0xff]
  %v484 = vld [vmem:[%s3 + $0x18] sm:$0xff]
  %v485 = vld [vmem:[%s3 + $0x20] sm:$0xff]
  %v486 = vld [vmem:[%s3 + $0x28] sm:$0xff]
  %v487 = vld [vmem:[%s3 + $0x30] sm:$0xff]
  %v488 = vld [vmem:[%s3 + $0x38] sm:$0xff]
  %v489 = vld [vmem:[%s3 + $0x40] sm:$0xff]
  %v490 = vld [vmem:[%s3 + $0x48] sm:$0xff]
  %v491 = vld [vmem:[%s3 + $0x50] sm:$0xff]
  %v492 = vld [vmem:[%s3 + $0x58] sm:$0xff]
  %v493 = vld [vmem:[%s3 + $0x60] sm:$0xff]
  %v494 = vld [vmem:[%s3 + $0x68] sm:$0xff]
  %v495 = vld [vmem:[%s3 + $0x70] sm:$0xff]
  %v496 = vld [vmem:[%s3 + $0x78] sm:$0xff]
  %v497 = vld [vmem:[%s3 + $0x80] sm:$0xff]
  %v498 = vld [vmem:[%s3 + $0x88] sm:$0xff]
  %v499 = vld [vmem:[%s3 + $0x90] sm:$0xff]
  %v500 = vld [vmem:[%s3 + $0x98] sm:$0xff]
  %v501 = vld [vmem:[%s3 + $0xa0] sm:$0xff]
  %v502 = vld [vmem:[%s3 + $0xa8] sm:$0xff]
  %v503 = vld [vmem:[%s3 + $0xb0] sm:$0xff]
  %v504 = vld [vmem:[%s3 + $0xb8] sm:$0xff]
  %v505 = vld [vmem:[%s3 + $0xc0] sm:$0xff]
  %v506 = vld [vmem:[%s3 + $0xc8] sm:$0xff]
  %v507 = vld [vmem:[%s3 + $0xd0] sm:$0xff]
  %v508 = vld [vmem:[%s3 + $0xd8] sm:$0xff]
  %v509 = vld [vmem:[%s3 + $0xe0] sm:$0xff]
  %v510 = vld [vmem:[%s3 + $0xe8] sm:$0xff]
  %v511 = vld [vmem:[%s3 + $0xf0] sm:$0xff]
  %v512 = vld [vmem:[%s3 + $0xf8] sm:$0xff]
  %v513 = vld [vmem:[%s3 + $0x100] sm:$0xff]
  %v514 = vld [vmem:[%s3 + $0x108] sm:$0xff]
  %v515 = vld [vmem:[%s3 + $0x110] sm:$0xff]
  %v516 = vld [vmem:[%s3 + $0x118] sm:$0xff]
  %v517 = vld [vmem:[%s3 + $0x120] sm:$0xff]
  %v518 = vld [vmem:[%s3 + $0x128] sm:$0xff]
  %v519 = vld [vmem:[%s3 + $0x130] sm:$0xff]
  %v520 = vld [vmem:[%s3 + $0x138] sm:$0xff]
  %v521 = vld [vmem:[%s3 + $0x140] sm:$0xff]
  %v522 = vld [vmem:[%s3 + $0x148] sm:$0xff]
  %v523 = vld [vmem:[%s3 + $0x150] sm:$0xff]
  %v524 = vld [vmem:[%s3 + $0x158] sm:$0xff]
  %v525 = vld [vmem:[%s3 + $0x160] sm:$0xff]
  %v526 = vld [vmem:[%s3 + $0x168] sm:$0xff]
  %v527 = vld [vmem:[%s3 + $0x170] sm:$0xff]
  %v528 = vld [vmem:[%s3 + $0x178] sm:$0xff]
  %v529 = vld [vmem:[%s5] sm:$0x1]
  %v530 = vld [vmem:[%s7] sm:$0xff]
  %v531 = vld [vmem:[%s7 + $0x8] sm:$0xff]
  %532 = vmatprep.subr.mxu0 %v482
  %533 = vmatpush1.msra.mxu0 %v481
  %534 = vmatprep.subr.mxu0 %v485
  %535 = vmatpush1.msra.mxu0 %v484
  %536 = vmatprep.subr.mxu0 %v488
  %537 = vmatpush1.msra.mxu0 %v487
  %538 = vmatprep.subr.mxu0 %v491
  %539 = vmatpush1.msra.mxu0 %v490
  %540 = vmatprep.subr.mxu0 %v494
  %541 = vmatpush1.msra.mxu0 %v493
  %542 = vmatprep.subr.mxu0 %v497
  %543 = vmatpush1.msra.mxu0 %v496
  %544 = vmatprep.subr.mxu0 %v500
  %545 = vmatpush1.msra.mxu0 %v499
  %546 = vmatprep.subr.mxu0 %v503
  %547 = vmatpush1.msra.mxu0 %v502
  %548 = vmatprep.subr.mxu0 %v506
  %549 = vmatpush1.msra.mxu0 %v505
  %550 = vmatprep.subr.mxu0 %v509
  %551 = vmatpush1.msra.mxu0 %v508
  %552 = vmatprep.subr.mxu0 %v512
  %553 = vmatpush1.msra.mxu0 %v511
  %554 = vmatprep.subr.mxu0 %v515
  %555 = vmatpush1.msra.mxu0 %v514
  %556 = vmatprep.subr.mxu0 %v518
  %557 = vmatpush1.msra.mxu0 %v517
  %558 = vmatprep.subr.mxu0 %v521
  %559 = vmatpush1.msra.mxu0 %v520
  %560 = vmatprep.subr.mxu0 %v524
  %561 = vmatpush1.msra.mxu0 %v523
  %562 = vmatprep.subr.mxu0 %v527
  %563 = vmatpush1.msra.mxu0 %v526
  %564 = vmatprep.subr.mxu0 0.0
  %565 = vmatpush1.msra.mxu0 0.0
  %566 = vmatprep.subr.mxu0 0.0
  %567 = vmatpush1.msra.mxu0 0.0
  %568 = vmatprep.subr.mxu0 0.0
  %569 = vmatpush1.msra.mxu0 0.0
  %570 = vmatprep.subr.mxu0 0.0
  %571 = vmatpush1.msra.mxu0 0.0
  %572 = vmatprep.subr.mxu0 0.0
  %573 = vmatpush1.msra.mxu0 0.0
  %574 = vmatprep.subr.mxu0 0.0
  %575 = vmatpush1.msra.mxu0 0.0
  %576 = vmatprep.subr.mxu0 0.0
  %577 = vmatpush1.msra.mxu0 0.0
  %578 = vmatprep.subr.mxu0 0.0
  %579 = vmatpush1.msra.mxu0 0.0
  %580 = vmatprep.subr.mxu0 0.0
  %581 = vmatpush1.msra.mxu0 0.0
  %582 = vmatprep.subr.mxu0 0.0
  %583 = vmatpush1.msra.mxu0 0.0
  %584 = vmatprep.subr.mxu0 0.0
  %585 = vmatpush1.msra.mxu0 0.0
  %586 = vmatprep.subr.mxu0 0.0
  %587 = vmatpush1.msra.mxu0 0.0
  %588 = vmatprep.subr.mxu0 0.0
  %589 = vmatpush1.msra.mxu0 0.0
  %590 = vmatprep.subr.mxu0 0.0
  %591 = vmatpush1.msra.mxu0 0.0
  %592 = vmatprep.subr.mxu0 0.0
  %593 = vmatpush1.msra.mxu0 0.0
  %594 = vmatprep.subr.mxu0 0.0
  %595 = vmatpush1.msra.mxu0 0.0
  %596 = vmatprep.mubr.f32.mxu0 0.0
  %597 = vmatmul.mubr.f32.gmra.mrb[0].mxu0 %v530
  %v598 = vpop.f32.mrb[0].mxu0
  %v599 = vadd.f32 0.0, %v598
  %v600 = vpop.f32.mrb[0].mxu0
  %v601 = vadd.f32 0.0, %v600
  %602 = vmatprep.mubr.f32.mxu0 0.0
  %603 = vmatmul.mubr.f32.gmra.mrb[0].mxu0 %v531
  %v604 = vpop.f32.mrb[0].mxu0
  %v605 = vadd.f32 0.0, %v604
  %v606 = vpop.f32.mrb[0].mxu0
  %v607 = vadd.f32 0.0, %v606
  %608 = vdwg.mxu0
  %609 = vmatprep.subr.mxu0 0.0
  %610 = vmatpush1.msra.mxu0 %v483
  %611 = vmatprep.subr.mxu0 0.0
  %612 = vmatpush1.msra.mxu0 %v486
  %613 = vmatprep.subr.mxu0 0.0
  %614 = vmatpush1.msra.mxu0 %v489
  %615 = vmatprep.subr.mxu0 0.0
  %616 = vmatpush1.msra.mxu0 %v492
  %617 = vmatprep.subr.mxu0 0.0
  %618 = vmatpush1.msra.mxu0 %v495
  %619 = vmatprep.subr.mxu0 0.0
  %620 = vmatpush1.msra.mxu0 %v498
  %621 = vmatprep.subr.mxu0 0.0
  %622 = vmatpush1.msra.mxu0 %v501
  %623 = vmatprep.subr.mxu0 0.0
  %624 = vmatpush1.msra.mxu0 %v504
  %625 = vmatprep.subr.mxu0 0.0
  %626 = vmatpush1.msra.mxu0 %v507
  %627 = vmatprep.subr.mxu0 0.0
  %628 = vmatpush1.msra.mxu0 %v510
  %629 = vmatprep.subr.mxu0 0.0
  %630 = vmatpush1.msra.mxu0 %v513
  %631 = vmatprep.subr.mxu0 0.0
  %632 = vmatpush1.msra.mxu0 %v516
  %633 = vmatprep.subr.mxu0 0.0
  %634 = vmatpush1.msra.mxu0 %v519
  %635 = vmatprep.subr.mxu0 0.0
  %636 = vmatpush1.msra.mxu0 %v522
  %637 = vmatprep.subr.mxu0 0.0
  %638 = vmatpush1.msra.mxu0 %v525
  %639 = vmatprep.subr.mxu0 0.0
  %640 = vmatpush1.msra.mxu0 %v528
  %641 = vmatprep.subr.mxu0 0.0
  %642 = vmatpush1.msra.mxu0 0.0
  %643 = vmatprep.subr.mxu0 0.0
  %644 = vmatpush1.msra.mxu0 0.0
  %645 = vmatprep.subr.mxu0 0.0
  %646 = vmatpush1.msra.mxu0 0.0
  %647 = vmatprep.subr.mxu0 0.0
  %648 = vmatpush1.msra.mxu0 0.0
  %649 = vmatprep.subr.mxu0 0.0
  %650 = vmatpush1.msra.mxu0 0.0
  %651 = vmatprep.subr.mxu0 0.0
  %652 = vmatpush1.msra.mxu0 0.0
  %653 = vmatprep.subr.mxu0 0.0
  %654 = vmatpush1.msra.mxu0 0.0
  %655 = vmatprep.subr.mxu0 0.0
  %656 = vmatpush1.msra.mxu0 0.0
  %657 = vmatprep.subr.mxu0 0.0
  %658 = vmatpush1.msra.mxu0 0.0
  %659 = vmatprep.subr.mxu0 0.0
  %660 = vmatpush1.msra.mxu0 0.0
  %661 = vmatprep.subr.mxu0 0.0
  %662 = vmatpush1.msra.mxu0 0.0
  %663 = vmatprep.subr.mxu0 0.0
  %664 = vmatpush1.msra.mxu0 0.0
  %665 = vmatprep.subr.mxu0 0.0
  %666 = vmatpush1.msra.mxu0 0.0
  %667 = vmatprep.subr.mxu0 0.0
  %668 = vmatpush1.msra.mxu0 0.0
  %669 = vmatprep.subr.mxu0 0.0
  %670 = vmatpush1.msra.mxu0 0.0
  %671 = vmatprep.subr.mxu0 0.0
  %672 = vmatpush1.msra.mxu0 0.0
  %673 = vmatprep.mubr.f32.mxu0 0.0
  %674 = vmatmul.mubr.f32.gmra.mrb[0].mxu0 %v530
  %v675 = vpop.f32.mrb[0].mxu0
  %v676 = vadd.f32 0.0, %v675
  %v677 = vpop.f32.mrb[0].mxu0
  %678 = vmatprep.mubr.f32.mxu0 0.0
  %679 = vmatmul.mubr.f32.gmra.mrb[0].mxu0 %v531
  %v680 = vpop.f32.mrb[0].mxu0
  %v681 = vadd.f32 0.0, %v680
  %v682 = vpop.f32.mrb[0].mxu0
  %683 = vdwg.mxu0
  %s684 = smul.u32 0, 3
  %s685 = smul.addr %s684, 8
  %s686 = scalar_lea.vmem [#allocation2], %s685
  %v687 = vld [vmem:[%s686] sm:$0xff]
  %v688 = vld [vmem:[%s686 + $0x8] sm:$0xff]
  %v689 = vld [vmem:[%s686 + $0x10] sm:$0xff]
  %v690 = vld [vmem:[%s686 + $0x18] sm:$0xff]
  %v691 = vld [vmem:[%s686 + $0x20] sm:$0xff]
  %v692 = vld [vmem:[%s686 + $0x28] sm:$0xff]
  %v693 = vadd.f32 %v687, %v599
  %v694 = vadd.f32 %v690, %v605
  %v695 = vsub.f32 0.0, %v693
  %v696 = vsub.f32 0.0, %v694
  %v697 = vmul.f32 %v695, 1.442695
  %v698 = vpow.pop %v697
  %v699 = vmul.f32 %v696, 1.442695
  %v700 = vpow.pop %v699
  %v701 = vadd.f32 %v698, 1.0
  %v702 = vadd.f32 %v700, 1.0
  %v703 = vrcp.pop %v701
  %v704 = vmul.f32 1.0, %v703
  %v705 = vrcp.pop %v702
  %v706 = vmul.f32 1.0, %v705
  %v707 = vadd.f32 %v688, %v601
  %v708 = vadd.f32 %v691, %v607
  %v709 = vsub.f32 0.0, %v707
  %v710 = vsub.f32 0.0, %v708
  %v711 = vmul.f32 %v709, 1.442695
  %v712 = vpow.pop %v711
  %v713 = vmul.f32 %v710, 1.442695
  %v714 = vpow.pop %v713
  %v715 = vadd.f32 %v712, 1.0
  %v716 = vadd.f32 %v714, 1.0
  %v717 = vrcp.pop %v715
  %v718 = vmul.f32 1.0, %v717
  %v719 = vrcp.pop %v716
  %v720 = vmul.f32 1.0, %v719
  %v722 = vlaneseq
  %v723 = vshrl.u32 %v722, 7
  %v724 = vsub.s32 0, %v723
  %v725 = vrot.slane %v529, %v724
  %v727 = vadd.f32 %v676, %v725
  %v728 = vadd.f32 %v681, %v725
  %v729 = vmul.f32 %v704, %v727
  %v730 = vmul.f32 %v706, %v728
  %v731 = vadd.f32 %v689, %v729
  %v732 = vadd.f32 %v692, %v730
  %v733 = vtanh.pop %v731
  %v734 = vtanh.pop %v732
  %v735 = vsub.f32 %v530, %v733
  %v736 = vsub.f32 %v531, %v734
  %v737 = vmul.f32 %v718, %v735
  %v738 = vmul.f32 %v720, %v736
  %v739 = vadd.f32 %v733, %v737
  %v740 = vadd.f32 %v734, %v738
  %741 = vst [vmem:[%s6] sm:$0xff] %v739
  %742 = vst [vmem:[%s6 + $0x8] sm:$0xff] %v740
  %743 = vmatprep.subr.mxu0 %v482
  %744 = vmatpush1.msra.mxu0 %v481
  %745 = vmatprep.subr.mxu0 %v485
  %746 = vmatpush1.msra.mxu0 %v484
  %747 = vmatprep.subr.mxu0 %v488
  %748 = vmatpush1.msra.mxu0 %v487
  %749 = vmatprep.subr.mxu0 %v491
  %750 = vmatpush1.msra.mxu0 %v490
  %751 = vmatprep.subr.mxu0 %v494
  %752 = vmatpush1.msra.mxu0 %v493
  %753 = vmatprep.subr.mxu0 %v497
  %754 = vmatpush1.msra.mxu0 %v496
  %755 = vmatprep.subr.mxu0 %v500
  %756 = vmatpush1.msra.mxu0 %v499
  %757 = vmatprep.subr.mxu0 %v503
  %758 = vmatpush1.msra.mxu0 %v502
  %759 = vmatprep.subr.mxu0 %v506
  %760 = vmatpush1.msra.mxu0 %v505
  %761 = vmatprep.subr.mxu0 %v509
  %762 = vmatpush1.msra.mxu0 %v508
  %763 = vmatprep.subr.mxu0 %v512
  %764 = vmatpush1.msra.mxu0 %v511
  %765 = vmatprep.subr.mxu0 %v515
  %766 = vmatpush1.msra.mxu0 %v514
  %767 = vmatprep.subr.mxu0 %v518
  %768 = vmatpush1.msra.mxu0 %v517
  %769 = vmatprep.subr.mxu0 %v521
  %770 = vmatpush1.msra.mxu0 %v520
  %771 = vmatprep.subr.mxu0 %v524
  %772 = vmatpush1.msra.mxu0 %v523
  %773 = vmatprep.subr.mxu0 %v527
  %774 = vmatpush1.msra.mxu0 %v526
  %775 = vmatprep.subr.mxu0 0.0
  %776 = vmatpush1.msra.mxu0 0.0
  %777 = vmatprep.subr.mxu0 0.0
  %778 = vmatpush1.msra.mxu0 0.0
  %779 = vmatprep.subr.mxu0 0.0
  %780 = vmatpush1.msra.mxu0 0.0
  %781 = vmatprep.subr.mxu0 0.0
  %782 = vmatpush1.msra.mxu0 0.0
  %783 = vmatprep.subr.mxu0 0.0
  %784 = vmatpush1.msra.mxu0 0.0
  %785 = vmatprep.subr.mxu0 0.0
  %786 = vmatpush1.msra.mxu0 0.0
  %787 = vmatprep.subr.mxu0 0.0
  %788 = vmatpush1.msra.mxu0 0.0
  %789 = vmatprep.subr.mxu0 0.0
  %790 = vmatpush1.msra.mxu0 0.0
  %791 = vmatprep.subr.mxu0 0.0
  %792 = vmatpush1.msra.mxu0 0.0
  %793 = vmatprep.subr.mxu0 0.0
  %794 = vmatpush1.msra.mxu0 0.0
  %795 = vmatprep.subr.mxu0 0.0
  %796 = vmatpush1.msra.mxu0 0.0
  %797 = vmatprep.subr.mxu0 0.0
  %798 = vmatpush1.msra.mxu0 0.0
  %799 = vmatprep.subr.mxu0 0.0
  %800 = vmatpush1.msra.mxu0 0.0
  %801 = vmatprep.subr.mxu0 0.0
  %802 = vmatpush1.msra.mxu0 0.0
  %803 = vmatprep.subr.mxu0 0.0
  %804 = vmatpush1.msra.mxu0 0.0
  %805 = vmatprep.subr.mxu0 0.0
  %806 = vmatpush1.msra.mxu0 0.0
  %807 = vmatprep.mubr.f32.mxu0 0.0
  %808 = vmatmul.mubr.f32.gmra.mrb[0].mxu0 %v739
  %v809 = vpop.f32.mrb[0].mxu0
  %v810 = vadd.f32 0.0, %v809
  %v811 = vpop.f32.mrb[0].mxu0
  %v812 = vadd.f32 0.0, %v811
  %813 = vmatprep.mubr.f32.mxu0 0.0
  %814 = vmatmul.mubr.f32.gmra.mrb[0].mxu0 %v740
  %v815 = vpop.f32.mrb[0].mxu0
  %v816 = vadd.f32 0.0, %v815
  %v817 = vpop.f32.mrb[0].mxu0
  %v818 = vadd.f32 0.0, %v817
  %819 = vdwg.mxu0
  %820 = vmatprep.subr.mxu0 0.0
  %821 = vmatpush1.msra.mxu0 %v483
  %822 = vmatprep.subr.mxu0 0.0
  %823 = vmatpush1.msra.mxu0 %v486
  %824 = vmatprep.subr.mxu0 0.0
  %825 = vmatpush1.msra.mxu0 %v489
  %826 = vmatprep.subr.mxu0 0.0
  %827 = vmatpush1.msra.mxu0 %v492
  %828 = vmatprep.subr.mxu0 0.0
  %829 = vmatpush1.msra.mxu0 %v495
  %830 = vmatprep.subr.mxu0 0.0
  %831 = vmatpush1.msra.mxu0 %v498
  %832 = vmatprep.subr.mxu0 0.0
  %833 = vmatpush1.msra.mxu0 %v501
  %834 = vmatprep.subr.mxu0 0.0
  %835 = vmatpush1.msra.mxu0 %v504
  %836 = vmatprep.subr.mxu0 0.0
  %837 = vmatpush1.msra.mxu0 %v507
  %838 = vmatprep.subr.mxu0 0.0
  %839 = vmatpush1.msra.mxu0 %v510
  %840 = vmatprep.subr.mxu0 0.0
  %841 = vmatpush1.msra.mxu0 %v513
  %842 = vmatprep.subr.mxu0 0.0
  %843 = vmatpush1.msra.mxu0 %v516
  %844 = vmatprep.subr.mxu0 0.0
  %845 = vmatpush1.msra.mxu0 %v519
  %846 = vmatprep.subr.mxu0 0.0
  %847 = vmatpush1.msra.mxu0 %v522
  %848 = vmatprep.subr.mxu0 0.0
  %849 = vmatpush1.msra.mxu0 %v525
  %850 = vmatprep.subr.mxu0 0.0
  %851 = vmatpush1.msra.mxu0 %v528
  %852 = vmatprep.subr.mxu0 0.0
  %853 = vmatpush1.msra.mxu0 0.0
  %854 = vmatprep.subr.mxu0 0.0
  %855 = vmatpush1.msra.mxu0 0.0
  %856 = vmatprep.subr.mxu0 0.0
  %857 = vmatpush1.msra.mxu0 0.0
  %858 = vmatprep.subr.mxu0 0.0
  %859 = vmatpush1.msra.mxu0 0.0
  %860 = vmatprep.subr.mxu0 0.0
  %861 = vmatpush1.msra.mxu0 0.0
  %862 = vmatprep.subr.mxu0 0.0
  %863 = vmatpush1.msra.mxu0 0.0
  %864 = vmatprep.subr.mxu0 0.0
  %865 = vmatpush1.msra.mxu0 0.0
  %866 = vmatprep.subr.mxu0 0.0
  %867 = vmatpush1.msra.mxu0 0.0
  %868 = vmatprep.subr.mxu0 0.0
  %869 = vmatpush1.msra.mxu0 0.0
  %870 = vmatprep.subr.mxu0 0.0
  %871 = vmatpush1.msra.mxu0 0.0
  %872 = vmatprep.subr.mxu0 0.0
  %873 = vmatpush1.msra.mxu0 0.0
  %874 = vmatprep.subr.mxu0 0.0
  %875 = vmatpush1.msra.mxu0 0.0
  %876 = vmatprep.subr.mxu0 0.0
  %877 = vmatpush1.msra.mxu0 0.0
  %878 = vmatprep.subr.mxu0 0.0
  %879 = vmatpush1.msra.mxu0 0.0
  %880 = vmatprep.subr.mxu0 0.0
  %881 = vmatpush1.msra.mxu0 0.0
  %882 = vmatprep.subr.mxu0 0.0
  %883 = vmatpush1.msra.mxu0 0.0
  %884 = vmatprep.mubr.f32.mxu0 0.0
  %885 = vmatmul.mubr.f32.gmra.mrb[0].mxu0 %v739
  %v886 = vpop.f32.mrb[0].mxu0
  %v887 = vadd.f32 0.0, %v886
  %v888 = vpop.f32.mrb[0].mxu0
  %889 = vmatprep.mubr.f32.mxu0 0.0
  %890 = vmatmul.mubr.f32.gmra.mrb[0].mxu0 %v740
  %v891 = vpop.f32.mrb[0].mxu0
  %v892 = vadd.f32 0.0, %v891
  %v893 = vpop.f32.mrb[0].mxu0
  %894 = vdwg.mxu0
  %s895 = smul.u32 2, 3
  %s896 = smul.addr %s895, 8
  %s897 = scalar_lea.vmem [#allocation2], %s896
  %v898 = vld [vmem:[%s897] sm:$0xff]
  %v899 = vld [vmem:[%s897 + $0x8] sm:$0xff]
  %v900 = vld [vmem:[%s897 + $0x10] sm:$0xff]
  %v901 = vld [vmem:[%s897 + $0x18] sm:$0xff]
  %v902 = vld [vmem:[%s897 + $0x20] sm:$0xff]
  %v903 = vld [vmem:[%s897 + $0x28] sm:$0xff]
  %v904 = vadd.f32 %v898, %v810
  %v905 = vadd.f32 %v901, %v816
  %v906 = vsub.f32 0.0, %v904
  %v907 = vsub.f32 0.0, %v905
  %v908 = vmul.f32 %v906, 1.442695
  %v909 = vpow.pop %v908
  %v910 = vmul.f32 %v907, 1.442695
  %v911 = vpow.pop %v910
  %v912 = vadd.f32 %v909, 1.0
  %v913 = vadd.f32 %v911, 1.0
  %v914 = vrcp.pop %v912
  %v915 = vmul.f32 1.0, %v914
  %v916 = vrcp.pop %v913
  %v917 = vmul.f32 1.0, %v916
  %v918 = vadd.f32 %v899, %v812
  %v919 = vadd.f32 %v902, %v818
  %v920 = vsub.f32 0.0, %v918
  %v921 = vsub.f32 0.0, %v919
  %v922 = vmul.f32 %v920, 1.442695
  %v923 = vpow.pop %v922
  %v924 = vmul.f32 %v921, 1.442695
  %v925 = vpow.pop %v924
  %v926 = vadd.f32 %v923, 1.0
  %v927 = vadd.f32 %v925, 1.0
  %v928 = vrcp.pop %v926
  %v929 = vmul.f32 1.0, %v928
  %v930 = vrcp.pop %v927
  %v931 = vmul.f32 1.0, %v930
  %v932 = vadd.f32 %v887, %v725
  %v933 = vadd.f32 %v892, %v725
  %v934 = vmul.f32 %v915, %v932
  %v935 = vmul.f32 %v917, %v933
  %v936 = vadd.f32 %v900, %v934
  %v937 = vadd.f32 %v903, %v935
  %v938 = vtanh.pop %v936
  %v939 = vtanh.pop %v937
  %v940 = vsub.f32 %v739, %v938
  %v941 = vsub.f32 %v740, %v939
  %v942 = vmul.f32 %v929, %v940
  %v943 = vmul.f32 %v931, %v941
  %v944 = vadd.f32 %v938, %v942
  %v945 = vadd.f32 %v939, %v943
  %s946 = scalar_lea.vmem %s6, 16
  %947 = vst [vmem:[%s946] sm:$0xff] %v944
  %948 = vst [vmem:[%s946 + $0x8] sm:$0xff] %v945
  %949 = vmatprep.subr.mxu0 %v482
  %950 = vmatpush1.msra.mxu0 %v481
  %951 = vmatprep.subr.mxu0 %v485
  %952 = vmatpush1.msra.mxu0 %v484
  %953 = vmatprep.subr.mxu0 %v488
  %954 = vmatpush1.msra.mxu0 %v487
  %955 = vmatprep.subr.mxu0 %v491
  %956 = vmatpush1.msra.mxu0 %v490
  %957 = vmatprep.subr.mxu0 %v494
  %958 = vmatpush1.msra.mxu0 %v493
  %959 = vmatprep.subr.mxu0 %v497
  %960 = vmatpush1.msra.mxu0 %v496
  %961 = vmatprep.subr.mxu0 %v500
  %962 = vmatpush1.msra.mxu0 %v499
  %963 = vmatprep.subr.mxu0 %v503
  %964 = vmatpush1.msra.mxu0 %v502
  %965 = vmatprep.subr.mxu0 %v506
  %966 = vmatpush1.msra.mxu0 %v505
  %967 = vmatprep.subr.mxu0 %v509
  %968 = vmatpush1.msra.mxu0 %v508
  %969 = vmatprep.subr.mxu0 %v512
  %970 = vmatpush1.msra.mxu0 %v511
  %971 = vmatprep.subr.mxu0 %v515
  %972 = vmatpush1.msra.mxu0 %v514
  %973 = vmatprep.subr.mxu0 %v518
  %974 = vmatpush1.msra.mxu0 %v517
  %975 = vmatprep.subr.mxu0 %v521
  %976 = vmatpush1.msra.mxu0 %v520
  %977 = vmatprep.subr.mxu0 %v524
  %978 = vmatpush1.msra.mxu0 %v523
  %979 = vmatprep.subr.mxu0 %v527
  %980 = vmatpush1.msra.mxu0 %v526
  %981 = vmatprep.subr.mxu0 0.0
  %982 = vmatpush1.msra.mxu0 0.0
  %983 = vmatprep.subr.mxu0 0.0
  %984 = vmatpush1.msra.mxu0 0.0
  %985 = vmatprep.subr.mxu0 0.0
  %986 = vmatpush1.msra.mxu0 0.0
  %987 = vmatprep.subr.mxu0 0.0
  %988 = vmatpush1.msra.mxu0 0.0
  %989 = vmatprep.subr.mxu0 0.0
  %990 = vmatpush1.msra.mxu0 0.0
  %991 = vmatprep.subr.mxu0 0.0
  %992 = vmatpush1.msra.mxu0 0.0
  %993 = vmatprep.subr.mxu0 0.0
  %994 = vmatpush1.msra.mxu0 0.0
  %995 = vmatprep.subr.mxu0 0.0
  %996 = vmatpush1.msra.mxu0 0.0
  %997 = vmatprep.subr.mxu0 0.0
  %998 = vmatpush1.msra.mxu0 0.0
  %999 = vmatprep.subr.mxu0 0.0
  %1000 = vmatpush1.msra.mxu0 0.0
  %1001 = vmatprep.subr.mxu0 0.0
  %1002 = vmatpush1.msra.mxu0 0.0
  %1003 = vmatprep.subr.mxu0 0.0
  %1004 = vmatpush1.msra.mxu0 0.0
  %1005 = vmatprep.subr.mxu0 0.0
  %1006 = vmatpush1.msra.mxu0 0.0
  %1007 = vmatprep.subr.mxu0 0.0
  %1008 = vmatpush1.msra.mxu0 0.0
  %1009 = vmatprep.subr.mxu0 0.0
  %1010 = vmatpush1.msra.mxu0 0.0
  %1011 = vmatprep.subr.mxu0 0.0
  %1012 = vmatpush1.msra.mxu0 0.0
  %1013 = vmatprep.mubr.f32.mxu0 0.0
  %1014 = vmatmul.mubr.f32.gmra.mrb[0].mxu0 %v944
  %v1015 = vpop.f32.mrb[0].mxu0
  %v1016 = vadd.f32 0.0, %v1015
  %v1017 = vpop.f32.mrb[0].mxu0
  %v1018 = vadd.f32 0.0, %v1017
  %1019 = vmatprep.mubr.f32.mxu0 0.0
  %1020 = vmatmul.mubr.f32.gmra.mrb[0].mxu0 %v945
  %v1021 = vpop.f32.mrb[0].mxu0
  %v1022 = vadd.f32 0.0, %v1021
  %v1023 = vpop.f32.mrb[0].mxu0
  %v1024 = vadd.f32 0.0, %v1023
  %1025 = vdwg.mxu0
  %1026 = vmatprep.subr.mxu0 0.0
  %1027 = vmatpush1.msra.mxu0 %v483
  %1028 = vmatprep.subr.mxu0 0.0
  %1029 = vmatpush1.msra.mxu0 %v486
  %1030 = vmatprep.subr.mxu0 0.0
  %1031 = vmatpush1.msra.mxu0 %v489
  %1032 = vmatprep.subr.mxu0 0.0
  %1033 = vmatpush1.msra.mxu0 %v492
  %1034 = vmatprep.subr.mxu0 0.0
  %1035 = vmatpush1.msra.mxu0 %v495
  %1036 = vmatprep.subr.mxu0 0.0
  %1037 = vmatpush1.msra.mxu0 %v498
  %1038 = vmatprep.subr.mxu0 0.0
  %1039 = vmatpush1.msra.mxu0 %v501
  %1040 = vmatprep.subr.mxu0 0.0
  %1041 = vmatpush1.msra.mxu0 %v504
  %1042 = vmatprep.subr.mxu0 0.0
  %1043 = vmatpush1.msra.mxu0 %v507
  %1044 = vmatprep.subr.mxu0 0.0
  %1045 = vmatpush1.msra.mxu0 %v510
  %1046 = vmatprep.subr.mxu0 0.0
  %1047 = vmatpush1.msra.mxu0 %v513
  %1048 = vmatprep.subr.mxu0 0.0
  %1049 = vmatpush1.msra.mxu0 %v516
  %1050 = vmatprep.subr.mxu0 0.0
  %1051 = vmatpush1.msra.mxu0 %v519
  %1052 = vmatprep.subr.mxu0 0.0
  %1053 = vmatpush1.msra.mxu0 %v522
  %1054 = vmatprep.subr.mxu0 0.0
  %1055 = vmatpush1.msra.mxu0 %v525
  %1056 = vmatprep.subr.mxu0 0.0
  %1057 = vmatpush1.msra.mxu0 %v528
  %1058 = vmatprep.subr.mxu0 0.0
  %1059 = vmatpush1.msra.mxu0 0.0
  %1060 = vmatprep.subr.mxu0 0.0
  %1061 = vmatpush1.msra.mxu0 0.0
  %1062 = vmatprep.subr.mxu0 0.0
  %1063 = vmatpush1.msra.mxu0 0.0
  %1064 = vmatprep.subr.mxu0 0.0
  %1065 = vmatpush1.msra.mxu0 0.0
  %1066 = vmatprep.subr.mxu0 0.0
  %1067 = vmatpush1.msra.mxu0 0.0
  %1068 = vmatprep.subr.mxu0 0.0
  %1069 = vmatpush1.msra.mxu0 0.0
  %1070 = vmatprep.subr.mxu0 0.0
  %1071 = vmatpush1.msra.mxu0 0.0
  %1072 = vmatprep.subr.mxu0 0.0
  %1073 = vmatpush1.msra.mxu0 0.0
  %1074 = vmatprep.subr.mxu0 0.0
  %1075 = vmatpush1.msra.mxu0 0.0
  %1076 = vmatprep.subr.mxu0 0.0
  %1077 = vmatpush1.msra.mxu0 0.0
  %1078 = vmatprep.subr.mxu0 0.0
  %1079 = vmatpush1.msra.mxu0 0.0
  %1080 = vmatprep.subr.mxu0 0.0
  %1081 = vmatpush1.msra.mxu0 0.0
  %1082 = vmatprep.subr.mxu0 0.0
  %1083 = vmatpush1.msra.mxu0 0.0
  %1084 = vmatprep.subr.mxu0 0.0
  %1085 = vmatpush1.msra.mxu0 0.0
  %1086 = vmatprep.subr.mxu0 0.0
  %1087 = vmatpush1.msra.mxu0 0.0
  %1088 = vmatprep.subr.mxu0 0.0
  %1089 = vmatpush1.msra.mxu0 0.0
  %1090 = vmatprep.mubr.f32.mxu0 0.0
  %1091 = vmatmul.mubr.f32.gmra.mrb[0].mxu0 %v944
  %v1092 = vpop.f32.mrb[0].mxu0
  %v1093 = vadd.f32 0.0, %v1092
  %v1094 = vpop.f32.mrb[0].mxu0
  %1095 = vmatprep.mubr.f32.mxu0 0.0
  %1096 = vmatmul.mubr.f32.gmra.mrb[0].mxu0 %v945
  %v1097 = vpop.f32.mrb[0].mxu0
  %v1098 = vadd.f32 0.0, %v1097
  %v1099 = vpop.f32.mrb[0].mxu0
  %1100 = vdwg.mxu0
  %s1101 = smul.u32 4, 3
  %s1102 = smul.addr %s1101, 8
  %s1103 = scalar_lea.vmem [#allocation2], %s1102
  %v1104 = vld [vmem:[%s1103] sm:$0xff]
  %v1105 = vld [vmem:[%s1103 + $0x8] sm:$0xff]
  %v1106 = vld [vmem:[%s1103 + $0x10] sm:$0xff]
  %v1107 = vld [vmem:[%s1103 + $0x18] sm:$0xff]
  %v1108 = vld [vmem:[%s1103 + $0x20] sm:$0xff]
  %v1109 = vld [vmem:[%s1103 + $0x28] sm:$0xff]
  %v1110 = vadd.f32 %v1104, %v1016
  %v1111 = vadd.f32 %v1107, %v1022
  %v1112 = vsub.f32 0.0, %v1110
  %v1113 = vsub.f32 0.0, %v1111
  %v1114 = vmul.f32 %v1112, 1.442695
  %v1115 = vpow.pop %v1114
  %v1116 = vmul.f32 %v1113, 1.442695
  %v1117 = vpow.pop %v1116
  %v1118 = vadd.f32 %v1115, 1.0
  %v1119 = vadd.f32 %v1117, 1.0
  %v1120 = vrcp.pop %v1118
  %v1121 = vmul.f32 1.0, %v1120
  %v1122 = vrcp.pop %v1119
  %v1123 = vmul.f32 1.0, %v1122
  %v1124 = vadd.f32 %v1105, %v1018
  %v1125 = vadd.f32 %v1108, %v1024
  %v1126 = vsub.f32 0.0, %v1124
  %v1127 = vsub.f32 0.0, %v1125
  %v1128 = vmul.f32 %v1126, 1.442695
  %v1129 = vpow.pop %v1128
  %v1130 = vmul.f32 %v1127, 1.442695
  %v1131 = vpow.pop %v1130
  %v1132 = vadd.f32 %v1129, 1.0
  %v1133 = vadd.f32 %v1131, 1.0
  %v1134 = vrcp.pop %v1132
  %v1135 = vmul.f32 1.0, %v1134
  %v1136 = vrcp.pop %v1133
  %v1137 = vmul.f32 1.0, %v1136
  %v1138 = vadd.f32 %v1093, %v725
  %v1139 = vadd.f32 %v1098, %v725
  %v1140 = vmul.f32 %v1121, %v1138
  %v1141 = vmul.f32 %v1123, %v1139
  %v1142 = vadd.f32 %v1106, %v1140
  %v1143 = vadd.f32 %v1109, %v1141
  %v1144 = vtanh.pop %v1142
  %v1145 = vtanh.pop %v1143
  %v1146 = vsub.f32 %v944, %v1144
  %v1147 = vsub.f32 %v945, %v1145
  %v1148 = vmul.f32 %v1135, %v1146
  %v1149 = vmul.f32 %v1137, %v1147
  %v1150 = vadd.f32 %v1144, %v1148
  %v1151 = vadd.f32 %v1145, %v1149
  %s1152 = scalar_lea.vmem %s6, 32
  %1153 = vst [vmem:[%s1152] sm:$0xff] %v1150
  %1154 = vst [vmem:[%s1152 + $0x8] sm:$0xff] %v1151
  %1155 = vmatprep.subr.mxu0 %v482
  %1156 = vmatpush1.msra.mxu0 %v481
  %1157 = vmatprep.subr.mxu0 %v485
  %1158 = vmatpush1.msra.mxu0 %v484
  %1159 = vmatprep.subr.mxu0 %v488
  %1160 = vmatpush1.msra.mxu0 %v487
  %1161 = vmatprep.subr.mxu0 %v491
  %1162 = vmatpush1.msra.mxu0 %v490
  %1163 = vmatprep.subr.mxu0 %v494
  %1164 = vmatpush1.msra.mxu0 %v493
  %1165 = vmatprep.subr.mxu0 %v497
  %1166 = vmatpush1.msra.mxu0 %v496
  %1167 = vmatprep.subr.mxu0 %v500
  %1168 = vmatpush1.msra.mxu0 %v499
  %1169 = vmatprep.subr.mxu0 %v503
  %1170 = vmatpush1.msra.mxu0 %v502
  %1171 = vmatprep.subr.mxu0 %v506
  %1172 = vmatpush1.msra.mxu0 %v505
  %1173 = vmatprep.subr.mxu0 %v509
  %1174 = vmatpush1.msra.mxu0 %v508
  %1175 = vmatprep.subr.mxu0 %v512
  %1176 = vmatpush1.msra.mxu0 %v511
  %1177 = vmatprep.subr.mxu0 %v515
  %1178 = vmatpush1.msra.mxu0 %v514
  %1179 = vmatprep.subr.mxu0 %v518
  %1180 = vmatpush1.msra.mxu0 %v517
  %1181 = vmatprep.subr.mxu0 %v521
  %1182 = vmatpush1.msra.mxu0 %v520
  %1183 = vmatprep.subr.mxu0 %v524
  %1184 = vmatpush1.msra.mxu0 %v523
  %1185 = vmatprep.subr.mxu0 %v527
  %1186 = vmatpush1.msra.mxu0 %v526
  %1187 = vmatprep.subr.mxu0 0.0
  %1188 = vmatpush1.msra.mxu0 0.0
  %1189 = vmatprep.subr.mxu0 0.0
  %1190 = vmatpush1.msra.mxu0 0.0
  %1191 = vmatprep.subr.mxu0 0.0
  %1192 = vmatpush1.msra.mxu0 0.0
  %1193 = vmatprep.subr.mxu0 0.0
  %1194 = vmatpush1.msra.mxu0 0.0
  %1195 = vmatprep.subr.mxu0 0.0
  %1196 = vmatpush1.msra.mxu0 0.0
  %1197 = vmatprep.subr.mxu0 0.0
  %1198 = vmatpush1.msra.mxu0 0.0
  %1199 = vmatprep.subr.mxu0 0.0
  %1200 = vmatpush1.msra.mxu0 0.0
  %1201 = vmatprep.subr.mxu0 0.0
  %1202 = vmatpush1.msra.mxu0 0.0
  %1203 = vmatprep.subr.mxu0 0.0
  %1204 = vmatpush1.msra.mxu0 0.0
  %1205 = vmatprep.subr.mxu0 0.0
  %1206 = vmatpush1.msra.mxu0 0.0
  %1207 = vmatprep.subr.mxu0 0.0
  %1208 = vmatpush1.msra.mxu0 0.0
  %1209 = vmatprep.subr.mxu0 0.0
  %1210 = vmatpush1.msra.mxu0 0.0
  %1211 = vmatprep.subr.mxu0 0.0
  %1212 = vmatpush1.msra.mxu0 0.0
  %1213 = vmatprep.subr.mxu0 0.0
  %1214 = vmatpush1.msra.mxu0 0.0
  %1215 = vmatprep.subr.mxu0 0.0
  %1216 = vmatpush1.msra.mxu0 0.0
  %1217 = vmatprep.subr.mxu0 0.0
  %1218 = vmatpush1.msra.mxu0 0.0
  %1219 = vmatprep.mubr.f32.mxu0 0.0
  %1220 = vmatmul.mubr.f32.gmra.mrb[0].mxu0 %v1150
  %v1221 = vpop.f32.mrb[0].mxu0
  %v1222 = vadd.f32 0.0, %v1221
  %v1223 = vpop.f32.mrb[0].mxu0
  %v1224 = vadd.f32 0.0, %v1223
  %1225 = vmatprep.mubr.f32.mxu0 0.0
  %1226 = vmatmul.mubr.f32.gmra.mrb[0].mxu0 %v1151
  %v1227 = vpop.f32.mrb[0].mxu0
  %v1228 = vadd.f32 0.0, %v1227
  %v1229 = vpop.f32.mrb[0].mxu0
  %v1230 = vadd.f32 0.0, %v1229
  %1231 = vdwg.mxu0
  %1232 = vmatprep.subr.mxu0 0.0
  %1233 = vmatpush1.msra.mxu0 %v483
  %1234 = vmatprep.subr.mxu0 0.0
  %1235 = vmatpush1.msra.mxu0 %v486
  %1236 = vmatprep.subr.mxu0 0.0
  %1237 = vmatpush1.msra.mxu0 %v489
  %1238 = vmatprep.subr.mxu0 0.0
  %1239 = vmatpush1.msra.mxu0 %v492
  %1240 = vmatprep.subr.mxu0 0.0
  %1241 = vmatpush1.msra.mxu0 %v495
  %1242 = vmatprep.subr.mxu0 0.0
  %1243 = vmatpush1.msra.mxu0 %v498
  %1244 = vmatprep.subr.mxu0 0.0
  %1245 = vmatpush1.msra.mxu0 %v501
  %1246 = vmatprep.subr.mxu0 0.0
  %1247 = vmatpush1.msra.mxu0 %v504
  %1248 = vmatprep.subr.mxu0 0.0
  %1249 = vmatpush1.msra.mxu0 %v507
  %1250 = vmatprep.subr.mxu0 0.0
  %1251 = vmatpush1.msra.mxu0 %v510
  %1252 = vmatprep.subr.mxu0 0.0
  %1253 = vmatpush1.msra.mxu0 %v513
  %1254 = vmatprep.subr.mxu0 0.0
  %1255 = vmatpush1.msra.mxu0 %v516
  %1256 = vmatprep.subr.mxu0 0.0
  %1257 = vmatpush1.msra.mxu0 %v519
  %1258 = vmatprep.subr.mxu0 0.0
  %1259 = vmatpush1.msra.mxu0 %v522
  %1260 = vmatprep.subr.mxu0 0.0
  %1261 = vmatpush1.msra.mxu0 %v525
  %1262 = vmatprep.subr.mxu0 0.0
  %1263 = vmatpush1.msra.mxu0 %v528
  %1264 = vmatprep.subr.mxu0 0.0
  %1265 = vmatpush1.msra.mxu0 0.0
  %1266 = vmatprep.subr.mxu0 0.0
  %1267 = vmatpush1.msra.mxu0 0.0
  %1268 = vmatprep.subr.mxu0 0.0
  %1269 = vmatpush1.msra.mxu0 0.0
  %1270 = vmatprep.subr.mxu0 0.0
  %1271 = vmatpush1.msra.mxu0 0.0
  %1272 = vmatprep.subr.mxu0 0.0
  %1273 = vmatpush1.msra.mxu0 0.0
  %1274 = vmatprep.subr.mxu0 0.0
  %1275 = vmatpush1.msra.mxu0 0.0
  %1276 = vmatprep.subr.mxu0 0.0
  %1277 = vmatpush1.msra.mxu0 0.0
  %1278 = vmatprep.subr.mxu0 0.0
  %1279 = vmatpush1.msra.mxu0 0.0
  %1280 = vmatprep.subr.mxu0 0.0
  %1281 = vmatpush1.msra.mxu0 0.0
  %1282 = vmatprep.subr.mxu0 0.0
  %1283 = vmatpush1.msra.mxu0 0.0
  %1284 = vmatprep.subr.mxu0 0.0
  %1285 = vmatpush1.msra.mxu0 0.0
  %1286 = vmatprep.subr.mxu0 0.0
  %1287 = vmatpush1.msra.mxu0 0.0
  %1288 = vmatprep.subr.mxu0 0.0
  %1289 = vmatpush1.msra.mxu0 0.0
  %1290 = vmatprep.subr.mxu0 0.0
  %1291 = vmatpush1.msra.mxu0 0.0
  %1292 = vmatprep.subr.mxu0 0.0
  %1293 = vmatpush1.msra.mxu0 0.0
  %1294 = vmatprep.subr.mxu0 0.0
  %1295 = vmatpush1.msra.mxu0 0.0
  %1296 = vmatprep.mubr.f32.mxu0 0.0
  %1297 = vmatmul.mubr.f32.gmra.mrb[0].mxu0 %v1150
  %v1298 = vpop.f32.mrb[0].mxu0
  %v1299 = vadd.f32 0.0, %v1298
  %v1300 = vpop.f32.mrb[0].mxu0
  %1301 = vmatprep.mubr.f32.mxu0 0.0
  %1302 = vmatmul.mubr.f32.gmra.mrb[0].mxu0 %v1151
  %v1303 = vpop.f32.mrb[0].mxu0
  %v1304 = vadd.f32 0.0, %v1303
  %v1305 = vpop.f32.mrb[0].mxu0
  %1306 = vdwg.mxu0
  %s1307 = smul.u32 6, 3
  %s1308 = smul.addr %s1307, 8
  %s1309 = scalar_lea.vmem [#allocation2], %s1308
  %v1310 = vld [vmem:[%s1309] sm:$0xff]
  %v1311 = vld [vmem:[%s1309 + $0x8] sm:$0xff]
  %v1312 = vld [vmem:[%s1309 + $0x10] sm:$0xff]
  %v1313 = vld [vmem:[%s1309 + $0x18] sm:$0xff]
  %v1314 = vld [vmem:[%s1309 + $0x20] sm:$0xff]
  %v1315 = vld [vmem:[%s1309 + $0x28] sm:$0xff]
  %v1316 = vadd.f32 %v1310, %v1222
  %v1317 = vadd.f32 %v1313, %v1228
  %v1318 = vsub.f32 0.0, %v1316
  %v1319 = vsub.f32 0.0, %v1317
  %v1320 = vmul.f32 %v1318, 1.442695
  %v1321 = vpow.pop %v1320
  %v1322 = vmul.f32 %v1319, 1.442695
  %v1323 = vpow.pop %v1322
  %v1324 = vadd.f32 %v1321, 1.0
  %v1325 = vadd.f32 %v1323, 1.0
  %v1326 = vrcp.pop %v1324
  %v1327 = vmul.f32 1.0, %v1326
  %v1328 = vrcp.pop %v1325
  %v1329 = vmul.f32 1.0, %v1328
  %v1330 = vadd.f32 %v1311, %v1224
  %v1331 = vadd.f32 %v1314, %v1230
  %v1332 = vsub.f32 0.0, %v1330
  %v1333 = vsub.f32 0.0, %v1331
  %v1334 = vmul.f32 %v1332, 1.442695
  %v1335 = vpow.pop %v1334
  %v1336 = vmul.f32 %v1333, 1.442695
  %v1337 = vpow.pop %v1336
  %v1338 = vadd.f32 %v1335, 1.0
  %v1339 = vadd.f32 %v1337, 1.0
  %v1340 = vrcp.pop %v1338
  %v1341 = vmul.f32 1.0, %v1340
  %v1342 = vrcp.pop %v1339
  %v1343 = vmul.f32 1.0, %v1342
  %v1344 = vadd.f32 %v1299, %v725
  %v1345 = vadd.f32 %v1304, %v725
  %v1346 = vmul.f32 %v1327, %v1344
  %v1347 = vmul.f32 %v1329, %v1345
  %v1348 = vadd.f32 %v1312, %v1346
  %v1349 = vadd.f32 %v1315, %v1347
  %v1350 = vtanh.pop %v1348
  %v1351 = vtanh.pop %v1349
  %v1352 = vsub.f32 %v1150, %v1350
  %v1353 = vsub.f32 %v1151, %v1351
  %v1354 = vmul.f32 %v1341, %v1352
  %v1355 = vmul.f32 %v1343, %v1353
  %v1356 = vadd.f32 %v1350, %v1354
  %v1357 = vadd.f32 %v1351, %v1355
  %s1358 = scalar_lea.vmem %s6, 48
  %1359 = vst [vmem:[%s1358] sm:$0xff] %v1356
  %1360 = vst [vmem:[%s1358 + $0x8] sm:$0xff] %v1357
  %1361 = vmatprep.subr.mxu0 %v482
  %1362 = vmatpush1.msra.mxu0 %v481
  %1363 = vmatprep.subr.mxu0 %v485
  %1364 = vmatpush1.msra.mxu0 %v484
  %1365 = vmatprep.subr.mxu0 %v488
  %1366 = vmatpush1.msra.mxu0 %v487
  %1367 = vmatprep.subr.mxu0 %v491
  %1368 = vmatpush1.msra.mxu0 %v490
  %1369 = vmatprep.subr.mxu0 %v494
  %1370 = vmatpush1.msra.mxu0 %v493
  %1371 = vmatprep.subr.mxu0 %v497
  %1372 = vmatpush1.msra.mxu0 %v496
  %1373 = vmatprep.subr.mxu0 %v500
  %1374 = vmatpush1.msra.mxu0 %v499
  %1375 = vmatprep.subr.mxu0 %v503
  %1376 = vmatpush1.msra.mxu0 %v502
  %1377 = vmatprep.subr.mxu0 %v506
  %1378 = vmatpush1.msra.mxu0 %v505
  %1379 = vmatprep.subr.mxu0 %v509
  %1380 = vmatpush1.msra.mxu0 %v508
  %1381 = vmatprep.subr.mxu0 %v512
  %1382 = vmatpush1.msra.mxu0 %v511
  %1383 = vmatprep.subr.mxu0 %v515
  %1384 = vmatpush1.msra.mxu0 %v514
  %1385 = vmatprep.subr.mxu0 %v518
  %1386 = vmatpush1.msra.mxu0 %v517
  %1387 = vmatprep.subr.mxu0 %v521
  %1388 = vmatpush1.msra.mxu0 %v520
  %1389 = vmatprep.subr.mxu0 %v524
  %1390 = vmatpush1.msra.mxu0 %v523
  %1391 = vmatprep.subr.mxu0 %v527
  %1392 = vmatpush1.msra.mxu0 %v526
  %1393 = vmatprep.subr.mxu0 0.0
  %1394 = vmatpush1.msra.mxu0 0.0
  %1395 = vmatprep.subr.mxu0 0.0
  %1396 = vmatpush1.msra.mxu0 0.0
  %1397 = vmatprep.subr.mxu0 0.0
  %1398 = vmatpush1.msra.mxu0 0.0
  %1399 = vmatprep.subr.mxu0 0.0
  %1400 = vmatpush1.msra.mxu0 0.0
  %1401 = vmatprep.subr.mxu0 0.0
  %1402 = vmatpush1.msra.mxu0 0.0
  %1403 = vmatprep.subr.mxu0 0.0
  %1404 = vmatpush1.msra.mxu0 0.0
  %1405 = vmatprep.subr.mxu0 0.0
  %1406 = vmatpush1.msra.mxu0 0.0
  %1407 = vmatprep.subr.mxu0 0.0
  %1408 = vmatpush1.msra.mxu0 0.0
  %1409 = vmatprep.subr.mxu0 0.0
  %1410 = vmatpush1.msra.mxu0 0.0
  %1411 = vmatprep.subr.mxu0 0.0
  %1412 = vmatpush1.msra.mxu0 0.0
  %1413 = vmatprep.subr.mxu0 0.0
  %1414 = vmatpush1.msra.mxu0 0.0
  %1415 = vmatprep.subr.mxu0 0.0
  %1416 = vmatpush1.msra.mxu0 0.0
  %1417 = vmatprep.subr.mxu0 0.0
  %1418 = vmatpush1.msra.mxu0 0.0
  %1419 = vmatprep.subr.mxu0 0.0
  %1420 = vmatpush1.msra.mxu0 0.0
  %1421 = vmatprep.subr.mxu0 0.0
  %1422 = vmatpush1.msra.mxu0 0.0
  %1423 = vmatprep.subr.mxu0 0.0
  %1424 = vmatpush1.msra.mxu0 0.0
  %1425 = vmatprep.mubr.f32.mxu0 0.0
  %1426 = vmatmul.mubr.f32.gmra.mrb[0].mxu0 %v1356
  %v1427 = vpop.f32.mrb[0].mxu0
  %v1428 = vadd.f32 0.0, %v1427
  %v1429 = vpop.f32.mrb[0].mxu0
  %v1430 = vadd.f32 0.0, %v1429
  %1431 = vmatprep.mubr.f32.mxu0 0.0
  %1432 = vmatmul.mubr.f32.gmra.mrb[0].mxu0 %v1357
  %v1433 = vpop.f32.mrb[0].mxu0
  %v1434 = vadd.f32 0.0, %v1433
  %v1435 = vpop.f32.mrb[0].mxu0
  %v1436 = vadd.f32 0.0, %v1435
  %1437 = vdwg.mxu0
  %1438 = vmatprep.subr.mxu0 0.0
  %1439 = vmatpush1.msra.mxu0 %v483
  %1440 = vmatprep.subr.mxu0 0.0
  %1441 = vmatpush1.msra.mxu0 %v486
  %1442 = vmatprep.subr.mxu0 0.0
  %1443 = vmatpush1.msra.mxu0 %v489
  %1444 = vmatprep.subr.mxu0 0.0
  %1445 = vmatpush1.msra.mxu0 %v492
  %1446 = vmatprep.subr.mxu0 0.0
  %1447 = vmatpush1.msra.mxu0 %v495
  %1448 = vmatprep.subr.mxu0 0.0
  %1449 = vmatpush1.msra.mxu0 %v498
  %1450 = vmatprep.subr.mxu0 0.0
  %1451 = vmatpush1.msra.mxu0 %v501
  %1452 = vmatprep.subr.mxu0 0.0
  %1453 = vmatpush1.msra.mxu0 %v504
  %1454 = vmatprep.subr.mxu0 0.0
  %1455 = vmatpush1.msra.mxu0 %v507
  %1456 = vmatprep.subr.mxu0 0.0
  %1457 = vmatpush1.msra.mxu0 %v510
  %1458 = vmatprep.subr.mxu0 0.0
  %1459 = vmatpush1.msra.mxu0 %v513
  %1460 = vmatprep.subr.mxu0 0.0
  %1461 = vmatpush1.msra.mxu0 %v516
  %1462 = vmatprep.subr.mxu0 0.0
  %1463 = vmatpush1.msra.mxu0 %v519
  %1464 = vmatprep.subr.mxu0 0.0
  %1465 = vmatpush1.msra.mxu0 %v522
  %1466 = vmatprep.subr.mxu0 0.0
  %1467 = vmatpush1.msra.mxu0 %v525
  %1468 = vmatprep.subr.mxu0 0.0
  %1469 = vmatpush1.msra.mxu0 %v528
  %1470 = vmatprep.subr.mxu0 0.0
  %1471 = vmatpush1.msra.mxu0 0.0
  %1472 = vmatprep.subr.mxu0 0.0
  %1473 = vmatpush1.msra.mxu0 0.0
  %1474 = vmatprep.subr.mxu0 0.0
  %1475 = vmatpush1.msra.mxu0 0.0
  %1476 = vmatprep.subr.mxu0 0.0
  %1477 = vmatpush1.msra.mxu0 0.0
  %1478 = vmatprep.subr.mxu0 0.0
  %1479 = vmatpush1.msra.mxu0 0.0
  %1480 = vmatprep.subr.mxu0 0.0
  %1481 = vmatpush1.msra.mxu0 0.0
  %1482 = vmatprep.subr.mxu0 0.0
  %1483 = vmatpush1.msra.mxu0 0.0
  %1484 = vmatprep.subr.mxu0 0.0
  %1485 = vmatpush1.msra.mxu0 0.0
  %1486 = vmatprep.subr.mxu0 0.0
  %1487 = vmatpush1.msra.mxu0 0.0
  %1488 = vmatprep.subr.mxu0 0.0
  %1489 = vmatpush1.msra.mxu0 0.0
  %1490 = vmatprep.subr.mxu0 0.0
  %1491 = vmatpush1.msra.mxu0 0.0
  %1492 = vmatprep.subr.mxu0 0.0
  %1493 = vmatpush1.msra.mxu0 0.0
  %1494 = vmatprep.subr.mxu0 0.0
  %1495 = vmatpush1.msra.mxu0 0.0
  %1496 = vmatprep.subr.mxu0 0.0
  %1497 = vmatpush1.msra.mxu0 0.0
  %1498 = vmatprep.subr.mxu0 0.0
  %1499 = vmatpush1.msra.mxu0 0.0
  %1500 = vmatprep.subr.mxu0 0.0
  %1501 = vmatpush1.msra.mxu0 0.0
  %1502 = vmatprep.mubr.f32.mxu0 0.0
  %1503 = vmatmul.mubr.f32.gmra.mrb[0].mxu0 %v1356
  %v1504 = vpop.f32.mrb[0].mxu0
  %v1505 = vadd.f32 0.0, %v1504
  %v1506 = vpop.f32.mrb[0].mxu0
  %1507 = vmatprep.mubr.f32.mxu0 0.0
  %1508 = vmatmul.mubr.f32.gmra.mrb[0].mxu0 %v1357
  %v1509 = vpop.f32.mrb[0].mxu0
  %v1510 = vadd.f32 0.0, %v1509
  %v1511 = vpop.f32.mrb[0].mxu0
  %1512 = vdwg.mxu0
  %s1513 = smul.u32 8, 3
  %s1514 = smul.addr %s1513, 8
  %s1515 = scalar_lea.vmem [#allocation2], %s1514
  %v1516 = vld [vmem:[%s1515] sm:$0xff]
  %v1517 = vld [vmem:[%s1515 + $0x8] sm:$0xff]
  %v1518 = vld [vmem:[%s1515 + $0x10] sm:$0xff]
  %v1519 = vld [vmem:[%s1515 + $0x18] sm:$0xff]
  %v1520 = vld [vmem:[%s1515 + $0x20] sm:$0xff]
  %v1521 = vld [vmem:[%s1515 + $0x28] sm:$0xff]
  %v1522 = vadd.f32 %v1516, %v1428
  %v1523 = vadd.f32 %v1519, %v1434
  %v1524 = vsub.f32 0.0, %v1522
  %v1525 = vsub.f32 0.0, %v1523
  %v1526 = vmul.f32 %v1524, 1.442695
  %v1527 = vpow.pop %v1526
  %v1528 = vmul.f32 %v1525, 1.442695
  %v1529 = vpow.pop %v1528
  %v1530 = vadd.f32 %v1527, 1.0
  %v1531 = vadd.f32 %v1529, 1.0
  %v1532 = vrcp.pop %v1530
  %v1533 = vmul.f32 1.0, %v1532
  %v1534 = vrcp.pop %v1531
  %v1535 = vmul.f32 1.0, %v1534
  %v1536 = vadd.f32 %v1517, %v1430
  %v1537 = vadd.f32 %v1520, %v1436
  %v1538 = vsub.f32 0.0, %v1536
  %v1539 = vsub.f32 0.0, %v1537
  %v1540 = vmul.f32 %v1538, 1.442695
  %v1541 = vpow.pop %v1540
  %v1542 = vmul.f32 %v1539, 1.442695
  %v1543 = vpow.pop %v1542
  %v1544 = vadd.f32 %v1541, 1.0
  %v1545 = vadd.f32 %v1543, 1.0
  %v1546 = vrcp.pop %v1544
  %v1547 = vmul.f32 1.0, %v1546
  %v1548 = vrcp.pop %v1545
  %v1549 = vmul.f32 1.0, %v1548
  %v1550 = vadd.f32 %v1505, %v725
  %v1551 = vadd.f32 %v1510, %v725
  %v1552 = vmul.f32 %v1533, %v1550
  %v1553 = vmul.f32 %v1535, %v1551
  %v1554 = vadd.f32 %v1518, %v1552
  %v1555 = vadd.f32 %v1521, %v1553
  %v1556 = vtanh.pop %v1554
  %v1557 = vtanh.pop %v1555
  %v1558 = vsub.f32 %v1356, %v1556
  %v1559 = vsub.f32 %v1357, %v1557
  %v1560 = vmul.f32 %v1547, %v1558
  %v1561 = vmul.f32 %v1549, %v1559
  %v1562 = vadd.f32 %v1556, %v1560
  %v1563 = vadd.f32 %v1557, %v1561
  %s1564 = scalar_lea.vmem %s6, 64
  %1565 = vst [vmem:[%s1564] sm:$0xff] %v1562
  %1566 = vst [vmem:[%s1564 + $0x8] sm:$0xff] %v1563
  %1567 = vmatprep.subr.mxu0 %v482
  %1568 = vmatpush1.msra.mxu0 %v481
  %1569 = vmatprep.subr.mxu0 %v485
  %1570 = vmatpush1.msra.mxu0 %v484
  %1571 = vmatprep.subr.mxu0 %v488
  %1572 = vmatpush1.msra.mxu0 %v487
  %1573 = vmatprep.subr.mxu0 %v491
  %1574 = vmatpush1.msra.mxu0 %v490
  %1575 = vmatprep.subr.mxu0 %v494
  %1576 = vmatpush1.msra.mxu0 %v493
  %1577 = vmatprep.subr.mxu0 %v497
  %1578 = vmatpush1.msra.mxu0 %v496
  %1579 = vmatprep.subr.mxu0 %v500
  %1580 = vmatpush1.msra.mxu0 %v499
  %1581 = vmatprep.subr.mxu0 %v503
  %1582 = vmatpush1.msra.mxu0 %v502
  %1583 = vmatprep.subr.mxu0 %v506
  %1584 = vmatpush1.msra.mxu0 %v505
  %1585 = vmatprep.subr.mxu0 %v509
  %1586 = vmatpush1.msra.mxu0 %v508
  %1587 = vmatprep.subr.mxu0 %v512
  %1588 = vmatpush1.msra.mxu0 %v511
  %1589 = vmatprep.subr.mxu0 %v515
  %1590 = vmatpush1.msra.mxu0 %v514
  %1591 = vmatprep.subr.mxu0 %v518
  %1592 = vmatpush1.msra.mxu0 %v517
  %1593 = vmatprep.subr.mxu0 %v521
  %1594 = vmatpush1.msra.mxu0 %v520
  %1595 = vmatprep.subr.mxu0 %v524
  %1596 = vmatpush1.msra.mxu0 %v523
  %1597 = vmatprep.subr.mxu0 %v527
  %1598 = vmatpush1.msra.mxu0 %v526
  %1599 = vmatprep.subr.mxu0 0.0
  %1600 = vmatpush1.msra.mxu0 0.0
  %1601 = vmatprep.subr.mxu0 0.0
  %1602 = vmatpush1.msra.mxu0 0.0
  %1603 = vmatprep.subr.mxu0 0.0
  %1604 = vmatpush1.msra.mxu0 0.0
  %1605 = vmatprep.subr.mxu0 0.0
  %1606 = vmatpush1.msra.mxu0 0.0
  %1607 = vmatprep.subr.mxu0 0.0
  %1608 = vmatpush1.msra.mxu0 0.0
  %1609 = vmatprep.subr.mxu0 0.0
  %1610 = vmatpush1.msra.mxu0 0.0
  %1611 = vmatprep.subr.mxu0 0.0
  %1612 = vmatpush1.msra.mxu0 0.0
  %1613 = vmatprep.subr.mxu0 0.0
  %1614 = vmatpush1.msra.mxu0 0.0
  %1615 = vmatprep.subr.mxu0 0.0
  %1616 = vmatpush1.msra.mxu0 0.0
  %1617 = vmatprep.subr.mxu0 0.0
  %1618 = vmatpush1.msra.mxu0 0.0
  %1619 = vmatprep.subr.mxu0 0.0
  %1620 = vmatpush1.msra.mxu0 0.0
  %1621 = vmatprep.subr.mxu0 0.0
  %1622 = vmatpush1.msra.mxu0 0.0
  %1623 = vmatprep.subr.mxu0 0.0
  %1624 = vmatpush1.msra.mxu0 0.0
  %1625 = vmatprep.subr.mxu0 0.0
  %1626 = vmatpush1.msra.mxu0 0.0
  %1627 = vmatprep.subr.mxu0 0.0
  %1628 = vmatpush1.msra.mxu0 0.0
  %1629 = vmatprep.subr.mxu0 0.0
  %1630 = vmatpush1.msra.mxu0 0.0
  %1631 = vmatprep.mubr.f32.mxu0 0.0
  %1632 = vmatmul.mubr.f32.gmra.mrb[0].mxu0 %v1562
  %v1633 = vpop.f32.mrb[0].mxu0
  %v1634 = vadd.f32 0.0, %v1633
  %v1635 = vpop.f32.mrb[0].mxu0
  %v1636 = vadd.f32 0.0, %v1635
  %1637 = vmatprep.mubr.f32.mxu0 0.0
  %1638 = vmatmul.mubr.f32.gmra.mrb[0].mxu0 %v1563
  %v1639 = vpop.f32.mrb[0].mxu0
  %v1640 = vadd.f32 0.0, %v1639
  %v1641 = vpop.f32.mrb[0].mxu0
  %v1642 = vadd.f32 0.0, %v1641
  %1643 = vdwg.mxu0
  %1644 = vmatprep.subr.mxu0 0.0
  %1645 = vmatpush1.msra.mxu0 %v483
  %1646 = vmatprep.subr.mxu0 0.0
  %1647 = vmatpush1.msra.mxu0 %v486
  %1648 = vmatprep.subr.mxu0 0.0
  %1649 = vmatpush1.msra.mxu0 %v489
  %1650 = vmatprep.subr.mxu0 0.0
  %1651 = vmatpush1.msra.mxu0 %v492
  %1652 = vmatprep.subr.mxu0 0.0
  %1653 = vmatpush1.msra.mxu0 %v495
  %1654 = vmatprep.subr.mxu0 0.0
  %1655 = vmatpush1.msra.mxu0 %v498
  %1656 = vmatprep.subr.mxu0 0.0
  %1657 = vmatpush1.msra.mxu0 %v501
  %1658 = vmatprep.subr.mxu0 0.0
  %1659 = vmatpush1.msra.mxu0 %v504
  %1660 = vmatprep.subr.mxu0 0.0
  %1661 = vmatpush1.msra.mxu0 %v507
  %1662 = vmatprep.subr.mxu0 0.0
  %1663 = vmatpush1.msra.mxu0 %v510
  %1664 = vmatprep.subr.mxu0 0.0
  %1665 = vmatpush1.msra.mxu0 %v513
  %1666 = vmatprep.subr.mxu0 0.0
  %1667 = vmatpush1.msra.mxu0 %v516
  %1668 = vmatprep.subr.mxu0 0.0
  %1669 = vmatpush1.msra.mxu0 %v519
  %1670 = vmatprep.subr.mxu0 0.0
  %1671 = vmatpush1.msra.mxu0 %v522
  %1672 = vmatprep.subr.mxu0 0.0
  %1673 = vmatpush1.msra.mxu0 %v525
  %1674 = vmatprep.subr.mxu0 0.0
  %1675 = vmatpush1.msra.mxu0 %v528
  %1676 = vmatprep.subr.mxu0 0.0
  %1677 = vmatpush1.msra.mxu0 0.0
  %1678 = vmatprep.subr.mxu0 0.0
  %1679 = vmatpush1.msra.mxu0 0.0
  %1680 = vmatprep.subr.mxu0 0.0
  %1681 = vmatpush1.msra.mxu0 0.0
  %1682 = vmatprep.subr.mxu0 0.0
  %1683 = vmatpush1.msra.mxu0 0.0
  %1684 = vmatprep.subr.mxu0 0.0
  %1685 = vmatpush1.msra.mxu0 0.0
  %1686 = vmatprep.subr.mxu0 0.0
  %1687 = vmatpush1.msra.mxu0 0.0
  %1688 = vmatprep.subr.mxu0 0.0
  %1689 = vmatpush1.msra.mxu0 0.0
  %1690 = vmatprep.subr.mxu0 0.0
  %1691 = vmatpush1.msra.mxu0 0.0
  %1692 = vmatprep.subr.mxu0 0.0
  %1693 = vmatpush1.msra.mxu0 0.0
  %1694 = vmatprep.subr.mxu0 0.0
  %1695 = vmatpush1.msra.mxu0 0.0
  %1696 = vmatprep.subr.mxu0 0.0
  %1697 = vmatpush1.msra.mxu0 0.0
  %1698 = vmatprep.subr.mxu0 0.0
  %1699 = vmatpush1.msra.mxu0 0.0
  %1700 = vmatprep.subr.mxu0 0.0
  %1701 = vmatpush1.msra.mxu0 0.0
  %1702 = vmatprep.subr.mxu0 0.0
  %1703 = vmatpush1.msra.mxu0 0.0
  %1704 = vmatprep.subr.mxu0 0.0
  %1705 = vmatpush1.msra.mxu0 0.0
  %1706 = vmatprep.subr.mxu0 0.0
  %1707 = vmatpush1.msra.mxu0 0.0
  %1708 = vmatprep.mubr.f32.mxu0 0.0
  %1709 = vmatmul.mubr.f32.gmra.mrb[0].mxu0 %v1562
  %v1710 = vpop.f32.mrb[0].mxu0
  %v1711 = vadd.f32 0.0, %v1710
  %v1712 = vpop.f32.mrb[0].mxu0
  %1713 = vmatprep.mubr.f32.mxu0 0.0
  %1714 = vmatmul.mubr.f32.gmra.mrb[0].mxu0 %v1563
  %v1715 = vpop.f32.mrb[0].mxu0
  %v1716 = vadd.f32 0.0, %v1715
  %v1717 = vpop.f32.mrb[0].mxu0
  %1718 = vdwg.mxu0
  %s1719 = smul.u32 10, 3
  %s1720 = smul.addr %s1719, 8
  %s1721 = scalar_lea.vmem [#allocation2], %s1720
  %v1722 = vld [vmem:[%s1721] sm:$0xff]
  %v1723 = vld [vmem:[%s1721 + $0x8] sm:$0xff]
  %v1724 = vld [vmem:[%s1721 + $0x10] sm:$0xff]
  %v1725 = vld [vmem:[%s1721 + $0x18] sm:$0xff]
  %v1726 = vld [vmem:[%s1721 + $0x20] sm:$0xff]
  %v1727 = vld [vmem:[%s1721 + $0x28] sm:$0xff]
  %v1728 = vadd.f32 %v1722, %v1634
  %v1729 = vadd.f32 %v1725, %v1640
  %v1730 = vsub.f32 0.0, %v1728
  %v1731 = vsub.f32 0.0, %v1729
  %v1732 = vmul.f32 %v1730, 1.442695
  %v1733 = vpow.pop %v1732
  %v1734 = vmul.f32 %v1731, 1.442695
  %v1735 = vpow.pop %v1734
  %v1736 = vadd.f32 %v1733, 1.0
  %v1737 = vadd.f32 %v1735, 1.0
  %v1738 = vrcp.pop %v1736
  %v1739 = vmul.f32 1.0, %v1738
  %v1740 = vrcp.pop %v1737
  %v1741 = vmul.f32 1.0, %v1740
  %v1742 = vadd.f32 %v1723, %v1636
  %v1743 = vadd.f32 %v1726, %v1642
  %v1744 = vsub.f32 0.0, %v1742
  %v1745 = vsub.f32 0.0, %v1743
  %v1746 = vmul.f32 %v1744, 1.442695
  %v1747 = vpow.pop %v1746
  %v1748 = vmul.f32 %v1745, 1.442695
  %v1749 = vpow.pop %v1748
  %v1750 = vadd.f32 %v1747, 1.0
  %v1751 = vadd.f32 %v1749, 1.0
  %v1752 = vrcp.pop %v1750
  %v1753 = vmul.f32 1.0, %v1752
  %v1754 = vrcp.pop %v1751
  %v1755 = vmul.f32 1.0, %v1754
  %v1756 = vadd.f32 %v1711, %v725
  %v1757 = vadd.f32 %v1716, %v725
  %v1758 = vmul.f32 %v1739, %v1756
  %v1759 = vmul.f32 %v1741, %v1757
  %v1760 = vadd.f32 %v1724, %v1758
  %v1761 = vadd.f32 %v1727, %v1759
  %v1762 = vtanh.pop %v1760
  %v1763 = vtanh.pop %v1761
  %v1764 = vsub.f32 %v1562, %v1762
  %v1765 = vsub.f32 %v1563, %v1763
  %v1766 = vmul.f32 %v1753, %v1764
  %v1767 = vmul.f32 %v1755, %v1765
  %v1768 = vadd.f32 %v1762, %v1766
  %v1769 = vadd.f32 %v1763, %v1767
  %s1770 = scalar_lea.vmem %s6, 80
  %1771 = vst [vmem:[%s1770] sm:$0xff] %v1768
  %1772 = vst [vmem:[%s1770 + $0x8] sm:$0xff] %v1769
  %1773 = vmatprep.subr.mxu0 %v482
  %1774 = vmatpush1.msra.mxu0 %v481
  %1775 = vmatprep.subr.mxu0 %v485
  %1776 = vmatpush1.msra.mxu0 %v484
  %1777 = vmatprep.subr.mxu0 %v488
  %1778 = vmatpush1.msra.mxu0 %v487
  %1779 = vmatprep.subr.mxu0 %v491
  %1780 = vmatpush1.msra.mxu0 %v490
  %1781 = vmatprep.subr.mxu0 %v494
  %1782 = vmatpush1.msra.mxu0 %v493
  %1783 = vmatprep.subr.mxu0 %v497
  %1784 = vmatpush1.msra.mxu0 %v496
  %1785 = vmatprep.subr.mxu0 %v500
  %1786 = vmatpush1.msra.mxu0 %v499
  %1787 = vmatprep.subr.mxu0 %v503
  %1788 = vmatpush1.msra.mxu0 %v502
  %1789 = vmatprep.subr.mxu0 %v506
  %1790 = vmatpush1.msra.mxu0 %v505
  %1791 = vmatprep.subr.mxu0 %v509
  %1792 = vmatpush1.msra.mxu0 %v508
  %1793 = vmatprep.subr.mxu0 %v512
  %1794 = vmatpush1.msra.mxu0 %v511
  %1795 = vmatprep.subr.mxu0 %v515
  %1796 = vmatpush1.msra.mxu0 %v514
  %1797 = vmatprep.subr.mxu0 %v518
  %1798 = vmatpush1.msra.mxu0 %v517
  %1799 = vmatprep.subr.mxu0 %v521
  %1800 = vmatpush1.msra.mxu0 %v520
  %1801 = vmatprep.subr.mxu0 %v524
  %1802 = vmatpush1.msra.mxu0 %v523
  %1803 = vmatprep.subr.mxu0 %v527
  %1804 = vmatpush1.msra.mxu0 %v526
  %1805 = vmatprep.subr.mxu0 0.0
  %1806 = vmatpush1.msra.mxu0 0.0
  %1807 = vmatprep.subr.mxu0 0.0
  %1808 = vmatpush1.msra.mxu0 0.0
  %1809 = vmatprep.subr.mxu0 0.0
  %1810 = vmatpush1.msra.mxu0 0.0
  %1811 = vmatprep.subr.mxu0 0.0
  %1812 = vmatpush1.msra.mxu0 0.0
  %1813 = vmatprep.subr.mxu0 0.0
  %1814 = vmatpush1.msra.mxu0 0.0
  %1815 = vmatprep.subr.mxu0 0.0
  %1816 = vmatpush1.msra.mxu0 0.0
  %1817 = vmatprep.subr.mxu0 0.0
  %1818 = vmatpush1.msra.mxu0 0.0
  %1819 = vmatprep.subr.mxu0 0.0
  %1820 = vmatpush1.msra.mxu0 0.0
  %1821 = vmatprep.subr.mxu0 0.0
  %1822 = vmatpush1.msra.mxu0 0.0
  %1823 = vmatprep.subr.mxu0 0.0
  %1824 = vmatpush1.msra.mxu0 0.0
  %1825 = vmatprep.subr.mxu0 0.0
  %1826 = vmatpush1.msra.mxu0 0.0
  %1827 = vmatprep.subr.mxu0 0.0
  %1828 = vmatpush1.msra.mxu0 0.0
  %1829 = vmatprep.subr.mxu0 0.0
  %1830 = vmatpush1.msra.mxu0 0.0
  %1831 = vmatprep.subr.mxu0 0.0
  %1832 = vmatpush1.msra.mxu0 0.0
  %1833 = vmatprep.subr.mxu0 0.0
  %1834 = vmatpush1.msra.mxu0 0.0
  %1835 = vmatprep.subr.mxu0 0.0
  %1836 = vmatpush1.msra.mxu0 0.0
  %1837 = vmatprep.mubr.f32.mxu0 0.0
  %1838 = vmatmul.mubr.f32.gmra.mrb[0].mxu0 %v1768
  %v1839 = vpop.f32.mrb[0].mxu0
  %v1840 = vadd.f32 0.0, %v1839
  %v1841 = vpop.f32.mrb[0].mxu0
  %v1842 = vadd.f32 0.0, %v1841
  %1843 = vmatprep.mubr.f32.mxu0 0.0
  %1844 = vmatmul.mubr.f32.gmra.mrb[0].mxu0 %v1769
  %v1845 = vpop.f32.mrb[0].mxu0
  %v1846 = vadd.f32 0.0, %v1845
  %v1847 = vpop.f32.mrb[0].mxu0
  %v1848 = vadd.f32 0.0, %v1847
  %1849 = vdwg.mxu0
  %1850 = vmatprep.subr.mxu0 0.0
  %1851 = vmatpush1.msra.mxu0 %v483
  %1852 = vmatprep.subr.mxu0 0.0
  %1853 = vmatpush1.msra.mxu0 %v486
  %1854 = vmatprep.subr.mxu0 0.0
  %1855 = vmatpush1.msra.mxu0 %v489
  %1856 = vmatprep.subr.mxu0 0.0
  %1857 = vmatpush1.msra.mxu0 %v492
  %1858 = vmatprep.subr.mxu0 0.0
  %1859 = vmatpush1.msra.mxu0 %v495
  %1860 = vmatprep.subr.mxu0 0.0
  %1861 = vmatpush1.msra.mxu0 %v498
  %1862 = vmatprep.subr.mxu0 0.0
  %1863 = vmatpush1.msra.mxu0 %v501
  %1864 = vmatprep.subr.mxu0 0.0
  %1865 = vmatpush1.msra.mxu0 %v504
  %1866 = vmatprep.subr.mxu0 0.0
  %1867 = vmatpush1.msra.mxu0 %v507
  %1868 = vmatprep.subr.mxu0 0.0
  %1869 = vmatpush1.msra.mxu0 %v510
  %1870 = vmatprep.subr.mxu0 0.0
  %1871 = vmatpush1.msra.mxu0 %v513
  %1872 = vmatprep.subr.mxu0 0.0
  %1873 = vmatpush1.msra.mxu0 %v516
  %1874 = vmatprep.subr.mxu0 0.0
  %1875 = vmatpush1.msra.mxu0 %v519
  %1876 = vmatprep.subr.mxu0 0.0
  %1877 = vmatpush1.msra.mxu0 %v522
  %1878 = vmatprep.subr.mxu0 0.0
  %1879 = vmatpush1.msra.mxu0 %v525
  %1880 = vmatprep.subr.mxu0 0.0
  %1881 = vmatpush1.msra.mxu0 %v528
  %1882 = vmatprep.subr.mxu0 0.0
  %1883 = vmatpush1.msra.mxu0 0.0
  %1884 = vmatprep.subr.mxu0 0.0
  %1885 = vmatpush1.msra.mxu0 0.0
  %1886 = vmatprep.subr.mxu0 0.0
  %1887 = vmatpush1.msra.mxu0 0.0
  %1888 = vmatprep.subr.mxu0 0.0
  %1889 = vmatpush1.msra.mxu0 0.0
  %1890 = vmatprep.subr.mxu0 0.0
  %1891 = vmatpush1.msra.mxu0 0.0
  %1892 = vmatprep.subr.mxu0 0.0
  %1893 = vmatpush1.msra.mxu0 0.0
  %1894 = vmatprep.subr.mxu0 0.0
  %1895 = vmatpush1.msra.mxu0 0.0
  %1896 = vmatprep.subr.mxu0 0.0
  %1897 = vmatpush1.msra.mxu0 0.0
  %1898 = vmatprep.subr.mxu0 0.0
  %1899 = vmatpush1.msra.mxu0 0.0
  %1900 = vmatprep.subr.mxu0 0.0
  %1901 = vmatpush1.msra.mxu0 0.0
  %1902 = vmatprep.subr.mxu0 0.0
  %1903 = vmatpush1.msra.mxu0 0.0
  %1904 = vmatprep.subr.mxu0 0.0
  %1905 = vmatpush1.msra.mxu0 0.0
  %1906 = vmatprep.subr.mxu0 0.0
  %1907 = vmatpush1.msra.mxu0 0.0
  %1908 = vmatprep.subr.mxu0 0.0
  %1909 = vmatpush1.msra.mxu0 0.0
  %1910 = vmatprep.subr.mxu0 0.0
  %1911 = vmatpush1.msra.mxu0 0.0
  %1912 = vmatprep.subr.mxu0 0.0
  %1913 = vmatpush1.msra.mxu0 0.0
  %1914 = vmatprep.mubr.f32.mxu0 0.0
  %1915 = vmatmul.mubr.f32.gmra.mrb[0].mxu0 %v1768
  %v1916 = vpop.f32.mrb[0].mxu0
  %v1917 = vadd.f32 0.0, %v1916
  %v1918 = vpop.f32.mrb[0].mxu0
  %1919 = vmatprep.mubr.f32.mxu0 0.0
  %1920 = vmatmul.mubr.f32.gmra.mrb[0].mxu0 %v1769
  %v1921 = vpop.f32.mrb[0].mxu0
  %v1922 = vadd.f32 0.0, %v1921
  %v1923 = vpop.f32.mrb[0].mxu0
  %1924 = vdwg.mxu0
  %s1925 = smul.u32 12, 3
  %s1926 = smul.addr %s1925, 8
  %s1927 = scalar_lea.vmem [#allocation2], %s1926
  %v1928 = vld [vmem:[%s1927] sm:$0xff]
  %v1929 = vld [vmem:[%s1927 + $0x8] sm:$0xff]
  %v1930 = vld [vmem:[%s1927 + $0x10] sm:$0xff]
  %v1931 = vld [vmem:[%s1927 + $0x18] sm:$0xff]
  %v1932 = vld [vmem:[%s1927 + $0x20] sm:$0xff]
  %v1933 = vld [vmem:[%s1927 + $0x28] sm:$0xff]
  %v1934 = vadd.f32 %v1928, %v1840
  %v1935 = vadd.f32 %v1931, %v1846
  %v1936 = vsub.f32 0.0, %v1934
  %v1937 = vsub.f32 0.0, %v1935
  %v1938 = vmul.f32 %v1936, 1.442695
  %v1939 = vpow.pop %v1938
  %v1940 = vmul.f32 %v1937, 1.442695
  %v1941 = vpow.pop %v1940
  %v1942 = vadd.f32 %v1939, 1.0
  %v1943 = vadd.f32 %v1941, 1.0
  %v1944 = vrcp.pop %v1942
  %v1945 = vmul.f32 1.0, %v1944
  %v1946 = vrcp.pop %v1943
  %v1947 = vmul.f32 1.0, %v1946
  %v1948 = vadd.f32 %v1929, %v1842
  %v1949 = vadd.f32 %v1932, %v1848
  %v1950 = vsub.f32 0.0, %v1948
  %v1951 = vsub.f32 0.0, %v1949
  %v1952 = vmul.f32 %v1950, 1.442695
  %v1953 = vpow.pop %v1952
  %v1954 = vmul.f32 %v1951, 1.442695
  %v1955 = vpow.pop %v1954
  %v1956 = vadd.f32 %v1953, 1.0
  %v1957 = vadd.f32 %v1955, 1.0
  %v1958 = vrcp.pop %v1956
  %v1959 = vmul.f32 1.0, %v1958
  %v1960 = vrcp.pop %v1957
  %v1961 = vmul.f32 1.0, %v1960
  %v1962 = vadd.f32 %v1917, %v725
  %v1963 = vadd.f32 %v1922, %v725
  %v1964 = vmul.f32 %v1945, %v1962
  %v1965 = vmul.f32 %v1947, %v1963
  %v1966 = vadd.f32 %v1930, %v1964
  %v1967 = vadd.f32 %v1933, %v1965
  %v1968 = vtanh.pop %v1966
  %v1969 = vtanh.pop %v1967
  %v1970 = vsub.f32 %v1768, %v1968
  %v1971 = vsub.f32 %v1769, %v1969
  %v1972 = vmul.f32 %v1959, %v1970
  %v1973 = vmul.f32 %v1961, %v1971
  %v1974 = vadd.f32 %v1968, %v1972
  %v1975 = vadd.f32 %v1969, %v1973
  %s1976 = scalar_lea.vmem %s6, 96
  %1977 = vst [vmem:[%s1976] sm:$0xff] %v1974
  %1978 = vst [vmem:[%s1976 + $0x8] sm:$0xff] %v1975
  %1979 = vmatprep.subr.mxu0 %v482
  %1980 = vmatpush1.msra.mxu0 %v481
  %1981 = vmatprep.subr.mxu0 %v485
  %1982 = vmatpush1.msra.mxu0 %v484
  %1983 = vmatprep.subr.mxu0 %v488
  %1984 = vmatpush1.msra.mxu0 %v487
  %1985 = vmatprep.subr.mxu0 %v491
  %1986 = vmatpush1.msra.mxu0 %v490
  %1987 = vmatprep.subr.mxu0 %v494
  %1988 = vmatpush1.msra.mxu0 %v493
  %1989 = vmatprep.subr.mxu0 %v497
  %1990 = vmatpush1.msra.mxu0 %v496
  %1991 = vmatprep.subr.mxu0 %v500
  %1992 = vmatpush1.msra.mxu0 %v499
  %1993 = vmatprep.subr.mxu0 %v503
  %1994 = vmatpush1.msra.mxu0 %v502
  %1995 = vmatprep.subr.mxu0 %v506
  %1996 = vmatpush1.msra.mxu0 %v505
  %1997 = vmatprep.subr.mxu0 %v509
  %1998 = vmatpush1.msra.mxu0 %v508
  %1999 = vmatprep.subr.mxu0 %v512
  %2000 = vmatpush1.msra.mxu0 %v511
  %2001 = vmatprep.subr.mxu0 %v515
  %2002 = vmatpush1.msra.mxu0 %v514
  %2003 = vmatprep.subr.mxu0 %v518
  %2004 = vmatpush1.msra.mxu0 %v517
  %2005 = vmatprep.subr.mxu0 %v521
  %2006 = vmatpush1.msra.mxu0 %v520
  %2007 = vmatprep.subr.mxu0 %v524
  %2008 = vmatpush1.msra.mxu0 %v523
  %2009 = vmatprep.subr.mxu0 %v527
  %2010 = vmatpush1.msra.mxu0 %v526
  %2011 = vmatprep.subr.mxu0 0.0
  %2012 = vmatpush1.msra.mxu0 0.0
  %2013 = vmatprep.subr.mxu0 0.0
  %2014 = vmatpush1.msra.mxu0 0.0
  %2015 = vmatprep.subr.mxu0 0.0
  %2016 = vmatpush1.msra.mxu0 0.0
  %2017 = vmatprep.subr.mxu0 0.0
  %2018 = vmatpush1.msra.mxu0 0.0
  %2019 = vmatprep.subr.mxu0 0.0
  %2020 = vmatpush1.msra.mxu0 0.0
  %2021 = vmatprep.subr.mxu0 0.0
  %2022 = vmatpush1.msra.mxu0 0.0
  %2023 = vmatprep.subr.mxu0 0.0
  %2024 = vmatpush1.msra.mxu0 0.0
  %2025 = vmatprep.subr.mxu0 0.0
  %2026 = vmatpush1.msra.mxu0 0.0
  %2027 = vmatprep.subr.mxu0 0.0
  %2028 = vmatpush1.msra.mxu0 0.0
  %2029 = vmatprep.subr.mxu0 0.0
  %2030 = vmatpush1.msra.mxu0 0.0
  %2031 = vmatprep.subr.mxu0 0.0
  %2032 = vmatpush1.msra.mxu0 0.0
  %2033 = vmatprep.subr.mxu0 0.0
  %2034 = vmatpush1.msra.mxu0 0.0
  %2035 = vmatprep.subr.mxu0 0.0
  %2036 = vmatpush1.msra.mxu0 0.0
  %2037 = vmatprep.subr.mxu0 0.0
  %2038 = vmatpush1.msra.mxu0 0.0
  %2039 = vmatprep.subr.mxu0 0.0
  %2040 = vmatpush1.msra.mxu0 0.0
  %2041 = vmatprep.subr.mxu0 0.0
  %2042 = vmatpush1.msra.mxu0 0.0
  %2043 = vmatprep.mubr.f32.mxu0 0.0
  %2044 = vmatmul.mubr.f32.gmra.mrb[0].mxu0 %v1974
  %v2045 = vpop.f32.mrb[0].mxu0
  %v2046 = vadd.f32 0.0, %v2045
  %v2047 = vpop.f32.mrb[0].mxu0
  %v2048 = vadd.f32 0.0, %v2047
  %2049 = vmatprep.mubr.f32.mxu0 0.0
  %2050 = vmatmul.mubr.f32.gmra.mrb[0].mxu0 %v1975
  %v2051 = vpop.f32.mrb[0].mxu0
  %v2052 = vadd.f32 0.0, %v2051
  %v2053 = vpop.f32.mrb[0].mxu0
  %v2054 = vadd.f32 0.0, %v2053
  %2055 = vdwg.mxu0
  %2056 = vmatprep.subr.mxu0 0.0
  %2057 = vmatpush1.msra.mxu0 %v483
  %2058 = vmatprep.subr.mxu0 0.0
  %2059 = vmatpush1.msra.mxu0 %v486
  %2060 = vmatprep.subr.mxu0 0.0
  %2061 = vmatpush1.msra.mxu0 %v489
  %2062 = vmatprep.subr.mxu0 0.0
  %2063 = vmatpush1.msra.mxu0 %v492
  %2064 = vmatprep.subr.mxu0 0.0
  %2065 = vmatpush1.msra.mxu0 %v495
  %2066 = vmatprep.subr.mxu0 0.0
  %2067 = vmatpush1.msra.mxu0 %v498
  %2068 = vmatprep.subr.mxu0 0.0
  %2069 = vmatpush1.msra.mxu0 %v501
  %2070 = vmatprep.subr.mxu0 0.0
  %2071 = vmatpush1.msra.mxu0 %v504
  %2072 = vmatprep.subr.mxu0 0.0
  %2073 = vmatpush1.msra.mxu0 %v507
  %2074 = vmatprep.subr.mxu0 0.0
  %2075 = vmatpush1.msra.mxu0 %v510
  %2076 = vmatprep.subr.mxu0 0.0
  %2077 = vmatpush1.msra.mxu0 %v513
  %2078 = vmatprep.subr.mxu0 0.0
  %2079 = vmatpush1.msra.mxu0 %v516
  %2080 = vmatprep.subr.mxu0 0.0
  %2081 = vmatpush1.msra.mxu0 %v519
  %2082 = vmatprep.subr.mxu0 0.0
  %2083 = vmatpush1.msra.mxu0 %v522
  %2084 = vmatprep.subr.mxu0 0.0
  %2085 = vmatpush1.msra.mxu0 %v525
  %2086 = vmatprep.subr.mxu0 0.0
  %2087 = vmatpush1.msra.mxu0 %v528
  %2088 = vmatprep.subr.mxu0 0.0
  %2089 = vmatpush1.msra.mxu0 0.0
  %2090 = vmatprep.subr.mxu0 0.0
  %2091 = vmatpush1.msra.mxu0 0.0
  %2092 = vmatprep.subr.mxu0 0.0
  %2093 = vmatpush1.msra.mxu0 0.0
  %2094 = vmatprep.subr.mxu0 0.0
  %2095 = vmatpush1.msra.mxu0 0.0
  %2096 = vmatprep.subr.mxu0 0.0
  %2097 = vmatpush1.msra.mxu0 0.0
  %2098 = vmatprep.subr.mxu0 0.0
  %2099 = vmatpush1.msra.mxu0 0.0
  %2100 = vmatprep.subr.mxu0 0.0
  %2101 = vmatpush1.msra.mxu0 0.0
  %2102 = vmatprep.subr.mxu0 0.0
  %2103 = vmatpush1.msra.mxu0 0.0
  %2104 = vmatprep.subr.mxu0 0.0
  %2105 = vmatpush1.msra.mxu0 0.0
  %2106 = vmatprep.subr.mxu0 0.0
  %2107 = vmatpush1.msra.mxu0 0.0
  %2108 = vmatprep.subr.mxu0 0.0
  %2109 = vmatpush1.msra.mxu0 0.0
  %2110 = vmatprep.subr.mxu0 0.0
  %2111 = vmatpush1.msra.mxu0 0.0
  %2112 = vmatprep.subr.mxu0 0.0
  %2113 = vmatpush1.msra.mxu0 0.0
  %2114 = vmatprep.subr.mxu0 0.0
  %2115 = vmatpush1.msra.mxu0 0.0
  %2116 = vmatprep.subr.mxu0 0.0
  %2117 = vmatpush1.msra.mxu0 0.0
  %2118 = vmatprep.subr.mxu0 0.0
  %2119 = vmatpush1.msra.mxu0 0.0
  %2120 = vmatprep.mubr.f32.mxu0 0.0
  %2121 = vmatmul.mubr.f32.gmra.mrb[0].mxu0 %v1974
  %v2122 = vpop.f32.mrb[0].mxu0
  %v2123 = vadd.f32 0.0, %v2122
  %v2124 = vpop.f32.mrb[0].mxu0
  %2125 = vmatprep.mubr.f32.mxu0 0.0
  %2126 = vmatmul.mubr.f32.gmra.mrb[0].mxu0 %v1975
  %v2127 = vpop.f32.mrb[0].mxu0
  %v2128 = vadd.f32 0.0, %v2127
  %v2129 = vpop.f32.mrb[0].mxu0
  %2130 = vdwg.mxu0
  %s2131 = smul.u32 14, 3
  %s2132 = smul.addr %s2131, 8
  %s2133 = scalar_lea.vmem [#allocation2], %s2132
  %v2134 = vld [vmem:[%s2133] sm:$0xff]
  %v2135 = vld [vmem:[%s2133 + $0x8] sm:$0xff]
  %v2136 = vld [vmem:[%s2133 + $0x10] sm:$0xff]
  %v2137 = vld [vmem:[%s2133 + $0x18] sm:$0xff]
  %v2138 = vld [vmem:[%s2133 + $0x20] sm:$0xff]
  %v2139 = vld [vmem:[%s2133 + $0x28] sm:$0xff]
  %v2140 = vadd.f32 %v2134, %v2046
  %v2141 = vadd.f32 %v2137, %v2052
  %v2142 = vsub.f32 0.0, %v2140
  %v2143 = vsub.f32 0.0, %v2141
  %v2144 = vmul.f32 %v2142, 1.442695
  %v2145 = vpow.pop %v2144
  %v2146 = vmul.f32 %v2143, 1.442695
  %v2147 = vpow.pop %v2146
  %v2148 = vadd.f32 %v2145, 1.0
  %v2149 = vadd.f32 %v2147, 1.0
  %v2150 = vrcp.pop %v2148
  %v2151 = vmul.f32 1.0, %v2150
  %v2152 = vrcp.pop %v2149
  %v2153 = vmul.f32 1.0, %v2152
  %v2154 = vadd.f32 %v2135, %v2048
  %v2155 = vadd.f32 %v2138, %v2054
  %v2156 = vsub.f32 0.0, %v2154
  %v2157 = vsub.f32 0.0, %v2155
  %v2158 = vmul.f32 %v2156, 1.442695
  %v2159 = vpow.pop %v2158
  %v2160 = vmul.f32 %v2157, 1.442695
  %v2161 = vpow.pop %v2160
  %v2162 = vadd.f32 %v2159, 1.0
  %v2163 = vadd.f32 %v2161, 1.0
  %v2164 = vrcp.pop %v2162
  %v2165 = vmul.f32 1.0, %v2164
  %v2166 = vrcp.pop %v2163
  %v2167 = vmul.f32 1.0, %v2166
  %v2168 = vadd.f32 %v2123, %v725
  %v2169 = vadd.f32 %v2128, %v725
  %v2170 = vmul.f32 %v2151, %v2168
  %v2171 = vmul.f32 %v2153, %v2169
  %v2172 = vadd.f32 %v2136, %v2170
  %v2173 = vadd.f32 %v2139, %v2171
  %v2174 = vtanh.pop %v2172
  %v2175 = vtanh.pop %v2173
  %v2176 = vsub.f32 %v1974, %v2174
  %v2177 = vsub.f32 %v1975, %v2175
  %v2178 = vmul.f32 %v2165, %v2176
  %v2179 = vmul.f32 %v2167, %v2177
  %v2180 = vadd.f32 %v2174, %v2178
  %v2181 = vadd.f32 %v2175, %v2179
  %s2182 = scalar_lea.vmem %s6, 112
  %2183 = vst [vmem:[%s2182] sm:$0xff] %v2180
  %2184 = vst [vmem:[%s2182 + $0x8] sm:$0xff] %v2181
  %2185 = vst [vmem:[%s7] sm:$0xff] %v2180
  %2186 = vst [vmem:[%s7 + $0x8] sm:$0xff] %v2181
  // Predicated region
  $region30: #{new_rnn_cell_forward.2} parent=0 // pred_check
    _
  $region31: #{new_rnn_cell_forward.2} parent=0 // pred_check_branch
    %2188 = sbr.rel (0) target = $region33
  $region32: #{new_rnn_cell_forward.2} parent=0 // pred_region
    _
  $region33: #{new_rnn_cell_forward.2} parent=0 // pred_fallthru
    _
  // Predicated region
  $region34: #{new_rnn_cell_forward.2} parent=0 // pred_check
    _
  $region35: #{new_rnn_cell_forward.2} parent=0 // pred_check_branch
    %2190 = sbr.rel (0) target = $region37
  $region36: #{new_rnn_cell_forward.2} parent=0 // pred_region
    _
  $region37: #{new_rnn_cell_forward.2} parent=0 // pred_fallthru
    _
  // Predicated region
  $region38: #{new_rnn_cell_forward.2} parent=0 // pred_check
    _
  $region39: #{new_rnn_cell_forward.2} parent=0 // pred_check_branch
    %2192 = sbr.rel (0) target = $region41
  $region40: #{new_rnn_cell_forward.2} parent=0 // pred_region
    _
  $region41: #{new_rnn_cell_forward.2} parent=0 // pred_fallthru
    _
  // Predicated region
  $region42: #{new_rnn_cell_forward.2} parent=0 // pred_check
    _
  $region43: #{new_rnn_cell_forward.2} parent=0 // pred_check_branch
    %2194 = sbr.rel (0) target = $region45
  $region44: #{new_rnn_cell_forward.2} parent=0 // pred_region
    _
  $region45: #{new_rnn_cell_forward.2} parent=0 // pred_fallthru
    _

</llo_original>
